<compile_context>
chip_gen: v5e
topology: v5e:2x2
jax: 0.10.0
libtpu: 0.0.40
codegen_flags: <defaults>
</compile_context>

<pallas_src>
import functools

import jax
import jax.numpy as jnp
from jax import lax
from jax.experimental import pallas as pl
from jax.experimental.pallas import tpu as pltpu


_VMEM = pl.BlockSpec(memory_space=pltpu.MemorySpace.VMEM)


# ----------------------------------------------------------------------------
# Pallas kernel
# ----------------------------------------------------------------------------
def _lstm_cell(gates, c_prev, hidden):
    """LSTM cell from pre-activation gates (Bp, 4H), PyTorch order [i f g o].

    EUP-friendly: sigmoid is computed as 0.5*(1 + tanh(0.5*x)) (one EUP issue
    instead of exp + reciprocal) and both transcendentals are applied to the
    whole (Bp, 4H) = 8x128 gate vreg once, then blended with a lane-iota mask
    (tanh for the g band, sigmoid for i/f/o), instead of four 32-lane slices.
    """
    H = hidden
    lanes = lax.broadcasted_iota(jnp.int32, gates.shape, 1)
    is_g = jnp.logical_and(lanes >= 2 * H, lanes < 3 * H)
    sig = 0.5 * (jnp.tanh(0.5 * gates) + 1.0)       # sigmoid via tanh identity
    act = jnp.where(is_g, jnp.tanh(gates), sig)
    i = act[:, 0 * H:1 * H]
    f = act[:, 1 * H:2 * H]
    g = act[:, 2 * H:3 * H]
    o = act[:, 3 * H:4 * H]
    c_new = f * c_prev + i * g
    h_new = o * jnp.tanh(c_new)
    return h_new, c_new


def _ner_lstm_fused_kernel(*refs, num_layers, hidden, seq_len, batch_pad):
    """Fused bidirectional multi-layer LSTM + MLP head (all VMEM resident).

    Ref layout (rows flattened as t * Bp + b, forward time order):
      refs[0]                      x         (T*Bp, vec_dim)
      refs[1 : 1+3L]  per layer:   wih_both  (D_in, 8H)   [i f g o]_fwd|[i f g o]_bwd
                                   whh_pack  (2H, 8H)     block-diag [[Wf,0],[0,Wb]]
                                   bias_both (1, 8H)
      refs[1+3L : 7+3L]            w1,b1,w2,b2,w3_pad,b3_pad   (MLP head)
      refs[7+3L]                   out       (T*Bp, 128)  lane-dense logits
      refs[8+3L : 11+3L] scratch:  actf (T*Bp, H), actb (T*Bp, H), gx (T*Bp, 8H)
    """
    H, T, Bp = hidden, seq_len, batch_pad
    n_lw = 3 * num_layers

    x_ref = refs[0]
    layer_refs = refs[1:1 + n_lw]
    w1_ref, b1_ref, w2_ref, b2_ref, w3_ref, b3_ref = refs[1 + n_lw:7 + n_lw]
    out_ref = refs[7 + n_lw]
    actf_ref, actb_ref, gx_ref = refs[8 + n_lw:11 + n_lw]

    for layer in range(num_layers):
        wih_ref, whh_ref, bias_ref = layer_refs[3 * layer:3 * layer + 3]

        # ---- hoisted input projection (both directions, all time steps) -----
        if layer == 0:
            gx_ref[...] = (
                jnp.dot(x_ref[...], wih_ref[...],
                        preferred_element_type=jnp.float32)
                + bias_ref[...])
        else:
            # Read fwd/bwd activations straight from their buffers; split the
            # K dimension of the dot instead of concatenating along lanes.
            gx_ref[...] = (
                jnp.dot(actf_ref[...], wih_ref[0:H, :],
                        preferred_element_type=jnp.float32)
                + jnp.dot(actb_ref[...], wih_ref[H:2 * H, :],
                          preferred_element_type=jnp.float32)
                + bias_ref[...])

        whh = whh_ref[...]          # (2H, 8H) block-diagonal, loaded once/layer

        # ---- recurrence: step s handles t = s (fwd) and t = T-1-s (bwd) -----
        def step(s, carry):
            h_pack, cf, cb = carry                       # h_pack = [hf | hb]
            rf = pl.multiple_of(s * Bp, Bp)              # fwd row block
            rb = pl.multiple_of((T - 1 - s) * Bp, Bp)    # bwd row block
            # ONE fused recurrent dot for both directions.
            rec = jnp.dot(h_pack, whh, preferred_element_type=jnp.float32)
            g_f = rec[:, 0:4 * H] + gx_ref[pl.ds(rf, Bp), pl.ds(0, 4 * H)]
            g_b = rec[:, 4 * H:8 * H] + gx_ref[pl.ds(rb, Bp), pl.ds(4 * H, 4 * H)]
            hf_n, cf_n = _lstm_cell(g_f, cf, H)
            hb_n, cb_n = _lstm_cell(g_b, cb, H)
            actf_ref[pl.ds(rf, Bp), :] = hf_n
            actb_ref[pl.ds(rb, Bp), :] = hb_n
            h_n = jnp.concatenate([hf_n, hb_n], axis=-1)
            return h_n, cf_n, cb_n

        zero_h = jnp.zeros((Bp, 2 * H), jnp.float32)
        zero_c = jnp.zeros((Bp, H), jnp.float32)
        lax.fori_loop(0, T, step, (zero_h, zero_c, zero_c), unroll=True)

    # ---- MLP head on the flattened (T*Bp, 2H) activations (row-wise) --------
    h1 = jnp.tanh(
        jnp.dot(actf_ref[...], w1_ref[0:H, :], preferred_element_type=jnp.float32)
        + jnp.dot(actb_ref[...], w1_ref[H:2 * H, :],
                  preferred_element_type=jnp.float32)
        + b1_ref[...])
    h2 = jnp.tanh(jnp.dot(h1, w2_ref[...], preferred_element_type=jnp.float32)
                  + b2_ref[...])
    # w3/b3 are zero-padded to 128 lanes -> dense, unmasked writeback.
    out_ref[...] = (jnp.dot(h2, w3_ref[...], preferred_element_type=jnp.float32)
                    + b3_ref[...])


# ----------------------------------------------------------------------------
# Wrappers
# ----------------------------------------------------------------------------
_LOGIT_PAD = 128   # lane-dense output width


def prepare_params(params):
    """One-time (outside jit) repack of PyTorch-layout weights into kernel layout."""
    lstm_flat = []
    for layer in params["lstm"]:
        w_ih_f, w_hh_f, b_ih_f, b_hh_f = layer["fwd"]
        w_ih_b, w_hh_b, b_ih_b, b_hh_b = layer["bwd"]
        H = w_hh_f.shape[1]
        wih_both = jnp.concatenate([w_ih_f.T, w_ih_b.T], axis=1)          # (D_in, 8H)
        bias_both = jnp.concatenate(
            [b_ih_f + b_hh_f, b_ih_b + b_hh_b]).reshape(1, -1)            # (1, 8H)
        whh_pack = jnp.zeros((2 * H, 8 * H), jnp.float32)                 # block-diag
        whh_pack = whh_pack.at[:H, :4 * H].set(w_hh_f.T)
        whh_pack = whh_pack.at[H:, 4 * H:].set(w_hh_b.T)
        lstm_flat.extend([wih_both, whh_pack, bias_both])

    w3, b3 = params["w3"], params["b3"]
    C = w3.shape[1]
    w3_pad = jnp.zeros((w3.shape[0], _LOGIT_PAD), jnp.float32).at[:, :C].set(w3)
    b3_pad = jnp.zeros((1, _LOGIT_PAD), jnp.float32).at[:, :C].set(b3)
    head = (params["w1"], params["b1"].reshape(1, -1),
            params["w2"], params["b2"].reshape(1, -1),
            w3_pad, b3_pad)
    return {"lstm_flat": tuple(lstm_flat), "head": head}


def ner_lstm_forward(prepped, input_ids, num_classes):
    """input_ids: (B, T, vec_dim) float32, batch_first. Returns (outputs, None)."""
    lstm_flat = prepped["lstm_flat"]
    head = prepped["head"]
    num_layers = len(lstm_flat) // 3
    H = lstm_flat[1].shape[0] // 2              # whh_pack : (2H, 8H)

    B, T, D = input_ids.shape
    Bp = ((B + 7) // 8) * 8                     # pad batch to full sublane tiles

    x = jnp.transpose(input_ids, (1, 0, 2))     # (T, B, D) time-major
    if Bp != B:
        x = jnp.pad(x, ((0, 0), (0, Bp - B), (0, 0)))
    x_flat = x.reshape(T * Bp, D)

    kern = functools.partial(_ner_lstm_fused_kernel, num_layers=num_layers,
                             hidden=H, seq_len=T, batch_pad=Bp)
    n_in = 1 + 3 * num_layers + 6
    out_flat = pl.pallas_call(
        kern,
        out_shape=jax.ShapeDtypeStruct((T * Bp, _LOGIT_PAD), jnp.float32),
        in_specs=[_VMEM] * n_in,
        out_specs=_VMEM,
        scratch_shapes=[
            pltpu.VMEM((T * Bp, H), jnp.float32),        # fwd hidden states
            pltpu.VMEM((T * Bp, H), jnp.float32),        # bwd hidden states
            pltpu.VMEM((T * Bp, 8 * H), jnp.float32),    # hoisted x-gates (both dirs)
        ],
    )(x_flat, *lstm_flat, *head)

    out = out_flat.reshape(T, Bp, _LOGIT_PAD)[:, :B, :num_classes]
    return jnp.transpose(out, (1, 0, 2)), None            # tiny transpose only


# ----------------------------------------------------------------------------
# Pure-JAX reference (same math) for a correctness check
# ----------------------------------------------------------------------------
def _ref_lstm_dir(x_tbd, w_ih, w_hh, b_ih, b_hh, reverse):
    T, B, _ = x_tbd.shape
    H = w_hh.shape[1]
    h = jnp.zeros((B, H), jnp.float32)
    c = jnp.zeros((B, H), jnp.float32)
    outs = [None] * T
    order = range(T - 1, -1, -1) if reverse else range(T)
    for t in order:
        gates = x_tbd[t] @ w_ih.T + h @ w_hh.T + b_ih + b_hh
        i = jax.nn.sigmoid(gates[:, :H])
        f = jax.nn.sigmoid(gates[:, H:2 * H])
        g = jnp.tanh(gates[:, 2 * H:3 * H])
        o = jax.nn.sigmoid(gates[:, 3 * H:])
        c = f * c + i * g
        h = o * jnp.tanh(c)
        outs[t] = h
    return jnp.stack(outs, axis=0)


def _ref_forward(params, input_ids):
    h = jnp.transpose(input_ids, (1, 0, 2))
    for layer in params["lstm"]:
        fwd = _ref_lstm_dir(h, *layer["fwd"], reverse=False)
        bwd = _ref_lstm_dir(h, *layer["bwd"], reverse=True)
        h = jnp.concatenate([fwd, bwd], axis=-1)
    T, B, F = h.shape
    x = jnp.transpose(h, (1, 0, 2)).reshape(B * T, F)
    x = jnp.tanh(x @ params["w1"] + params["b1"])
    x = jnp.tanh(x @ params["w2"] + params["b2"])
    x = x @ params["w3"] + params["b3"]
    return x.reshape(B, T, -1)


# ----------------------------------------------------------------------------
# Deterministic parameter init (PyTorch-style uniform(-1/sqrt(fan), 1/sqrt(fan)))
# ----------------------------------------------------------------------------
def init_params(key, vec_dim, num_classes, hidden_dim, num_layers):
    def uni(k, shape, bound):
        return jax.random.uniform(k, shape, jnp.float32, -bound, bound)

    keys = iter(jax.random.split(key, num_layers * 8 + 6))
    kH = 1.0 / float(hidden_dim) ** 0.5

    lstm_layers = []
    for layer in range(num_layers):
        d_in = vec_dim if layer == 0 else 2 * hidden_dim
        dirs = {}
        for d in ("fwd", "bwd"):
            w_ih = uni(next(keys), (4 * hidden_dim, d_in), kH)
            w_hh = uni(next(keys), (4 * hidden_dim, hidden_dim), kH)
            b_ih = uni(next(keys), (4 * hidden_dim,), kH)
            b_hh = uni(next(keys), (4 * hidden_dim,), kH)
            dirs[d] = (w_ih, w_hh, b_ih, b_hh)
        lstm_layers.append(dirs)

    d1_in, d1_out = 2 * hidden_dim, hidden_dim // 4
    d2_out = hidden_dim // 8
    k1, k2, k3 = 1.0 / d1_in ** 0.5, 1.0 / d1_out ** 0.5, 1.0 / d2_out ** 0.5
    params = {
        "lstm": lstm_layers,
        "w1": uni(next(keys), (d1_in, d1_out), k1),
        "b1": uni(next(keys), (d1_out,), k1),
        "w2": uni(next(keys), (d1_out, d2_out), k2),
        "b2": uni(next(keys), (d2_out,), k2),
        "w3": uni(next(keys), (d2_out, num_classes), k3),
        "b3": uni(next(keys), (num_classes,), k3),
    }
    return params


# ----------------------------------------------------------------------------
if __name__ == "__main__":
    VEC_DIM = 16
    NUM_CLASSES = 5
    HIDDEN_DIM = 32
    NUM_LAYERS = 2
    B, T = 2, 8

    root = jax.random.PRNGKey(0)
    k_param, k_input = jax.random.split(root)
    params = init_params(k_param, VEC_DIM, NUM_CLASSES, HIDDEN_DIM, NUM_LAYERS)
    x = jax.random.normal(k_input, (B, T, VEC_DIM), jnp.float32)

    prepped = prepare_params(params)                 # one-time repack, outside jit
    fwd = jax.jit(ner_lstm_forward, static_argnames=("num_classes",))
    outputs, loss = fwd(prepped, x, num_classes=NUM_CLASSES)
    outputs = jax.block_until_ready(outputs)

    assert outputs.shape == (B, T, NUM_CLASSES), outputs.shape
    assert loss is None

    with jax.default_matmul_precision("float32"):
        ref = _ref_forward(params, x)
    ref = jax.block_until_ready(ref)
    import numpy as np
    np.testing.assert_allclose(np.asarray(outputs), np.asarray(ref),
                               rtol=1e-3, atol=1e-3)

    print("KERNEL_OK")
</pallas_src>

<mosaic_0001>
module attributes {stable_mosaic.version = 11 : i64} {
  func.func @_ner_lstm_fused_kernel(%arg0: memref<64x16xf32, #tpu.memory_space<vmem>>, %arg1: memref<16x256xf32, #tpu.memory_space<vmem>>, %arg2: memref<64x256xf32, #tpu.memory_space<vmem>>, %arg3: memref<1x256xf32, #tpu.memory_space<vmem>>, %arg4: memref<64x256xf32, #tpu.memory_space<vmem>>, %arg5: memref<64x256xf32, #tpu.memory_space<vmem>>, %arg6: memref<1x256xf32, #tpu.memory_space<vmem>>, %arg7: memref<64x8xf32, #tpu.memory_space<vmem>>, %arg8: memref<1x8xf32, #tpu.memory_space<vmem>>, %arg9: memref<8x4xf32, #tpu.memory_space<vmem>>, %arg10: memref<1x4xf32, #tpu.memory_space<vmem>>, %arg11: memref<4x128xf32, #tpu.memory_space<vmem>>, %arg12: memref<1x128xf32, #tpu.memory_space<vmem>>, %arg13: memref<64x128xf32, #tpu.memory_space<vmem>>, %arg14: memref<64x32xf32, #tpu.memory_space<vmem>>, %arg15: memref<64x32xf32, #tpu.memory_space<vmem>>, %arg16: memref<64x256xf32, #tpu.memory_space<vmem>>) attributes {dimension_semantics = [], scalar_prefetch = 0 : i64, scratch_operands = 3 : i64, tpu.core_type = #tpu.core_type<tc>} {
    %c0 = arith.constant 0 : index
    %c0_0 = arith.constant 0 : index
    %0 = vector.load %arg0[%c0, %c0_0] : memref<64x16xf32, #tpu.memory_space<vmem>>, vector<64x16xf32>
    %c0_1 = arith.constant 0 : index
    %c0_2 = arith.constant 0 : index
    %1 = vector.load %arg1[%c0_1, %c0_2] : memref<16x256xf32, #tpu.memory_space<vmem>>, vector<16x256xf32>
    %cst = arith.constant dense<0.000000e+00> : vector<64x256xf32>
    %2 = tpu.matmul %0, %1, %cst {dimension_numbers = #tpu.dot_dimension_numbers<[1], [0], [0], [1], [0, 0, 1, 1], [], []>} : vector<64x16xf32>, vector<16x256xf32>, vector<64x256xf32> -> vector<64x256xf32>
    %c0_3 = arith.constant 0 : index
    %c0_4 = arith.constant 0 : index
    %3 = vector.load %arg3[%c0_3, %c0_4] : memref<1x256xf32, #tpu.memory_space<vmem>>, vector<1x256xf32>
    %4 = vector.broadcast %3 : vector<1x256xf32> to vector<64x256xf32>
    %5 = arith.addf %2, %4 : vector<64x256xf32>
    %c0_5 = arith.constant 0 : index
    %c0_6 = arith.constant 0 : index
    %6 = vector.load %arg16[%c0_5, %c0_6] : memref<64x256xf32, #tpu.memory_space<vmem>>, vector<64x256xf32>
    tpu.vector_store %arg16[%c0_5, %c0_6], %5 {strides = array<i32>} : memref<64x256xf32, #tpu.memory_space<vmem>>, vector<64x256xf32>,
    %c0_7 = arith.constant 0 : index
    %c0_8 = arith.constant 0 : index
    %7 = vector.load %arg2[%c0_7, %c0_8] : memref<64x256xf32, #tpu.memory_space<vmem>>, vector<64x256xf32>
    %cst_9 = arith.constant 0.000000e+00 : f32
    %8 = vector.broadcast %cst_9 : f32 to vector<8x64xf32>
    %cst_10 = arith.constant 0.000000e+00 : f32
    %9 = vector.broadcast %cst_10 : f32 to vector<8x32xf32>
    %c0_i32 = arith.constant 0 : i32
    %c8_i32 = arith.constant 8 : i32
    %10 = arith.muli %c0_i32, %c8_i32 : i32
    %11 = tpu.assume_multiple %10, 8 : i32
    %c7_i32 = arith.constant 7 : i32
    %12 = arith.subi %c7_i32, %c0_i32 : i32
    %c8_i32_11 = arith.constant 8 : i32
    %13 = arith.muli %12, %c8_i32_11 : i32
    %14 = tpu.assume_multiple %13, 8 : i32
    %cst_12 = arith.constant dense<0.000000e+00> : vector<8x256xf32>
    %15 = tpu.matmul %8, %7, %cst_12 {dimension_numbers = #tpu.dot_dimension_numbers<[1], [0], [0], [1], [0, 0, 1, 1], [], []>} : vector<8x64xf32>, vector<64x256xf32>, vector<8x256xf32> -> vector<8x256xf32>
    %16 = vector.extract_strided_slice %15 {offsets = [0, 0], sizes = [8, 128], strides = [1, 1]} : vector<8x256xf32> to vector<8x128xf32>
    %17 = arith.index_cast %11 : i32 to index
    %c0_13 = arith.constant 0 : index
    %18 = vector.load %arg16[%17, %c0_13] : memref<64x256xf32, #tpu.memory_space<vmem>>, vector<8x128xf32>
    %19 = arith.addf %16, %18 : vector<8x128xf32>
    %20 = vector.extract_strided_slice %15 {offsets = [0, 128], sizes = [8, 128], strides = [1, 1]} : vector<8x256xf32> to vector<8x128xf32>
    %21 = arith.index_cast %14 : i32 to index
    %c128 = arith.constant 128 : index
    %22 = vector.load %arg16[%21, %c128] : memref<64x256xf32, #tpu.memory_space<vmem>>, vector<8x128xf32>
    %23 = arith.addf %20, %22 : vector<8x128xf32>
    %24 = tpu.iota {dimensions = array<i32: 1>} : vector<8x128xi32>
    %c64_i32 = arith.constant 64 : i32
    %25 = vector.broadcast %c64_i32 : i32 to vector<8x128xi32>
    %26 = arith.cmpi sge, %24, %25 : vector<8x128xi32>
    %c96_i32 = arith.constant 96 : i32
    %27 = vector.broadcast %c96_i32 : i32 to vector<8x128xi32>
    %28 = arith.cmpi slt, %24, %27 : vector<8x128xi32>
    %29 = arith.andi %26, %28 : vector<8x128xi1>
    %cst_14 = arith.constant 5.000000e-01 : f32
    %30 = vector.broadcast %cst_14 : f32 to vector<8x128xf32>
    %31 = arith.mulf %30, %19 : vector<8x128xf32>
    %32 = math.tanh %31 : vector<8x128xf32>
    %cst_15 = arith.constant 1.000000e+00 : f32
    %33 = vector.broadcast %cst_15 : f32 to vector<8x128xf32>
    %34 = arith.addf %32, %33 : vector<8x128xf32>
    %cst_16 = arith.constant 5.000000e-01 : f32
    %35 = vector.broadcast %cst_16 : f32 to vector<8x128xf32>
    %36 = arith.mulf %35, %34 : vector<8x128xf32>
    %37 = math.tanh %19 : vector<8x128xf32>
    %38 = arith.select %29, %37, %36 : vector<8x128xi1>, vector<8x128xf32>
    %39 = vector.extract_strided_slice %38 {offsets = [0, 0], sizes = [8, 32], strides = [1, 1]} : vector<8x128xf32> to vector<8x32xf32>
    %40 = vector.extract_strided_slice %38 {offsets = [0, 32], sizes = [8, 32], strides = [1, 1]} : vector<8x128xf32> to vector<8x32xf32>
    %41 = vector.extract_strided_slice %38 {offsets = [0, 64], sizes = [8, 32], strides = [1, 1]} : vector<8x128xf32> to vector<8x32xf32>
    %42 = vector.extract_strided_slice %38 {offsets = [0, 96], sizes = [8, 32], strides = [1, 1]} : vector<8x128xf32> to vector<8x32xf32>
    %43 = arith.mulf %40, %9 : vector<8x32xf32>
    %44 = arith.mulf %39, %41 : vector<8x32xf32>
    %45 = arith.addf %43, %44 : vector<8x32xf32>
    %46 = math.tanh %45 : vector<8x32xf32>
    %47 = arith.mulf %42, %46 : vector<8x32xf32>
    %48 = tpu.iota {dimensions = array<i32: 1>} : vector<8x128xi32>
    %c64_i32_17 = arith.constant 64 : i32
    %49 = vector.broadcast %c64_i32_17 : i32 to vector<8x128xi32>
    %50 = arith.cmpi sge, %48, %49 : vector<8x128xi32>
    %c96_i32_18 = arith.constant 96 : i32
    %51 = vector.broadcast %c96_i32_18 : i32 to vector<8x128xi32>
    %52 = arith.cmpi slt, %48, %51 : vector<8x128xi32>
    %53 = arith.andi %50, %52 : vector<8x128xi1>
    %cst_19 = arith.constant 5.000000e-01 : f32
    %54 = vector.broadcast %cst_19 : f32 to vector<8x128xf32>
    %55 = arith.mulf %54, %23 : vector<8x128xf32>
    %56 = math.tanh %55 : vector<8x128xf32>
    %cst_20 = arith.constant 1.000000e+00 : f32
    %57 = vector.broadcast %cst_20 : f32 to vector<8x128xf32>
    %58 = arith.addf %56, %57 : vector<8x128xf32>
    %cst_21 = arith.constant 5.000000e-01 : f32
    %59 = vector.broadcast %cst_21 : f32 to vector<8x128xf32>
    %60 = arith.mulf %59, %58 : vector<8x128xf32>
    %61 = math.tanh %23 : vector<8x128xf32>
    %62 = arith.select %53, %61, %60 : vector<8x128xi1>, vector<8x128xf32>
    %63 = vector.extract_strided_slice %62 {offsets = [0, 0], sizes = [8, 32], strides = [1, 1]} : vector<8x128xf32> to vector<8x32xf32>
    %64 = vector.extract_strided_slice %62 {offsets = [0, 32], sizes = [8, 32], strides = [1, 1]} : vector<8x128xf32> to vector<8x32xf32>
    %65 = vector.extract_strided_slice %62 {offsets = [0, 64], sizes = [8, 32], strides = [1, 1]} : vector<8x128xf32> to vector<8x32xf32>
    %66 = vector.extract_strided_slice %62 {offsets = [0, 96], sizes = [8, 32], strides = [1, 1]} : vector<8x128xf32> to vector<8x32xf32>
    %67 = arith.mulf %64, %9 : vector<8x32xf32>
    %68 = arith.mulf %63, %65 : vector<8x32xf32>
    %69 = arith.addf %67, %68 : vector<8x32xf32>
    %70 = math.tanh %69 : vector<8x32xf32>
    %71 = arith.mulf %66, %70 : vector<8x32xf32>
    %72 = arith.index_cast %11 : i32 to index
    %c0_22 = arith.constant 0 : index
    %73 = vector.load %arg14[%72, %c0_22] : memref<64x32xf32, #tpu.memory_space<vmem>>, vector<8x32xf32>
    tpu.vector_store %arg14[%72, %c0_22], %47 {strides = array<i32>} : memref<64x32xf32, #tpu.memory_space<vmem>>, vector<8x32xf32>,
    %74 = arith.index_cast %14 : i32 to index
    %c0_23 = arith.constant 0 : index
    %75 = vector.load %arg15[%74, %c0_23] : memref<64x32xf32, #tpu.memory_space<vmem>>, vector<8x32xf32>
    tpu.vector_store %arg15[%74, %c0_23], %71 {strides = array<i32>} : memref<64x32xf32, #tpu.memory_space<vmem>>, vector<8x32xf32>,
    %76 = tpu.concatenate %47, %71 in 1 : vector<8x32xf32>, vector<8x32xf32> -> vector<8x64xf32>
    %c1_i32 = arith.constant 1 : i32
    %c8_i32_24 = arith.constant 8 : i32
    %77 = arith.muli %c1_i32, %c8_i32_24 : i32
    %78 = tpu.assume_multiple %77, 8 : i32
    %c7_i32_25 = arith.constant 7 : i32
    %79 = arith.subi %c7_i32_25, %c1_i32 : i32
    %c8_i32_26 = arith.constant 8 : i32
    %80 = arith.muli %79, %c8_i32_26 : i32
    %81 = tpu.assume_multiple %80, 8 : i32
    %cst_27 = arith.constant dense<0.000000e+00> : vector<8x256xf32>
    %82 = tpu.matmul %76, %7, %cst_27 {dimension_numbers = #tpu.dot_dimension_numbers<[1], [0], [0], [1], [0, 0, 1, 1], [], []>} : vector<8x64xf32>, vector<64x256xf32>, vector<8x256xf32> -> vector<8x256xf32>
    %83 = vector.extract_strided_slice %82 {offsets = [0, 0], sizes = [8, 128], strides = [1, 1]} : vector<8x256xf32> to vector<8x128xf32>
    %84 = arith.index_cast %78 : i32 to index
    %c0_28 = arith.constant 0 : index
    %85 = vector.load %arg16[%84, %c0_28] : memref<64x256xf32, #tpu.memory_space<vmem>>, vector<8x128xf32>
    %86 = arith.addf %83, %85 : vector<8x128xf32>
    %87 = vector.extract_strided_slice %82 {offsets = [0, 128], sizes = [8, 128], strides = [1, 1]} : vector<8x256xf32> to vector<8x128xf32>
    %88 = arith.index_cast %81 : i32 to index
    %c128_29 = arith.constant 128 : index
    %89 = vector.load %arg16[%88, %c128_29] : memref<64x256xf32, #tpu.memory_space<vmem>>, vector<8x128xf32>
    %90 = arith.addf %87, %89 : vector<8x128xf32>
    %91 = tpu.iota {dimensions = array<i32: 1>} : vector<8x128xi32>
    %c64_i32_30 = arith.constant 64 : i32
    %92 = vector.broadcast %c64_i32_30 : i32 to vector<8x128xi32>
    %93 = arith.cmpi sge, %91, %92 : vector<8x128xi32>
    %c96_i32_31 = arith.constant 96 : i32
    %94 = vector.broadcast %c96_i32_31 : i32 to vector<8x128xi32>
    %95 = arith.cmpi slt, %91, %94 : vector<8x128xi32>
    %96 = arith.andi %93, %95 : vector<8x128xi1>
    %cst_32 = arith.constant 5.000000e-01 : f32
    %97 = vector.broadcast %cst_32 : f32 to vector<8x128xf32>
    %98 = arith.mulf %97, %86 : vector<8x128xf32>
    %99 = math.tanh %98 : vector<8x128xf32>
    %cst_33 = arith.constant 1.000000e+00 : f32
    %100 = vector.broadcast %cst_33 : f32 to vector<8x128xf32>
    %101 = arith.addf %99, %100 : vector<8x128xf32>
    %cst_34 = arith.constant 5.000000e-01 : f32
    %102 = vector.broadcast %cst_34 : f32 to vector<8x128xf32>
    %103 = arith.mulf %102, %101 : vector<8x128xf32>
    %104 = math.tanh %86 : vector<8x128xf32>
    %105 = arith.select %96, %104, %103 : vector<8x128xi1>, vector<8x128xf32>
    %106 = vector.extract_strided_slice %105 {offsets = [0, 0], sizes = [8, 32], strides = [1, 1]} : vector<8x128xf32> to vector<8x32xf32>
    %107 = vector.extract_strided_slice %105 {offsets = [0, 32], sizes = [8, 32], strides = [1, 1]} : vector<8x128xf32> to vector<8x32xf32>
    %108 = vector.extract_strided_slice %105 {offsets = [0, 64], sizes = [8, 32], strides = [1, 1]} : vector<8x128xf32> to vector<8x32xf32>
    %109 = vector.extract_strided_slice %105 {offsets = [0, 96], sizes = [8, 32], strides = [1, 1]} : vector<8x128xf32> to vector<8x32xf32>
    %110 = arith.mulf %107, %45 : vector<8x32xf32>
    %111 = arith.mulf %106, %108 : vector<8x32xf32>
    %112 = arith.addf %110, %111 : vector<8x32xf32>
    %113 = math.tanh %112 : vector<8x32xf32>
    %114 = arith.mulf %109, %113 : vector<8x32xf32>
    %115 = tpu.iota {dimensions = array<i32: 1>} : vector<8x128xi32>
    %c64_i32_35 = arith.constant 64 : i32
    %116 = vector.broadcast %c64_i32_35 : i32 to vector<8x128xi32>
    %117 = arith.cmpi sge, %115, %116 : vector<8x128xi32>
    %c96_i32_36 = arith.constant 96 : i32
    %118 = vector.broadcast %c96_i32_36 : i32 to vector<8x128xi32>
    %119 = arith.cmpi slt, %115, %118 : vector<8x128xi32>
    %120 = arith.andi %117, %119 : vector<8x128xi1>
    %cst_37 = arith.constant 5.000000e-01 : f32
    %121 = vector.broadcast %cst_37 : f32 to vector<8x128xf32>
    %122 = arith.mulf %121, %90 : vector<8x128xf32>
    %123 = math.tanh %122 : vector<8x128xf32>
    %cst_38 = arith.constant 1.000000e+00 : f32
    %124 = vector.broadcast %cst_38 : f32 to vector<8x128xf32>
    %125 = arith.addf %123, %124 : vector<8x128xf32>
    %cst_39 = arith.constant 5.000000e-01 : f32
    %126 = vector.broadcast %cst_39 : f32 to vector<8x128xf32>
    %127 = arith.mulf %126, %125 : vector<8x128xf32>
    %128 = math.tanh %90 : vector<8x128xf32>
    %129 = arith.select %120, %128, %127 : vector<8x128xi1>, vector<8x128xf32>
    %130 = vector.extract_strided_slice %129 {offsets = [0, 0], sizes = [8, 32], strides = [1, 1]} : vector<8x128xf32> to vector<8x32xf32>
    %131 = vector.extract_strided_slice %129 {offsets = [0, 32], sizes = [8, 32], strides = [1, 1]} : vector<8x128xf32> to vector<8x32xf32>
    %132 = vector.extract_strided_slice %129 {offsets = [0, 64], sizes = [8, 32], strides = [1, 1]} : vector<8x128xf32> to vector<8x32xf32>
    %133 = vector.extract_strided_slice %129 {offsets = [0, 96], sizes = [8, 32], strides = [1, 1]} : vector<8x128xf32> to vector<8x32xf32>
    %134 = arith.mulf %131, %69 : vector<8x32xf32>
    %135 = arith.mulf %130, %132 : vector<8x32xf32>
    %136 = arith.addf %134, %135 : vector<8x32xf32>
    %137 = math.tanh %136 : vector<8x32xf32>
    %138 = arith.mulf %133, %137 : vector<8x32xf32>
    %139 = arith.index_cast %78 : i32 to index
    %c0_40 = arith.constant 0 : index
    %140 = vector.load %arg14[%139, %c0_40] : memref<64x32xf32, #tpu.memory_space<vmem>>, vector<8x32xf32>
    tpu.vector_store %arg14[%139, %c0_40], %114 {strides = array<i32>} : memref<64x32xf32, #tpu.memory_space<vmem>>, vector<8x32xf32>,
    %141 = arith.index_cast %81 : i32 to index
    %c0_41 = arith.constant 0 : index
    %142 = vector.load %arg15[%141, %c0_41] : memref<64x32xf32, #tpu.memory_space<vmem>>, vector<8x32xf32>
    tpu.vector_store %arg15[%141, %c0_41], %138 {strides = array<i32>} : memref<64x32xf32, #tpu.memory_space<vmem>>, vector<8x32xf32>,
    %143 = tpu.concatenate %114, %138 in 1 : vector<8x32xf32>, vector<8x32xf32> -> vector<8x64xf32>
    %c2_i32 = arith.constant 2 : i32
    %c8_i32_42 = arith.constant 8 : i32
    %144 = arith.muli %c2_i32, %c8_i32_42 : i32
    %145 = tpu.assume_multiple %144, 8 : i32
    %c7_i32_43 = arith.constant 7 : i32
    %146 = arith.subi %c7_i32_43, %c2_i32 : i32
    %c8_i32_44 = arith.constant 8 : i32
    %147 = arith.muli %146, %c8_i32_44 : i32
    %148 = tpu.assume_multiple %147, 8 : i32
    %cst_45 = arith.constant dense<0.000000e+00> : vector<8x256xf32>
    %149 = tpu.matmul %143, %7, %cst_45 {dimension_numbers = #tpu.dot_dimension_numbers<[1], [0], [0], [1], [0, 0, 1, 1], [], []>} : vector<8x64xf32>, vector<64x256xf32>, vector<8x256xf32> -> vector<8x256xf32>
    %150 = vector.extract_strided_slice %149 {offsets = [0, 0], sizes = [8, 128], strides = [1, 1]} : vector<8x256xf32> to vector<8x128xf32>
    %151 = arith.index_cast %145 : i32 to index
    %c0_46 = arith.constant 0 : index
    %152 = vector.load %arg16[%151, %c0_46] : memref<64x256xf32, #tpu.memory_space<vmem>>, vector<8x128xf32>
    %153 = arith.addf %150, %152 : vector<8x128xf32>
    %154 = vector.extract_strided_slice %149 {offsets = [0, 128], sizes = [8, 128], strides = [1, 1]} : vector<8x256xf32> to vector<8x128xf32>
    %155 = arith.index_cast %148 : i32 to index
    %c128_47 = arith.constant 128 : index
    %156 = vector.load %arg16[%155, %c128_47] : memref<64x256xf32, #tpu.memory_space<vmem>>, vector<8x128xf32>
    %157 = arith.addf %154, %156 : vector<8x128xf32>
    %158 = tpu.iota {dimensions = array<i32: 1>} : vector<8x128xi32>
    %c64_i32_48 = arith.constant 64 : i32
    %159 = vector.broadcast %c64_i32_48 : i32 to vector<8x128xi32>
    %160 = arith.cmpi sge, %158, %159 : vector<8x128xi32>
    %c96_i32_49 = arith.constant 96 : i32
    %161 = vector.broadcast %c96_i32_49 : i32 to vector<8x128xi32>
    %162 = arith.cmpi slt, %158, %161 : vector<8x128xi32>
    %163 = arith.andi %160, %162 : vector<8x128xi1>
    %cst_50 = arith.constant 5.000000e-01 : f32
    %164 = vector.broadcast %cst_50 : f32 to vector<8x128xf32>
    %165 = arith.mulf %164, %153 : vector<8x128xf32>
    %166 = math.tanh %165 : vector<8x128xf32>
    %cst_51 = arith.constant 1.000000e+00 : f32
    %167 = vector.broadcast %cst_51 : f32 to vector<8x128xf32>
    %168 = arith.addf %166, %167 : vector<8x128xf32>
    %cst_52 = arith.constant 5.000000e-01 : f32
    %169 = vector.broadcast %cst_52 : f32 to vector<8x128xf32>
    %170 = arith.mulf %169, %168 : vector<8x128xf32>
    %171 = math.tanh %153 : vector<8x128xf32>
    %172 = arith.select %163, %171, %170 : vector<8x128xi1>, vector<8x128xf32>
    %173 = vector.extract_strided_slice %172 {offsets = [0, 0], sizes = [8, 32], strides = [1, 1]} : vector<8x128xf32> to vector<8x32xf32>
    %174 = vector.extract_strided_slice %172 {offsets = [0, 32], sizes = [8, 32], strides = [1, 1]} : vector<8x128xf32> to vector<8x32xf32>
    %175 = vector.extract_strided_slice %172 {offsets = [0, 64], sizes = [8, 32], strides = [1, 1]} : vector<8x128xf32> to vector<8x32xf32>
    %176 = vector.extract_strided_slice %172 {offsets = [0, 96], sizes = [8, 32], strides = [1, 1]} : vector<8x128xf32> to vector<8x32xf32>
    %177 = arith.mulf %174, %112 : vector<8x32xf32>
    %178 = arith.mulf %173, %175 : vector<8x32xf32>
    %179 = arith.addf %177, %178 : vector<8x32xf32>
    %180 = math.tanh %179 : vector<8x32xf32>
    %181 = arith.mulf %176, %180 : vector<8x32xf32>
    %182 = tpu.iota {dimensions = array<i32: 1>} : vector<8x128xi32>
    %c64_i32_53 = arith.constant 64 : i32
    %183 = vector.broadcast %c64_i32_53 : i32 to vector<8x128xi32>
    %184 = arith.cmpi sge, %182, %183 : vector<8x128xi32>
    %c96_i32_54 = arith.constant 96 : i32
    %185 = vector.broadcast %c96_i32_54 : i32 to vector<8x128xi32>
    %186 = arith.cmpi slt, %182, %185 : vector<8x128xi32>
    %187 = arith.andi %184, %186 : vector<8x128xi1>
    %cst_55 = arith.constant 5.000000e-01 : f32
    %188 = vector.broadcast %cst_55 : f32 to vector<8x128xf32>
    %189 = arith.mulf %188, %157 : vector<8x128xf32>
    %190 = math.tanh %189 : vector<8x128xf32>
    %cst_56 = arith.constant 1.000000e+00 : f32
    %191 = vector.broadcast %cst_56 : f32 to vector<8x128xf32>
    %192 = arith.addf %190, %191 : vector<8x128xf32>
    %cst_57 = arith.constant 5.000000e-01 : f32
    %193 = vector.broadcast %cst_57 : f32 to vector<8x128xf32>
    %194 = arith.mulf %193, %192 : vector<8x128xf32>
    %195 = math.tanh %157 : vector<8x128xf32>
    %196 = arith.select %187, %195, %194 : vector<8x128xi1>, vector<8x128xf32>
    %197 = vector.extract_strided_slice %196 {offsets = [0, 0], sizes = [8, 32], strides = [1, 1]} : vector<8x128xf32> to vector<8x32xf32>
    %198 = vector.extract_strided_slice %196 {offsets = [0, 32], sizes = [8, 32], strides = [1, 1]} : vector<8x128xf32> to vector<8x32xf32>
    %199 = vector.extract_strided_slice %196 {offsets = [0, 64], sizes = [8, 32], strides = [1, 1]} : vector<8x128xf32> to vector<8x32xf32>
    %200 = vector.extract_strided_slice %196 {offsets = [0, 96], sizes = [8, 32], strides = [1, 1]} : vector<8x128xf32> to vector<8x32xf32>
    %201 = arith.mulf %198, %136 : vector<8x32xf32>
    %202 = arith.mulf %197, %199 : vector<8x32xf32>
    %203 = arith.addf %201, %202 : vector<8x32xf32>
    %204 = math.tanh %203 : vector<8x32xf32>
    %205 = arith.mulf %200, %204 : vector<8x32xf32>
    %206 = arith.index_cast %145 : i32 to index
    %c0_58 = arith.constant 0 : index
    %207 = vector.load %arg14[%206, %c0_58] : memref<64x32xf32, #tpu.memory_space<vmem>>, vector<8x32xf32>
    tpu.vector_store %arg14[%206, %c0_58], %181 {strides = array<i32>} : memref<64x32xf32, #tpu.memory_space<vmem>>, vector<8x32xf32>,
    %208 = arith.index_cast %148 : i32 to index
    %c0_59 = arith.constant 0 : index
    %209 = vector.load %arg15[%208, %c0_59] : memref<64x32xf32, #tpu.memory_space<vmem>>, vector<8x32xf32>
    tpu.vector_store %arg15[%208, %c0_59], %205 {strides = array<i32>} : memref<64x32xf32, #tpu.memory_space<vmem>>, vector<8x32xf32>,
    %210 = tpu.concatenate %181, %205 in 1 : vector<8x32xf32>, vector<8x32xf32> -> vector<8x64xf32>
    %c3_i32 = arith.constant 3 : i32
    %c8_i32_60 = arith.constant 8 : i32
    %211 = arith.muli %c3_i32, %c8_i32_60 : i32
    %212 = tpu.assume_multiple %211, 8 : i32
    %c7_i32_61 = arith.constant 7 : i32
    %213 = arith.subi %c7_i32_61, %c3_i32 : i32
    %c8_i32_62 = arith.constant 8 : i32
    %214 = arith.muli %213, %c8_i32_62 : i32
    %215 = tpu.assume_multiple %214, 8 : i32
    %cst_63 = arith.constant dense<0.000000e+00> : vector<8x256xf32>
    %216 = tpu.matmul %210, %7, %cst_63 {dimension_numbers = #tpu.dot_dimension_numbers<[1], [0], [0], [1], [0, 0, 1, 1], [], []>} : vector<8x64xf32>, vector<64x256xf32>, vector<8x256xf32> -> vector<8x256xf32>
    %217 = vector.extract_strided_slice %216 {offsets = [0, 0], sizes = [8, 128], strides = [1, 1]} : vector<8x256xf32> to vector<8x128xf32>
    %218 = arith.index_cast %212 : i32 to index
    %c0_64 = arith.constant 0 : index
    %219 = vector.load %arg16[%218, %c0_64] : memref<64x256xf32, #tpu.memory_space<vmem>>, vector<8x128xf32>
    %220 = arith.addf %217, %219 : vector<8x128xf32>
    %221 = vector.extract_strided_slice %216 {offsets = [0, 128], sizes = [8, 128], strides = [1, 1]} : vector<8x256xf32> to vector<8x128xf32>
    %222 = arith.index_cast %215 : i32 to index
    %c128_65 = arith.constant 128 : index
    %223 = vector.load %arg16[%222, %c128_65] : memref<64x256xf32, #tpu.memory_space<vmem>>, vector<8x128xf32>
    %224 = arith.addf %221, %223 : vector<8x128xf32>
    %225 = tpu.iota {dimensions = array<i32: 1>} : vector<8x128xi32>
    %c64_i32_66 = arith.constant 64 : i32
    %226 = vector.broadcast %c64_i32_66 : i32 to vector<8x128xi32>
    %227 = arith.cmpi sge, %225, %226 : vector<8x128xi32>
    %c96_i32_67 = arith.constant 96 : i32
    %228 = vector.broadcast %c96_i32_67 : i32 to vector<8x128xi32>
    %229 = arith.cmpi slt, %225, %228 : vector<8x128xi32>
    %230 = arith.andi %227, %229 : vector<8x128xi1>
    %cst_68 = arith.constant 5.000000e-01 : f32
    %231 = vector.broadcast %cst_68 : f32 to vector<8x128xf32>
    %232 = arith.mulf %231, %220 : vector<8x128xf32>
    %233 = math.tanh %232 : vector<8x128xf32>
    %cst_69 = arith.constant 1.000000e+00 : f32
    %234 = vector.broadcast %cst_69 : f32 to vector<8x128xf32>
    %235 = arith.addf %233, %234 : vector<8x128xf32>
    %cst_70 = arith.constant 5.000000e-01 : f32
    %236 = vector.broadcast %cst_70 : f32 to vector<8x128xf32>
    %237 = arith.mulf %236, %235 : vector<8x128xf32>
    %238 = math.tanh %220 : vector<8x128xf32>
    %239 = arith.select %230, %238, %237 : vector<8x128xi1>, vector<8x128xf32>
    %240 = vector.extract_strided_slice %239 {offsets = [0, 0], sizes = [8, 32], strides = [1, 1]} : vector<8x128xf32> to vector<8x32xf32>
    %241 = vector.extract_strided_slice %239 {offsets = [0, 32], sizes = [8, 32], strides = [1, 1]} : vector<8x128xf32> to vector<8x32xf32>
    %242 = vector.extract_strided_slice %239 {offsets = [0, 64], sizes = [8, 32], strides = [1, 1]} : vector<8x128xf32> to vector<8x32xf32>
    %243 = vector.extract_strided_slice %239 {offsets = [0, 96], sizes = [8, 32], strides = [1, 1]} : vector<8x128xf32> to vector<8x32xf32>
    %244 = arith.mulf %241, %179 : vector<8x32xf32>
    %245 = arith.mulf %240, %242 : vector<8x32xf32>
    %246 = arith.addf %244, %245 : vector<8x32xf32>
    %247 = math.tanh %246 : vector<8x32xf32>
    %248 = arith.mulf %243, %247 : vector<8x32xf32>
    %249 = tpu.iota {dimensions = array<i32: 1>} : vector<8x128xi32>
    %c64_i32_71 = arith.constant 64 : i32
    %250 = vector.broadcast %c64_i32_71 : i32 to vector<8x128xi32>
    %251 = arith.cmpi sge, %249, %250 : vector<8x128xi32>
    %c96_i32_72 = arith.constant 96 : i32
    %252 = vector.broadcast %c96_i32_72 : i32 to vector<8x128xi32>
    %253 = arith.cmpi slt, %249, %252 : vector<8x128xi32>
    %254 = arith.andi %251, %253 : vector<8x128xi1>
    %cst_73 = arith.constant 5.000000e-01 : f32
    %255 = vector.broadcast %cst_73 : f32 to vector<8x128xf32>
    %256 = arith.mulf %255, %224 : vector<8x128xf32>
    %257 = math.tanh %256 : vector<8x128xf32>
    %cst_74 = arith.constant 1.000000e+00 : f32
    %258 = vector.broadcast %cst_74 : f32 to vector<8x128xf32>
    %259 = arith.addf %257, %258 : vector<8x128xf32>
    %cst_75 = arith.constant 5.000000e-01 : f32
    %260 = vector.broadcast %cst_75 : f32 to vector<8x128xf32>
    %261 = arith.mulf %260, %259 : vector<8x128xf32>
    %262 = math.tanh %224 : vector<8x128xf32>
    %263 = arith.select %254, %262, %261 : vector<8x128xi1>, vector<8x128xf32>
    %264 = vector.extract_strided_slice %263 {offsets = [0, 0], sizes = [8, 32], strides = [1, 1]} : vector<8x128xf32> to vector<8x32xf32>
    %265 = vector.extract_strided_slice %263 {offsets = [0, 32], sizes = [8, 32], strides = [1, 1]} : vector<8x128xf32> to vector<8x32xf32>
    %266 = vector.extract_strided_slice %263 {offsets = [0, 64], sizes = [8, 32], strides = [1, 1]} : vector<8x128xf32> to vector<8x32xf32>
    %267 = vector.extract_strided_slice %263 {offsets = [0, 96], sizes = [8, 32], strides = [1, 1]} : vector<8x128xf32> to vector<8x32xf32>
    %268 = arith.mulf %265, %203 : vector<8x32xf32>
    %269 = arith.mulf %264, %266 : vector<8x32xf32>
    %270 = arith.addf %268, %269 : vector<8x32xf32>
    %271 = math.tanh %270 : vector<8x32xf32>
    %272 = arith.mulf %267, %271 : vector<8x32xf32>
    %273 = arith.index_cast %212 : i32 to index
    %c0_76 = arith.constant 0 : index
    %274 = vector.load %arg14[%273, %c0_76] : memref<64x32xf32, #tpu.memory_space<vmem>>, vector<8x32xf32>
    tpu.vector_store %arg14[%273, %c0_76], %248 {strides = array<i32>} : memref<64x32xf32, #tpu.memory_space<vmem>>, vector<8x32xf32>,
    %275 = arith.index_cast %215 : i32 to index
    %c0_77 = arith.constant 0 : index
    %276 = vector.load %arg15[%275, %c0_77] : memref<64x32xf32, #tpu.memory_space<vmem>>, vector<8x32xf32>
    tpu.vector_store %arg15[%275, %c0_77], %272 {strides = array<i32>} : memref<64x32xf32, #tpu.memory_space<vmem>>, vector<8x32xf32>,
    %277 = tpu.concatenate %248, %272 in 1 : vector<8x32xf32>, vector<8x32xf32> -> vector<8x64xf32>
    %c4_i32 = arith.constant 4 : i32
    %c8_i32_78 = arith.constant 8 : i32
    %278 = arith.muli %c4_i32, %c8_i32_78 : i32
    %279 = tpu.assume_multiple %278, 8 : i32
    %c7_i32_79 = arith.constant 7 : i32
    %280 = arith.subi %c7_i32_79, %c4_i32 : i32
    %c8_i32_80 = arith.constant 8 : i32
    %281 = arith.muli %280, %c8_i32_80 : i32
    %282 = tpu.assume_multiple %281, 8 : i32
    %cst_81 = arith.constant dense<0.000000e+00> : vector<8x256xf32>
    %283 = tpu.matmul %277, %7, %cst_81 {dimension_numbers = #tpu.dot_dimension_numbers<[1], [0], [0], [1], [0, 0, 1, 1], [], []>} : vector<8x64xf32>, vector<64x256xf32>, vector<8x256xf32> -> vector<8x256xf32>
    %284 = vector.extract_strided_slice %283 {offsets = [0, 0], sizes = [8, 128], strides = [1, 1]} : vector<8x256xf32> to vector<8x128xf32>
    %285 = arith.index_cast %279 : i32 to index
    %c0_82 = arith.constant 0 : index
    %286 = vector.load %arg16[%285, %c0_82] : memref<64x256xf32, #tpu.memory_space<vmem>>, vector<8x128xf32>
    %287 = arith.addf %284, %286 : vector<8x128xf32>
    %288 = vector.extract_strided_slice %283 {offsets = [0, 128], sizes = [8, 128], strides = [1, 1]} : vector<8x256xf32> to vector<8x128xf32>
    %289 = arith.index_cast %282 : i32 to index
    %c128_83 = arith.constant 128 : index
    %290 = vector.load %arg16[%289, %c128_83] : memref<64x256xf32, #tpu.memory_space<vmem>>, vector<8x128xf32>
    %291 = arith.addf %288, %290 : vector<8x128xf32>
    %292 = tpu.iota {dimensions = array<i32: 1>} : vector<8x128xi32>
    %c64_i32_84 = arith.constant 64 : i32
    %293 = vector.broadcast %c64_i32_84 : i32 to vector<8x128xi32>
    %294 = arith.cmpi sge, %292, %293 : vector<8x128xi32>
    %c96_i32_85 = arith.constant 96 : i32
    %295 = vector.broadcast %c96_i32_85 : i32 to vector<8x128xi32>
    %296 = arith.cmpi slt, %292, %295 : vector<8x128xi32>
    %297 = arith.andi %294, %296 : vector<8x128xi1>
    %cst_86 = arith.constant 5.000000e-01 : f32
    %298 = vector.broadcast %cst_86 : f32 to vector<8x128xf32>
    %299 = arith.mulf %298, %287 : vector<8x128xf32>
    %300 = math.tanh %299 : vector<8x128xf32>
    %cst_87 = arith.constant 1.000000e+00 : f32
    %301 = vector.broadcast %cst_87 : f32 to vector<8x128xf32>
    %302 = arith.addf %300, %301 : vector<8x128xf32>
    %cst_88 = arith.constant 5.000000e-01 : f32
    %303 = vector.broadcast %cst_88 : f32 to vector<8x128xf32>
    %304 = arith.mulf %303, %302 : vector<8x128xf32>
    %305 = math.tanh %287 : vector<8x128xf32>
    %306 = arith.select %297, %305, %304 : vector<8x128xi1>, vector<8x128xf32>
    %307 = vector.extract_strided_slice %306 {offsets = [0, 0], sizes = [8, 32], strides = [1, 1]} : vector<8x128xf32> to vector<8x32xf32>
    %308 = vector.extract_strided_slice %306 {offsets = [0, 32], sizes = [8, 32], strides = [1, 1]} : vector<8x128xf32> to vector<8x32xf32>
    %309 = vector.extract_strided_slice %306 {offsets = [0, 64], sizes = [8, 32], strides = [1, 1]} : vector<8x128xf32> to vector<8x32xf32>
    %310 = vector.extract_strided_slice %306 {offsets = [0, 96], sizes = [8, 32], strides = [1, 1]} : vector<8x128xf32> to vector<8x32xf32>
    %311 = arith.mulf %308, %246 : vector<8x32xf32>
    %312 = arith.mulf %307, %309 : vector<8x32xf32>
    %313 = arith.addf %311, %312 : vector<8x32xf32>
    %314 = math.tanh %313 : vector<8x32xf32>
    %315 = arith.mulf %310, %314 : vector<8x32xf32>
    %316 = tpu.iota {dimensions = array<i32: 1>} : vector<8x128xi32>
    %c64_i32_89 = arith.constant 64 : i32
    %317 = vector.broadcast %c64_i32_89 : i32 to vector<8x128xi32>
    %318 = arith.cmpi sge, %316, %317 : vector<8x128xi32>
    %c96_i32_90 = arith.constant 96 : i32
    %319 = vector.broadcast %c96_i32_90 : i32 to vector<8x128xi32>
    %320 = arith.cmpi slt, %316, %319 : vector<8x128xi32>
    %321 = arith.andi %318, %320 : vector<8x128xi1>
    %cst_91 = arith.constant 5.000000e-01 : f32
    %322 = vector.broadcast %cst_91 : f32 to vector<8x128xf32>
    %323 = arith.mulf %322, %291 : vector<8x128xf32>
    %324 = math.tanh %323 : vector<8x128xf32>
    %cst_92 = arith.constant 1.000000e+00 : f32
    %325 = vector.broadcast %cst_92 : f32 to vector<8x128xf32>
    %326 = arith.addf %324, %325 : vector<8x128xf32>
    %cst_93 = arith.constant 5.000000e-01 : f32
    %327 = vector.broadcast %cst_93 : f32 to vector<8x128xf32>
    %328 = arith.mulf %327, %326 : vector<8x128xf32>
    %329 = math.tanh %291 : vector<8x128xf32>
    %330 = arith.select %321, %329, %328 : vector<8x128xi1>, vector<8x128xf32>
    %331 = vector.extract_strided_slice %330 {offsets = [0, 0], sizes = [8, 32], strides = [1, 1]} : vector<8x128xf32> to vector<8x32xf32>
    %332 = vector.extract_strided_slice %330 {offsets = [0, 32], sizes = [8, 32], strides = [1, 1]} : vector<8x128xf32> to vector<8x32xf32>
    %333 = vector.extract_strided_slice %330 {offsets = [0, 64], sizes = [8, 32], strides = [1, 1]} : vector<8x128xf32> to vector<8x32xf32>
    %334 = vector.extract_strided_slice %330 {offsets = [0, 96], sizes = [8, 32], strides = [1, 1]} : vector<8x128xf32> to vector<8x32xf32>
    %335 = arith.mulf %332, %270 : vector<8x32xf32>
    %336 = arith.mulf %331, %333 : vector<8x32xf32>
    %337 = arith.addf %335, %336 : vector<8x32xf32>
    %338 = math.tanh %337 : vector<8x32xf32>
    %339 = arith.mulf %334, %338 : vector<8x32xf32>
    %340 = arith.index_cast %279 : i32 to index
    %c0_94 = arith.constant 0 : index
    %341 = vector.load %arg14[%340, %c0_94] : memref<64x32xf32, #tpu.memory_space<vmem>>, vector<8x32xf32>
    tpu.vector_store %arg14[%340, %c0_94], %315 {strides = array<i32>} : memref<64x32xf32, #tpu.memory_space<vmem>>, vector<8x32xf32>,
    %342 = arith.index_cast %282 : i32 to index
    %c0_95 = arith.constant 0 : index
    %343 = vector.load %arg15[%342, %c0_95] : memref<64x32xf32, #tpu.memory_space<vmem>>, vector<8x32xf32>
    tpu.vector_store %arg15[%342, %c0_95], %339 {strides = array<i32>} : memref<64x32xf32, #tpu.memory_space<vmem>>, vector<8x32xf32>,
    %344 = tpu.concatenate %315, %339 in 1 : vector<8x32xf32>, vector<8x32xf32> -> vector<8x64xf32>
    %c5_i32 = arith.constant 5 : i32
    %c8_i32_96 = arith.constant 8 : i32
    %345 = arith.muli %c5_i32, %c8_i32_96 : i32
    %346 = tpu.assume_multiple %345, 8 : i32
    %c7_i32_97 = arith.constant 7 : i32
    %347 = arith.subi %c7_i32_97, %c5_i32 : i32
    %c8_i32_98 = arith.constant 8 : i32
    %348 = arith.muli %347, %c8_i32_98 : i32
    %349 = tpu.assume_multiple %348, 8 : i32
    %cst_99 = arith.constant dense<0.000000e+00> : vector<8x256xf32>
    %350 = tpu.matmul %344, %7, %cst_99 {dimension_numbers = #tpu.dot_dimension_numbers<[1], [0], [0], [1], [0, 0, 1, 1], [], []>} : vector<8x64xf32>, vector<64x256xf32>, vector<8x256xf32> -> vector<8x256xf32>
    %351 = vector.extract_strided_slice %350 {offsets = [0, 0], sizes = [8, 128], strides = [1, 1]} : vector<8x256xf32> to vector<8x128xf32>
    %352 = arith.index_cast %346 : i32 to index
    %c0_100 = arith.constant 0 : index
    %353 = vector.load %arg16[%352, %c0_100] : memref<64x256xf32, #tpu.memory_space<vmem>>, vector<8x128xf32>
    %354 = arith.addf %351, %353 : vector<8x128xf32>
    %355 = vector.extract_strided_slice %350 {offsets = [0, 128], sizes = [8, 128], strides = [1, 1]} : vector<8x256xf32> to vector<8x128xf32>
    %356 = arith.index_cast %349 : i32 to index
    %c128_101 = arith.constant 128 : index
    %357 = vector.load %arg16[%356, %c128_101] : memref<64x256xf32, #tpu.memory_space<vmem>>, vector<8x128xf32>
    %358 = arith.addf %355, %357 : vector<8x128xf32>
    %359 = tpu.iota {dimensions = array<i32: 1>} : vector<8x128xi32>
    %c64_i32_102 = arith.constant 64 : i32
    %360 = vector.broadcast %c64_i32_102 : i32 to vector<8x128xi32>
    %361 = arith.cmpi sge, %359, %360 : vector<8x128xi32>
    %c96_i32_103 = arith.constant 96 : i32
    %362 = vector.broadcast %c96_i32_103 : i32 to vector<8x128xi32>
    %363 = arith.cmpi slt, %359, %362 : vector<8x128xi32>
    %364 = arith.andi %361, %363 : vector<8x128xi1>
    %cst_104 = arith.constant 5.000000e-01 : f32
    %365 = vector.broadcast %cst_104 : f32 to vector<8x128xf32>
    %366 = arith.mulf %365, %354 : vector<8x128xf32>
    %367 = math.tanh %366 : vector<8x128xf32>
    %cst_105 = arith.constant 1.000000e+00 : f32
    %368 = vector.broadcast %cst_105 : f32 to vector<8x128xf32>
    %369 = arith.addf %367, %368 : vector<8x128xf32>
    %cst_106 = arith.constant 5.000000e-01 : f32
    %370 = vector.broadcast %cst_106 : f32 to vector<8x128xf32>
    %371 = arith.mulf %370, %369 : vector<8x128xf32>
    %372 = math.tanh %354 : vector<8x128xf32>
    %373 = arith.select %364, %372, %371 : vector<8x128xi1>, vector<8x128xf32>
    %374 = vector.extract_strided_slice %373 {offsets = [0, 0], sizes = [8, 32], strides = [1, 1]} : vector<8x128xf32> to vector<8x32xf32>
    %375 = vector.extract_strided_slice %373 {offsets = [0, 32], sizes = [8, 32], strides = [1, 1]} : vector<8x128xf32> to vector<8x32xf32>
    %376 = vector.extract_strided_slice %373 {offsets = [0, 64], sizes = [8, 32], strides = [1, 1]} : vector<8x128xf32> to vector<8x32xf32>
    %377 = vector.extract_strided_slice %373 {offsets = [0, 96], sizes = [8, 32], strides = [1, 1]} : vector<8x128xf32> to vector<8x32xf32>
    %378 = arith.mulf %375, %313 : vector<8x32xf32>
    %379 = arith.mulf %374, %376 : vector<8x32xf32>
    %380 = arith.addf %378, %379 : vector<8x32xf32>
    %381 = math.tanh %380 : vector<8x32xf32>
    %382 = arith.mulf %377, %381 : vector<8x32xf32>
    %383 = tpu.iota {dimensions = array<i32: 1>} : vector<8x128xi32>
    %c64_i32_107 = arith.constant 64 : i32
    %384 = vector.broadcast %c64_i32_107 : i32 to vector<8x128xi32>
    %385 = arith.cmpi sge, %383, %384 : vector<8x128xi32>
    %c96_i32_108 = arith.constant 96 : i32
    %386 = vector.broadcast %c96_i32_108 : i32 to vector<8x128xi32>
    %387 = arith.cmpi slt, %383, %386 : vector<8x128xi32>
    %388 = arith.andi %385, %387 : vector<8x128xi1>
    %cst_109 = arith.constant 5.000000e-01 : f32
    %389 = vector.broadcast %cst_109 : f32 to vector<8x128xf32>
    %390 = arith.mulf %389, %358 : vector<8x128xf32>
    %391 = math.tanh %390 : vector<8x128xf32>
    %cst_110 = arith.constant 1.000000e+00 : f32
    %392 = vector.broadcast %cst_110 : f32 to vector<8x128xf32>
    %393 = arith.addf %391, %392 : vector<8x128xf32>
    %cst_111 = arith.constant 5.000000e-01 : f32
    %394 = vector.broadcast %cst_111 : f32 to vector<8x128xf32>
    %395 = arith.mulf %394, %393 : vector<8x128xf32>
    %396 = math.tanh %358 : vector<8x128xf32>
    %397 = arith.select %388, %396, %395 : vector<8x128xi1>, vector<8x128xf32>
    %398 = vector.extract_strided_slice %397 {offsets = [0, 0], sizes = [8, 32], strides = [1, 1]} : vector<8x128xf32> to vector<8x32xf32>
    %399 = vector.extract_strided_slice %397 {offsets = [0, 32], sizes = [8, 32], strides = [1, 1]} : vector<8x128xf32> to vector<8x32xf32>
    %400 = vector.extract_strided_slice %397 {offsets = [0, 64], sizes = [8, 32], strides = [1, 1]} : vector<8x128xf32> to vector<8x32xf32>
    %401 = vector.extract_strided_slice %397 {offsets = [0, 96], sizes = [8, 32], strides = [1, 1]} : vector<8x128xf32> to vector<8x32xf32>
    %402 = arith.mulf %399, %337 : vector<8x32xf32>
    %403 = arith.mulf %398, %400 : vector<8x32xf32>
    %404 = arith.addf %402, %403 : vector<8x32xf32>
    %405 = math.tanh %404 : vector<8x32xf32>
    %406 = arith.mulf %401, %405 : vector<8x32xf32>
    %407 = arith.index_cast %346 : i32 to index
    %c0_112 = arith.constant 0 : index
    %408 = vector.load %arg14[%407, %c0_112] : memref<64x32xf32, #tpu.memory_space<vmem>>, vector<8x32xf32>
    tpu.vector_store %arg14[%407, %c0_112], %382 {strides = array<i32>} : memref<64x32xf32, #tpu.memory_space<vmem>>, vector<8x32xf32>,
    %409 = arith.index_cast %349 : i32 to index
    %c0_113 = arith.constant 0 : index
    %410 = vector.load %arg15[%409, %c0_113] : memref<64x32xf32, #tpu.memory_space<vmem>>, vector<8x32xf32>
    tpu.vector_store %arg15[%409, %c0_113], %406 {strides = array<i32>} : memref<64x32xf32, #tpu.memory_space<vmem>>, vector<8x32xf32>,
    %411 = tpu.concatenate %382, %406 in 1 : vector<8x32xf32>, vector<8x32xf32> -> vector<8x64xf32>
    %c6_i32 = arith.constant 6 : i32
    %c8_i32_114 = arith.constant 8 : i32
    %412 = arith.muli %c6_i32, %c8_i32_114 : i32
    %413 = tpu.assume_multiple %412, 8 : i32
    %c7_i32_115 = arith.constant 7 : i32
    %414 = arith.subi %c7_i32_115, %c6_i32 : i32
    %c8_i32_116 = arith.constant 8 : i32
    %415 = arith.muli %414, %c8_i32_116 : i32
    %416 = tpu.assume_multiple %415, 8 : i32
    %cst_117 = arith.constant dense<0.000000e+00> : vector<8x256xf32>
    %417 = tpu.matmul %411, %7, %cst_117 {dimension_numbers = #tpu.dot_dimension_numbers<[1], [0], [0], [1], [0, 0, 1, 1], [], []>} : vector<8x64xf32>, vector<64x256xf32>, vector<8x256xf32> -> vector<8x256xf32>
    %418 = vector.extract_strided_slice %417 {offsets = [0, 0], sizes = [8, 128], strides = [1, 1]} : vector<8x256xf32> to vector<8x128xf32>
    %419 = arith.index_cast %413 : i32 to index
    %c0_118 = arith.constant 0 : index
    %420 = vector.load %arg16[%419, %c0_118] : memref<64x256xf32, #tpu.memory_space<vmem>>, vector<8x128xf32>
    %421 = arith.addf %418, %420 : vector<8x128xf32>
    %422 = vector.extract_strided_slice %417 {offsets = [0, 128], sizes = [8, 128], strides = [1, 1]} : vector<8x256xf32> to vector<8x128xf32>
    %423 = arith.index_cast %416 : i32 to index
    %c128_119 = arith.constant 128 : index
    %424 = vector.load %arg16[%423, %c128_119] : memref<64x256xf32, #tpu.memory_space<vmem>>, vector<8x128xf32>
    %425 = arith.addf %422, %424 : vector<8x128xf32>
    %426 = tpu.iota {dimensions = array<i32: 1>} : vector<8x128xi32>
    %c64_i32_120 = arith.constant 64 : i32
    %427 = vector.broadcast %c64_i32_120 : i32 to vector<8x128xi32>
    %428 = arith.cmpi sge, %426, %427 : vector<8x128xi32>
    %c96_i32_121 = arith.constant 96 : i32
    %429 = vector.broadcast %c96_i32_121 : i32 to vector<8x128xi32>
    %430 = arith.cmpi slt, %426, %429 : vector<8x128xi32>
    %431 = arith.andi %428, %430 : vector<8x128xi1>
    %cst_122 = arith.constant 5.000000e-01 : f32
    %432 = vector.broadcast %cst_122 : f32 to vector<8x128xf32>
    %433 = arith.mulf %432, %421 : vector<8x128xf32>
    %434 = math.tanh %433 : vector<8x128xf32>
    %cst_123 = arith.constant 1.000000e+00 : f32
    %435 = vector.broadcast %cst_123 : f32 to vector<8x128xf32>
    %436 = arith.addf %434, %435 : vector<8x128xf32>
    %cst_124 = arith.constant 5.000000e-01 : f32
    %437 = vector.broadcast %cst_124 : f32 to vector<8x128xf32>
    %438 = arith.mulf %437, %436 : vector<8x128xf32>
    %439 = math.tanh %421 : vector<8x128xf32>
    %440 = arith.select %431, %439, %438 : vector<8x128xi1>, vector<8x128xf32>
    %441 = vector.extract_strided_slice %440 {offsets = [0, 0], sizes = [8, 32], strides = [1, 1]} : vector<8x128xf32> to vector<8x32xf32>
    %442 = vector.extract_strided_slice %440 {offsets = [0, 32], sizes = [8, 32], strides = [1, 1]} : vector<8x128xf32> to vector<8x32xf32>
    %443 = vector.extract_strided_slice %440 {offsets = [0, 64], sizes = [8, 32], strides = [1, 1]} : vector<8x128xf32> to vector<8x32xf32>
    %444 = vector.extract_strided_slice %440 {offsets = [0, 96], sizes = [8, 32], strides = [1, 1]} : vector<8x128xf32> to vector<8x32xf32>
    %445 = arith.mulf %442, %380 : vector<8x32xf32>
    %446 = arith.mulf %441, %443 : vector<8x32xf32>
    %447 = arith.addf %445, %446 : vector<8x32xf32>
    %448 = math.tanh %447 : vector<8x32xf32>
    %449 = arith.mulf %444, %448 : vector<8x32xf32>
    %450 = tpu.iota {dimensions = array<i32: 1>} : vector<8x128xi32>
    %c64_i32_125 = arith.constant 64 : i32
    %451 = vector.broadcast %c64_i32_125 : i32 to vector<8x128xi32>
    %452 = arith.cmpi sge, %450, %451 : vector<8x128xi32>
    %c96_i32_126 = arith.constant 96 : i32
    %453 = vector.broadcast %c96_i32_126 : i32 to vector<8x128xi32>
    %454 = arith.cmpi slt, %450, %453 : vector<8x128xi32>
    %455 = arith.andi %452, %454 : vector<8x128xi1>
    %cst_127 = arith.constant 5.000000e-01 : f32
    %456 = vector.broadcast %cst_127 : f32 to vector<8x128xf32>
    %457 = arith.mulf %456, %425 : vector<8x128xf32>
    %458 = math.tanh %457 : vector<8x128xf32>
    %cst_128 = arith.constant 1.000000e+00 : f32
    %459 = vector.broadcast %cst_128 : f32 to vector<8x128xf32>
    %460 = arith.addf %458, %459 : vector<8x128xf32>
    %cst_129 = arith.constant 5.000000e-01 : f32
    %461 = vector.broadcast %cst_129 : f32 to vector<8x128xf32>
    %462 = arith.mulf %461, %460 : vector<8x128xf32>
    %463 = math.tanh %425 : vector<8x128xf32>
    %464 = arith.select %455, %463, %462 : vector<8x128xi1>, vector<8x128xf32>
    %465 = vector.extract_strided_slice %464 {offsets = [0, 0], sizes = [8, 32], strides = [1, 1]} : vector<8x128xf32> to vector<8x32xf32>
    %466 = vector.extract_strided_slice %464 {offsets = [0, 32], sizes = [8, 32], strides = [1, 1]} : vector<8x128xf32> to vector<8x32xf32>
    %467 = vector.extract_strided_slice %464 {offsets = [0, 64], sizes = [8, 32], strides = [1, 1]} : vector<8x128xf32> to vector<8x32xf32>
    %468 = vector.extract_strided_slice %464 {offsets = [0, 96], sizes = [8, 32], strides = [1, 1]} : vector<8x128xf32> to vector<8x32xf32>
    %469 = arith.mulf %466, %404 : vector<8x32xf32>
    %470 = arith.mulf %465, %467 : vector<8x32xf32>
    %471 = arith.addf %469, %470 : vector<8x32xf32>
    %472 = math.tanh %471 : vector<8x32xf32>
    %473 = arith.mulf %468, %472 : vector<8x32xf32>
    %474 = arith.index_cast %413 : i32 to index
    %c0_130 = arith.constant 0 : index
    %475 = vector.load %arg14[%474, %c0_130] : memref<64x32xf32, #tpu.memory_space<vmem>>, vector<8x32xf32>
    tpu.vector_store %arg14[%474, %c0_130], %449 {strides = array<i32>} : memref<64x32xf32, #tpu.memory_space<vmem>>, vector<8x32xf32>,
    %476 = arith.index_cast %416 : i32 to index
    %c0_131 = arith.constant 0 : index
    %477 = vector.load %arg15[%476, %c0_131] : memref<64x32xf32, #tpu.memory_space<vmem>>, vector<8x32xf32>
    tpu.vector_store %arg15[%476, %c0_131], %473 {strides = array<i32>} : memref<64x32xf32, #tpu.memory_space<vmem>>, vector<8x32xf32>,
    %478 = tpu.concatenate %449, %473 in 1 : vector<8x32xf32>, vector<8x32xf32> -> vector<8x64xf32>
    %c7_i32_132 = arith.constant 7 : i32
    %c8_i32_133 = arith.constant 8 : i32
    %479 = arith.muli %c7_i32_132, %c8_i32_133 : i32
    %480 = tpu.assume_multiple %479, 8 : i32
    %c7_i32_134 = arith.constant 7 : i32
    %481 = arith.subi %c7_i32_134, %c7_i32_132 : i32
    %c8_i32_135 = arith.constant 8 : i32
    %482 = arith.muli %481, %c8_i32_135 : i32
    %483 = tpu.assume_multiple %482, 8 : i32
    %cst_136 = arith.constant dense<0.000000e+00> : vector<8x256xf32>
    %484 = tpu.matmul %478, %7, %cst_136 {dimension_numbers = #tpu.dot_dimension_numbers<[1], [0], [0], [1], [0, 0, 1, 1], [], []>} : vector<8x64xf32>, vector<64x256xf32>, vector<8x256xf32> -> vector<8x256xf32>
    %485 = vector.extract_strided_slice %484 {offsets = [0, 0], sizes = [8, 128], strides = [1, 1]} : vector<8x256xf32> to vector<8x128xf32>
    %486 = arith.index_cast %480 : i32 to index
    %c0_137 = arith.constant 0 : index
    %487 = vector.load %arg16[%486, %c0_137] : memref<64x256xf32, #tpu.memory_space<vmem>>, vector<8x128xf32>
    %488 = arith.addf %485, %487 : vector<8x128xf32>
    %489 = vector.extract_strided_slice %484 {offsets = [0, 128], sizes = [8, 128], strides = [1, 1]} : vector<8x256xf32> to vector<8x128xf32>
    %490 = arith.index_cast %483 : i32 to index
    %c128_138 = arith.constant 128 : index
    %491 = vector.load %arg16[%490, %c128_138] : memref<64x256xf32, #tpu.memory_space<vmem>>, vector<8x128xf32>
    %492 = arith.addf %489, %491 : vector<8x128xf32>
    %493 = tpu.iota {dimensions = array<i32: 1>} : vector<8x128xi32>
    %c64_i32_139 = arith.constant 64 : i32
    %494 = vector.broadcast %c64_i32_139 : i32 to vector<8x128xi32>
    %495 = arith.cmpi sge, %493, %494 : vector<8x128xi32>
    %c96_i32_140 = arith.constant 96 : i32
    %496 = vector.broadcast %c96_i32_140 : i32 to vector<8x128xi32>
    %497 = arith.cmpi slt, %493, %496 : vector<8x128xi32>
    %498 = arith.andi %495, %497 : vector<8x128xi1>
    %cst_141 = arith.constant 5.000000e-01 : f32
    %499 = vector.broadcast %cst_141 : f32 to vector<8x128xf32>
    %500 = arith.mulf %499, %488 : vector<8x128xf32>
    %501 = math.tanh %500 : vector<8x128xf32>
    %cst_142 = arith.constant 1.000000e+00 : f32
    %502 = vector.broadcast %cst_142 : f32 to vector<8x128xf32>
    %503 = arith.addf %501, %502 : vector<8x128xf32>
    %cst_143 = arith.constant 5.000000e-01 : f32
    %504 = vector.broadcast %cst_143 : f32 to vector<8x128xf32>
    %505 = arith.mulf %504, %503 : vector<8x128xf32>
    %506 = math.tanh %488 : vector<8x128xf32>
    %507 = arith.select %498, %506, %505 : vector<8x128xi1>, vector<8x128xf32>
    %508 = vector.extract_strided_slice %507 {offsets = [0, 0], sizes = [8, 32], strides = [1, 1]} : vector<8x128xf32> to vector<8x32xf32>
    %509 = vector.extract_strided_slice %507 {offsets = [0, 32], sizes = [8, 32], strides = [1, 1]} : vector<8x128xf32> to vector<8x32xf32>
    %510 = vector.extract_strided_slice %507 {offsets = [0, 64], sizes = [8, 32], strides = [1, 1]} : vector<8x128xf32> to vector<8x32xf32>
    %511 = vector.extract_strided_slice %507 {offsets = [0, 96], sizes = [8, 32], strides = [1, 1]} : vector<8x128xf32> to vector<8x32xf32>
    %512 = arith.mulf %509, %447 : vector<8x32xf32>
    %513 = arith.mulf %508, %510 : vector<8x32xf32>
    %514 = arith.addf %512, %513 : vector<8x32xf32>
    %515 = math.tanh %514 : vector<8x32xf32>
    %516 = arith.mulf %511, %515 : vector<8x32xf32>
    %517 = tpu.iota {dimensions = array<i32: 1>} : vector<8x128xi32>
    %c64_i32_144 = arith.constant 64 : i32
    %518 = vector.broadcast %c64_i32_144 : i32 to vector<8x128xi32>
    %519 = arith.cmpi sge, %517, %518 : vector<8x128xi32>
    %c96_i32_145 = arith.constant 96 : i32
    %520 = vector.broadcast %c96_i32_145 : i32 to vector<8x128xi32>
    %521 = arith.cmpi slt, %517, %520 : vector<8x128xi32>
    %522 = arith.andi %519, %521 : vector<8x128xi1>
    %cst_146 = arith.constant 5.000000e-01 : f32
    %523 = vector.broadcast %cst_146 : f32 to vector<8x128xf32>
    %524 = arith.mulf %523, %492 : vector<8x128xf32>
    %525 = math.tanh %524 : vector<8x128xf32>
    %cst_147 = arith.constant 1.000000e+00 : f32
    %526 = vector.broadcast %cst_147 : f32 to vector<8x128xf32>
    %527 = arith.addf %525, %526 : vector<8x128xf32>
    %cst_148 = arith.constant 5.000000e-01 : f32
    %528 = vector.broadcast %cst_148 : f32 to vector<8x128xf32>
    %529 = arith.mulf %528, %527 : vector<8x128xf32>
    %530 = math.tanh %492 : vector<8x128xf32>
    %531 = arith.select %522, %530, %529 : vector<8x128xi1>, vector<8x128xf32>
    %532 = vector.extract_strided_slice %531 {offsets = [0, 0], sizes = [8, 32], strides = [1, 1]} : vector<8x128xf32> to vector<8x32xf32>
    %533 = vector.extract_strided_slice %531 {offsets = [0, 32], sizes = [8, 32], strides = [1, 1]} : vector<8x128xf32> to vector<8x32xf32>
    %534 = vector.extract_strided_slice %531 {offsets = [0, 64], sizes = [8, 32], strides = [1, 1]} : vector<8x128xf32> to vector<8x32xf32>
    %535 = vector.extract_strided_slice %531 {offsets = [0, 96], sizes = [8, 32], strides = [1, 1]} : vector<8x128xf32> to vector<8x32xf32>
    %536 = arith.mulf %533, %471 : vector<8x32xf32>
    %537 = arith.mulf %532, %534 : vector<8x32xf32>
    %538 = arith.addf %536, %537 : vector<8x32xf32>
    %539 = math.tanh %538 : vector<8x32xf32>
    %540 = arith.mulf %535, %539 : vector<8x32xf32>
    %541 = arith.index_cast %480 : i32 to index
    %c0_149 = arith.constant 0 : index
    %542 = vector.load %arg14[%541, %c0_149] : memref<64x32xf32, #tpu.memory_space<vmem>>, vector<8x32xf32>
    tpu.vector_store %arg14[%541, %c0_149], %516 {strides = array<i32>} : memref<64x32xf32, #tpu.memory_space<vmem>>, vector<8x32xf32>,
    %543 = arith.index_cast %483 : i32 to index
    %c0_150 = arith.constant 0 : index
    %544 = vector.load %arg15[%543, %c0_150] : memref<64x32xf32, #tpu.memory_space<vmem>>, vector<8x32xf32>
    tpu.vector_store %arg15[%543, %c0_150], %540 {strides = array<i32>} : memref<64x32xf32, #tpu.memory_space<vmem>>, vector<8x32xf32>,
    %545 = tpu.concatenate %516, %540 in 1 : vector<8x32xf32>, vector<8x32xf32> -> vector<8x64xf32>
    %c8_i32_151 = arith.constant 8 : i32
    %c0_152 = arith.constant 0 : index
    %c0_153 = arith.constant 0 : index
    %546 = vector.load %arg14[%c0_152, %c0_153] : memref<64x32xf32, #tpu.memory_space<vmem>>, vector<64x32xf32>
    %c0_154 = arith.constant 0 : index
    %c0_155 = arith.constant 0 : index
    %547 = vector.load %arg4[%c0_154, %c0_155] : memref<64x256xf32, #tpu.memory_space<vmem>>, vector<32x256xf32>
    %cst_156 = arith.constant dense<0.000000e+00> : vector<64x256xf32>
    %548 = tpu.matmul %546, %547, %cst_156 {dimension_numbers = #tpu.dot_dimension_numbers<[1], [0], [0], [1], [0, 0, 1, 1], [], []>} : vector<64x32xf32>, vector<32x256xf32>, vector<64x256xf32> -> vector<64x256xf32>
    %c0_157 = arith.constant 0 : index
    %c0_158 = arith.constant 0 : index
    %549 = vector.load %arg15[%c0_157, %c0_158] : memref<64x32xf32, #tpu.memory_space<vmem>>, vector<64x32xf32>
    %c32 = arith.constant 32 : index
    %c0_159 = arith.constant 0 : index
    %550 = vector.load %arg4[%c32, %c0_159] : memref<64x256xf32, #tpu.memory_space<vmem>>, vector<32x256xf32>
    %cst_160 = arith.constant dense<0.000000e+00> : vector<64x256xf32>
    %551 = tpu.matmul %549, %550, %cst_160 {dimension_numbers = #tpu.dot_dimension_numbers<[1], [0], [0], [1], [0, 0, 1, 1], [], []>} : vector<64x32xf32>, vector<32x256xf32>, vector<64x256xf32> -> vector<64x256xf32>
    %552 = arith.addf %548, %551 : vector<64x256xf32>
    %c0_161 = arith.constant 0 : index
    %c0_162 = arith.constant 0 : index
    %553 = vector.load %arg6[%c0_161, %c0_162] : memref<1x256xf32, #tpu.memory_space<vmem>>, vector<1x256xf32>
    %554 = vector.broadcast %553 : vector<1x256xf32> to vector<64x256xf32>
    %555 = arith.addf %552, %554 : vector<64x256xf32>
    %c0_163 = arith.constant 0 : index
    %c0_164 = arith.constant 0 : index
    %556 = vector.load %arg16[%c0_163, %c0_164] : memref<64x256xf32, #tpu.memory_space<vmem>>, vector<64x256xf32>
    tpu.vector_store %arg16[%c0_163, %c0_164], %555 {strides = array<i32>} : memref<64x256xf32, #tpu.memory_space<vmem>>, vector<64x256xf32>,
    %c0_165 = arith.constant 0 : index
    %c0_166 = arith.constant 0 : index
    %557 = vector.load %arg5[%c0_165, %c0_166] : memref<64x256xf32, #tpu.memory_space<vmem>>, vector<64x256xf32>
    %cst_167 = arith.constant 0.000000e+00 : f32
    %558 = vector.broadcast %cst_167 : f32 to vector<8x64xf32>
    %cst_168 = arith.constant 0.000000e+00 : f32
    %559 = vector.broadcast %cst_168 : f32 to vector<8x32xf32>
    %c0_i32_169 = arith.constant 0 : i32
    %c8_i32_170 = arith.constant 8 : i32
    %560 = arith.muli %c0_i32_169, %c8_i32_170 : i32
    %561 = tpu.assume_multiple %560, 8 : i32
    %c7_i32_171 = arith.constant 7 : i32
    %562 = arith.subi %c7_i32_171, %c0_i32_169 : i32
    %c8_i32_172 = arith.constant 8 : i32
    %563 = arith.muli %562, %c8_i32_172 : i32
    %564 = tpu.assume_multiple %563, 8 : i32
    %cst_173 = arith.constant dense<0.000000e+00> : vector<8x256xf32>
    %565 = tpu.matmul %558, %557, %cst_173 {dimension_numbers = #tpu.dot_dimension_numbers<[1], [0], [0], [1], [0, 0, 1, 1], [], []>} : vector<8x64xf32>, vector<64x256xf32>, vector<8x256xf32> -> vector<8x256xf32>
    %566 = vector.extract_strided_slice %565 {offsets = [0, 0], sizes = [8, 128], strides = [1, 1]} : vector<8x256xf32> to vector<8x128xf32>
    %567 = arith.index_cast %561 : i32 to index
    %c0_174 = arith.constant 0 : index
    %568 = vector.load %arg16[%567, %c0_174] : memref<64x256xf32, #tpu.memory_space<vmem>>, vector<8x128xf32>
    %569 = arith.addf %566, %568 : vector<8x128xf32>
    %570 = vector.extract_strided_slice %565 {offsets = [0, 128], sizes = [8, 128], strides = [1, 1]} : vector<8x256xf32> to vector<8x128xf32>
    %571 = arith.index_cast %564 : i32 to index
    %c128_175 = arith.constant 128 : index
    %572 = vector.load %arg16[%571, %c128_175] : memref<64x256xf32, #tpu.memory_space<vmem>>, vector<8x128xf32>
    %573 = arith.addf %570, %572 : vector<8x128xf32>
    %574 = tpu.iota {dimensions = array<i32: 1>} : vector<8x128xi32>
    %c64_i32_176 = arith.constant 64 : i32
    %575 = vector.broadcast %c64_i32_176 : i32 to vector<8x128xi32>
    %576 = arith.cmpi sge, %574, %575 : vector<8x128xi32>
    %c96_i32_177 = arith.constant 96 : i32
    %577 = vector.broadcast %c96_i32_177 : i32 to vector<8x128xi32>
    %578 = arith.cmpi slt, %574, %577 : vector<8x128xi32>
    %579 = arith.andi %576, %578 : vector<8x128xi1>
    %cst_178 = arith.constant 5.000000e-01 : f32
    %580 = vector.broadcast %cst_178 : f32 to vector<8x128xf32>
    %581 = arith.mulf %580, %569 : vector<8x128xf32>
    %582 = math.tanh %581 : vector<8x128xf32>
    %cst_179 = arith.constant 1.000000e+00 : f32
    %583 = vector.broadcast %cst_179 : f32 to vector<8x128xf32>
    %584 = arith.addf %582, %583 : vector<8x128xf32>
    %cst_180 = arith.constant 5.000000e-01 : f32
    %585 = vector.broadcast %cst_180 : f32 to vector<8x128xf32>
    %586 = arith.mulf %585, %584 : vector<8x128xf32>
    %587 = math.tanh %569 : vector<8x128xf32>
    %588 = arith.select %579, %587, %586 : vector<8x128xi1>, vector<8x128xf32>
    %589 = vector.extract_strided_slice %588 {offsets = [0, 0], sizes = [8, 32], strides = [1, 1]} : vector<8x128xf32> to vector<8x32xf32>
    %590 = vector.extract_strided_slice %588 {offsets = [0, 32], sizes = [8, 32], strides = [1, 1]} : vector<8x128xf32> to vector<8x32xf32>
    %591 = vector.extract_strided_slice %588 {offsets = [0, 64], sizes = [8, 32], strides = [1, 1]} : vector<8x128xf32> to vector<8x32xf32>
    %592 = vector.extract_strided_slice %588 {offsets = [0, 96], sizes = [8, 32], strides = [1, 1]} : vector<8x128xf32> to vector<8x32xf32>
    %593 = arith.mulf %590, %559 : vector<8x32xf32>
    %594 = arith.mulf %589, %591 : vector<8x32xf32>
    %595 = arith.addf %593, %594 : vector<8x32xf32>
    %596 = math.tanh %595 : vector<8x32xf32>
    %597 = arith.mulf %592, %596 : vector<8x32xf32>
    %598 = tpu.iota {dimensions = array<i32: 1>} : vector<8x128xi32>
    %c64_i32_181 = arith.constant 64 : i32
    %599 = vector.broadcast %c64_i32_181 : i32 to vector<8x128xi32>
    %600 = arith.cmpi sge, %598, %599 : vector<8x128xi32>
    %c96_i32_182 = arith.constant 96 : i32
    %601 = vector.broadcast %c96_i32_182 : i32 to vector<8x128xi32>
    %602 = arith.cmpi slt, %598, %601 : vector<8x128xi32>
    %603 = arith.andi %600, %602 : vector<8x128xi1>
    %cst_183 = arith.constant 5.000000e-01 : f32
    %604 = vector.broadcast %cst_183 : f32 to vector<8x128xf32>
    %605 = arith.mulf %604, %573 : vector<8x128xf32>
    %606 = math.tanh %605 : vector<8x128xf32>
    %cst_184 = arith.constant 1.000000e+00 : f32
    %607 = vector.broadcast %cst_184 : f32 to vector<8x128xf32>
    %608 = arith.addf %606, %607 : vector<8x128xf32>
    %cst_185 = arith.constant 5.000000e-01 : f32
    %609 = vector.broadcast %cst_185 : f32 to vector<8x128xf32>
    %610 = arith.mulf %609, %608 : vector<8x128xf32>
    %611 = math.tanh %573 : vector<8x128xf32>
    %612 = arith.select %603, %611, %610 : vector<8x128xi1>, vector<8x128xf32>
    %613 = vector.extract_strided_slice %612 {offsets = [0, 0], sizes = [8, 32], strides = [1, 1]} : vector<8x128xf32> to vector<8x32xf32>
    %614 = vector.extract_strided_slice %612 {offsets = [0, 32], sizes = [8, 32], strides = [1, 1]} : vector<8x128xf32> to vector<8x32xf32>
    %615 = vector.extract_strided_slice %612 {offsets = [0, 64], sizes = [8, 32], strides = [1, 1]} : vector<8x128xf32> to vector<8x32xf32>
    %616 = vector.extract_strided_slice %612 {offsets = [0, 96], sizes = [8, 32], strides = [1, 1]} : vector<8x128xf32> to vector<8x32xf32>
    %617 = arith.mulf %614, %559 : vector<8x32xf32>
    %618 = arith.mulf %613, %615 : vector<8x32xf32>
    %619 = arith.addf %617, %618 : vector<8x32xf32>
    %620 = math.tanh %619 : vector<8x32xf32>
    %621 = arith.mulf %616, %620 : vector<8x32xf32>
    %622 = arith.index_cast %561 : i32 to index
    %c0_186 = arith.constant 0 : index
    %623 = vector.load %arg14[%622, %c0_186] : memref<64x32xf32, #tpu.memory_space<vmem>>, vector<8x32xf32>
    tpu.vector_store %arg14[%622, %c0_186], %597 {strides = array<i32>} : memref<64x32xf32, #tpu.memory_space<vmem>>, vector<8x32xf32>,
    %624 = arith.index_cast %564 : i32 to index
    %c0_187 = arith.constant 0 : index
    %625 = vector.load %arg15[%624, %c0_187] : memref<64x32xf32, #tpu.memory_space<vmem>>, vector<8x32xf32>
    tpu.vector_store %arg15[%624, %c0_187], %621 {strides = array<i32>} : memref<64x32xf32, #tpu.memory_space<vmem>>, vector<8x32xf32>,
    %626 = tpu.concatenate %597, %621 in 1 : vector<8x32xf32>, vector<8x32xf32> -> vector<8x64xf32>
    %c1_i32_188 = arith.constant 1 : i32
    %c8_i32_189 = arith.constant 8 : i32
    %627 = arith.muli %c1_i32_188, %c8_i32_189 : i32
    %628 = tpu.assume_multiple %627, 8 : i32
    %c7_i32_190 = arith.constant 7 : i32
    %629 = arith.subi %c7_i32_190, %c1_i32_188 : i32
    %c8_i32_191 = arith.constant 8 : i32
    %630 = arith.muli %629, %c8_i32_191 : i32
    %631 = tpu.assume_multiple %630, 8 : i32
    %cst_192 = arith.constant dense<0.000000e+00> : vector<8x256xf32>
    %632 = tpu.matmul %626, %557, %cst_192 {dimension_numbers = #tpu.dot_dimension_numbers<[1], [0], [0], [1], [0, 0, 1, 1], [], []>} : vector<8x64xf32>, vector<64x256xf32>, vector<8x256xf32> -> vector<8x256xf32>
    %633 = vector.extract_strided_slice %632 {offsets = [0, 0], sizes = [8, 128], strides = [1, 1]} : vector<8x256xf32> to vector<8x128xf32>
    %634 = arith.index_cast %628 : i32 to index
    %c0_193 = arith.constant 0 : index
    %635 = vector.load %arg16[%634, %c0_193] : memref<64x256xf32, #tpu.memory_space<vmem>>, vector<8x128xf32>
    %636 = arith.addf %633, %635 : vector<8x128xf32>
    %637 = vector.extract_strided_slice %632 {offsets = [0, 128], sizes = [8, 128], strides = [1, 1]} : vector<8x256xf32> to vector<8x128xf32>
    %638 = arith.index_cast %631 : i32 to index
    %c128_194 = arith.constant 128 : index
    %639 = vector.load %arg16[%638, %c128_194] : memref<64x256xf32, #tpu.memory_space<vmem>>, vector<8x128xf32>
    %640 = arith.addf %637, %639 : vector<8x128xf32>
    %641 = tpu.iota {dimensions = array<i32: 1>} : vector<8x128xi32>
    %c64_i32_195 = arith.constant 64 : i32
    %642 = vector.broadcast %c64_i32_195 : i32 to vector<8x128xi32>
    %643 = arith.cmpi sge, %641, %642 : vector<8x128xi32>
    %c96_i32_196 = arith.constant 96 : i32
    %644 = vector.broadcast %c96_i32_196 : i32 to vector<8x128xi32>
    %645 = arith.cmpi slt, %641, %644 : vector<8x128xi32>
    %646 = arith.andi %643, %645 : vector<8x128xi1>
    %cst_197 = arith.constant 5.000000e-01 : f32
    %647 = vector.broadcast %cst_197 : f32 to vector<8x128xf32>
    %648 = arith.mulf %647, %636 : vector<8x128xf32>
    %649 = math.tanh %648 : vector<8x128xf32>
    %cst_198 = arith.constant 1.000000e+00 : f32
    %650 = vector.broadcast %cst_198 : f32 to vector<8x128xf32>
    %651 = arith.addf %649, %650 : vector<8x128xf32>
    %cst_199 = arith.constant 5.000000e-01 : f32
    %652 = vector.broadcast %cst_199 : f32 to vector<8x128xf32>
    %653 = arith.mulf %652, %651 : vector<8x128xf32>
    %654 = math.tanh %636 : vector<8x128xf32>
    %655 = arith.select %646, %654, %653 : vector<8x128xi1>, vector<8x128xf32>
    %656 = vector.extract_strided_slice %655 {offsets = [0, 0], sizes = [8, 32], strides = [1, 1]} : vector<8x128xf32> to vector<8x32xf32>
    %657 = vector.extract_strided_slice %655 {offsets = [0, 32], sizes = [8, 32], strides = [1, 1]} : vector<8x128xf32> to vector<8x32xf32>
    %658 = vector.extract_strided_slice %655 {offsets = [0, 64], sizes = [8, 32], strides = [1, 1]} : vector<8x128xf32> to vector<8x32xf32>
    %659 = vector.extract_strided_slice %655 {offsets = [0, 96], sizes = [8, 32], strides = [1, 1]} : vector<8x128xf32> to vector<8x32xf32>
    %660 = arith.mulf %657, %595 : vector<8x32xf32>
    %661 = arith.mulf %656, %658 : vector<8x32xf32>
    %662 = arith.addf %660, %661 : vector<8x32xf32>
    %663 = math.tanh %662 : vector<8x32xf32>
    %664 = arith.mulf %659, %663 : vector<8x32xf32>
    %665 = tpu.iota {dimensions = array<i32: 1>} : vector<8x128xi32>
    %c64_i32_200 = arith.constant 64 : i32
    %666 = vector.broadcast %c64_i32_200 : i32 to vector<8x128xi32>
    %667 = arith.cmpi sge, %665, %666 : vector<8x128xi32>
    %c96_i32_201 = arith.constant 96 : i32
    %668 = vector.broadcast %c96_i32_201 : i32 to vector<8x128xi32>
    %669 = arith.cmpi slt, %665, %668 : vector<8x128xi32>
    %670 = arith.andi %667, %669 : vector<8x128xi1>
    %cst_202 = arith.constant 5.000000e-01 : f32
    %671 = vector.broadcast %cst_202 : f32 to vector<8x128xf32>
    %672 = arith.mulf %671, %640 : vector<8x128xf32>
    %673 = math.tanh %672 : vector<8x128xf32>
    %cst_203 = arith.constant 1.000000e+00 : f32
    %674 = vector.broadcast %cst_203 : f32 to vector<8x128xf32>
    %675 = arith.addf %673, %674 : vector<8x128xf32>
    %cst_204 = arith.constant 5.000000e-01 : f32
    %676 = vector.broadcast %cst_204 : f32 to vector<8x128xf32>
    %677 = arith.mulf %676, %675 : vector<8x128xf32>
    %678 = math.tanh %640 : vector<8x128xf32>
    %679 = arith.select %670, %678, %677 : vector<8x128xi1>, vector<8x128xf32>
    %680 = vector.extract_strided_slice %679 {offsets = [0, 0], sizes = [8, 32], strides = [1, 1]} : vector<8x128xf32> to vector<8x32xf32>
    %681 = vector.extract_strided_slice %679 {offsets = [0, 32], sizes = [8, 32], strides = [1, 1]} : vector<8x128xf32> to vector<8x32xf32>
    %682 = vector.extract_strided_slice %679 {offsets = [0, 64], sizes = [8, 32], strides = [1, 1]} : vector<8x128xf32> to vector<8x32xf32>
    %683 = vector.extract_strided_slice %679 {offsets = [0, 96], sizes = [8, 32], strides = [1, 1]} : vector<8x128xf32> to vector<8x32xf32>
    %684 = arith.mulf %681, %619 : vector<8x32xf32>
    %685 = arith.mulf %680, %682 : vector<8x32xf32>
    %686 = arith.addf %684, %685 : vector<8x32xf32>
    %687 = math.tanh %686 : vector<8x32xf32>
    %688 = arith.mulf %683, %687 : vector<8x32xf32>
    %689 = arith.index_cast %628 : i32 to index
    %c0_205 = arith.constant 0 : index
    %690 = vector.load %arg14[%689, %c0_205] : memref<64x32xf32, #tpu.memory_space<vmem>>, vector<8x32xf32>
    tpu.vector_store %arg14[%689, %c0_205], %664 {strides = array<i32>} : memref<64x32xf32, #tpu.memory_space<vmem>>, vector<8x32xf32>,
    %691 = arith.index_cast %631 : i32 to index
    %c0_206 = arith.constant 0 : index
    %692 = vector.load %arg15[%691, %c0_206] : memref<64x32xf32, #tpu.memory_space<vmem>>, vector<8x32xf32>
    tpu.vector_store %arg15[%691, %c0_206], %688 {strides = array<i32>} : memref<64x32xf32, #tpu.memory_space<vmem>>, vector<8x32xf32>,
    %693 = tpu.concatenate %664, %688 in 1 : vector<8x32xf32>, vector<8x32xf32> -> vector<8x64xf32>
    %c2_i32_207 = arith.constant 2 : i32
    %c8_i32_208 = arith.constant 8 : i32
    %694 = arith.muli %c2_i32_207, %c8_i32_208 : i32
    %695 = tpu.assume_multiple %694, 8 : i32
    %c7_i32_209 = arith.constant 7 : i32
    %696 = arith.subi %c7_i32_209, %c2_i32_207 : i32
    %c8_i32_210 = arith.constant 8 : i32
    %697 = arith.muli %696, %c8_i32_210 : i32
    %698 = tpu.assume_multiple %697, 8 : i32
    %cst_211 = arith.constant dense<0.000000e+00> : vector<8x256xf32>
    %699 = tpu.matmul %693, %557, %cst_211 {dimension_numbers = #tpu.dot_dimension_numbers<[1], [0], [0], [1], [0, 0, 1, 1], [], []>} : vector<8x64xf32>, vector<64x256xf32>, vector<8x256xf32> -> vector<8x256xf32>
    %700 = vector.extract_strided_slice %699 {offsets = [0, 0], sizes = [8, 128], strides = [1, 1]} : vector<8x256xf32> to vector<8x128xf32>
    %701 = arith.index_cast %695 : i32 to index
    %c0_212 = arith.constant 0 : index
    %702 = vector.load %arg16[%701, %c0_212] : memref<64x256xf32, #tpu.memory_space<vmem>>, vector<8x128xf32>
    %703 = arith.addf %700, %702 : vector<8x128xf32>
    %704 = vector.extract_strided_slice %699 {offsets = [0, 128], sizes = [8, 128], strides = [1, 1]} : vector<8x256xf32> to vector<8x128xf32>
    %705 = arith.index_cast %698 : i32 to index
    %c128_213 = arith.constant 128 : index
    %706 = vector.load %arg16[%705, %c128_213] : memref<64x256xf32, #tpu.memory_space<vmem>>, vector<8x128xf32>
    %707 = arith.addf %704, %706 : vector<8x128xf32>
    %708 = tpu.iota {dimensions = array<i32: 1>} : vector<8x128xi32>
    %c64_i32_214 = arith.constant 64 : i32
    %709 = vector.broadcast %c64_i32_214 : i32 to vector<8x128xi32>
    %710 = arith.cmpi sge, %708, %709 : vector<8x128xi32>
    %c96_i32_215 = arith.constant 96 : i32
    %711 = vector.broadcast %c96_i32_215 : i32 to vector<8x128xi32>
    %712 = arith.cmpi slt, %708, %711 : vector<8x128xi32>
    %713 = arith.andi %710, %712 : vector<8x128xi1>
    %cst_216 = arith.constant 5.000000e-01 : f32
    %714 = vector.broadcast %cst_216 : f32 to vector<8x128xf32>
    %715 = arith.mulf %714, %703 : vector<8x128xf32>
    %716 = math.tanh %715 : vector<8x128xf32>
    %cst_217 = arith.constant 1.000000e+00 : f32
    %717 = vector.broadcast %cst_217 : f32 to vector<8x128xf32>
    %718 = arith.addf %716, %717 : vector<8x128xf32>
    %cst_218 = arith.constant 5.000000e-01 : f32
    %719 = vector.broadcast %cst_218 : f32 to vector<8x128xf32>
    %720 = arith.mulf %719, %718 : vector<8x128xf32>
    %721 = math.tanh %703 : vector<8x128xf32>
    %722 = arith.select %713, %721, %720 : vector<8x128xi1>, vector<8x128xf32>
    %723 = vector.extract_strided_slice %722 {offsets = [0, 0], sizes = [8, 32], strides = [1, 1]} : vector<8x128xf32> to vector<8x32xf32>
    %724 = vector.extract_strided_slice %722 {offsets = [0, 32], sizes = [8, 32], strides = [1, 1]} : vector<8x128xf32> to vector<8x32xf32>
    %725 = vector.extract_strided_slice %722 {offsets = [0, 64], sizes = [8, 32], strides = [1, 1]} : vector<8x128xf32> to vector<8x32xf32>
    %726 = vector.extract_strided_slice %722 {offsets = [0, 96], sizes = [8, 32], strides = [1, 1]} : vector<8x128xf32> to vector<8x32xf32>
    %727 = arith.mulf %724, %662 : vector<8x32xf32>
    %728 = arith.mulf %723, %725 : vector<8x32xf32>
    %729 = arith.addf %727, %728 : vector<8x32xf32>
    %730 = math.tanh %729 : vector<8x32xf32>
    %731 = arith.mulf %726, %730 : vector<8x32xf32>
    %732 = tpu.iota {dimensions = array<i32: 1>} : vector<8x128xi32>
    %c64_i32_219 = arith.constant 64 : i32
    %733 = vector.broadcast %c64_i32_219 : i32 to vector<8x128xi32>
    %734 = arith.cmpi sge, %732, %733 : vector<8x128xi32>
    %c96_i32_220 = arith.constant 96 : i32
    %735 = vector.broadcast %c96_i32_220 : i32 to vector<8x128xi32>
    %736 = arith.cmpi slt, %732, %735 : vector<8x128xi32>
    %737 = arith.andi %734, %736 : vector<8x128xi1>
    %cst_221 = arith.constant 5.000000e-01 : f32
    %738 = vector.broadcast %cst_221 : f32 to vector<8x128xf32>
    %739 = arith.mulf %738, %707 : vector<8x128xf32>
    %740 = math.tanh %739 : vector<8x128xf32>
    %cst_222 = arith.constant 1.000000e+00 : f32
    %741 = vector.broadcast %cst_222 : f32 to vector<8x128xf32>
    %742 = arith.addf %740, %741 : vector<8x128xf32>
    %cst_223 = arith.constant 5.000000e-01 : f32
    %743 = vector.broadcast %cst_223 : f32 to vector<8x128xf32>
    %744 = arith.mulf %743, %742 : vector<8x128xf32>
    %745 = math.tanh %707 : vector<8x128xf32>
    %746 = arith.select %737, %745, %744 : vector<8x128xi1>, vector<8x128xf32>
    %747 = vector.extract_strided_slice %746 {offsets = [0, 0], sizes = [8, 32], strides = [1, 1]} : vector<8x128xf32> to vector<8x32xf32>
    %748 = vector.extract_strided_slice %746 {offsets = [0, 32], sizes = [8, 32], strides = [1, 1]} : vector<8x128xf32> to vector<8x32xf32>
    %749 = vector.extract_strided_slice %746 {offsets = [0, 64], sizes = [8, 32], strides = [1, 1]} : vector<8x128xf32> to vector<8x32xf32>
    %750 = vector.extract_strided_slice %746 {offsets = [0, 96], sizes = [8, 32], strides = [1, 1]} : vector<8x128xf32> to vector<8x32xf32>
    %751 = arith.mulf %748, %686 : vector<8x32xf32>
    %752 = arith.mulf %747, %749 : vector<8x32xf32>
    %753 = arith.addf %751, %752 : vector<8x32xf32>
    %754 = math.tanh %753 : vector<8x32xf32>
    %755 = arith.mulf %750, %754 : vector<8x32xf32>
    %756 = arith.index_cast %695 : i32 to index
    %c0_224 = arith.constant 0 : index
    %757 = vector.load %arg14[%756, %c0_224] : memref<64x32xf32, #tpu.memory_space<vmem>>, vector<8x32xf32>
    tpu.vector_store %arg14[%756, %c0_224], %731 {strides = array<i32>} : memref<64x32xf32, #tpu.memory_space<vmem>>, vector<8x32xf32>,
    %758 = arith.index_cast %698 : i32 to index
    %c0_225 = arith.constant 0 : index
    %759 = vector.load %arg15[%758, %c0_225] : memref<64x32xf32, #tpu.memory_space<vmem>>, vector<8x32xf32>
    tpu.vector_store %arg15[%758, %c0_225], %755 {strides = array<i32>} : memref<64x32xf32, #tpu.memory_space<vmem>>, vector<8x32xf32>,
    %760 = tpu.concatenate %731, %755 in 1 : vector<8x32xf32>, vector<8x32xf32> -> vector<8x64xf32>
    %c3_i32_226 = arith.constant 3 : i32
    %c8_i32_227 = arith.constant 8 : i32
    %761 = arith.muli %c3_i32_226, %c8_i32_227 : i32
    %762 = tpu.assume_multiple %761, 8 : i32
    %c7_i32_228 = arith.constant 7 : i32
    %763 = arith.subi %c7_i32_228, %c3_i32_226 : i32
    %c8_i32_229 = arith.constant 8 : i32
    %764 = arith.muli %763, %c8_i32_229 : i32
    %765 = tpu.assume_multiple %764, 8 : i32
    %cst_230 = arith.constant dense<0.000000e+00> : vector<8x256xf32>
    %766 = tpu.matmul %760, %557, %cst_230 {dimension_numbers = #tpu.dot_dimension_numbers<[1], [0], [0], [1], [0, 0, 1, 1], [], []>} : vector<8x64xf32>, vector<64x256xf32>, vector<8x256xf32> -> vector<8x256xf32>
    %767 = vector.extract_strided_slice %766 {offsets = [0, 0], sizes = [8, 128], strides = [1, 1]} : vector<8x256xf32> to vector<8x128xf32>
    %768 = arith.index_cast %762 : i32 to index
    %c0_231 = arith.constant 0 : index
    %769 = vector.load %arg16[%768, %c0_231] : memref<64x256xf32, #tpu.memory_space<vmem>>, vector<8x128xf32>
    %770 = arith.addf %767, %769 : vector<8x128xf32>
    %771 = vector.extract_strided_slice %766 {offsets = [0, 128], sizes = [8, 128], strides = [1, 1]} : vector<8x256xf32> to vector<8x128xf32>
    %772 = arith.index_cast %765 : i32 to index
    %c128_232 = arith.constant 128 : index
    %773 = vector.load %arg16[%772, %c128_232] : memref<64x256xf32, #tpu.memory_space<vmem>>, vector<8x128xf32>
    %774 = arith.addf %771, %773 : vector<8x128xf32>
    %775 = tpu.iota {dimensions = array<i32: 1>} : vector<8x128xi32>
    %c64_i32_233 = arith.constant 64 : i32
    %776 = vector.broadcast %c64_i32_233 : i32 to vector<8x128xi32>
    %777 = arith.cmpi sge, %775, %776 : vector<8x128xi32>
    %c96_i32_234 = arith.constant 96 : i32
    %778 = vector.broadcast %c96_i32_234 : i32 to vector<8x128xi32>
    %779 = arith.cmpi slt, %775, %778 : vector<8x128xi32>
    %780 = arith.andi %777, %779 : vector<8x128xi1>
    %cst_235 = arith.constant 5.000000e-01 : f32
    %781 = vector.broadcast %cst_235 : f32 to vector<8x128xf32>
    %782 = arith.mulf %781, %770 : vector<8x128xf32>
    %783 = math.tanh %782 : vector<8x128xf32>
    %cst_236 = arith.constant 1.000000e+00 : f32
    %784 = vector.broadcast %cst_236 : f32 to vector<8x128xf32>
    %785 = arith.addf %783, %784 : vector<8x128xf32>
    %cst_237 = arith.constant 5.000000e-01 : f32
    %786 = vector.broadcast %cst_237 : f32 to vector<8x128xf32>
    %787 = arith.mulf %786, %785 : vector<8x128xf32>
    %788 = math.tanh %770 : vector<8x128xf32>
    %789 = arith.select %780, %788, %787 : vector<8x128xi1>, vector<8x128xf32>
    %790 = vector.extract_strided_slice %789 {offsets = [0, 0], sizes = [8, 32], strides = [1, 1]} : vector<8x128xf32> to vector<8x32xf32>
    %791 = vector.extract_strided_slice %789 {offsets = [0, 32], sizes = [8, 32], strides = [1, 1]} : vector<8x128xf32> to vector<8x32xf32>
    %792 = vector.extract_strided_slice %789 {offsets = [0, 64], sizes = [8, 32], strides = [1, 1]} : vector<8x128xf32> to vector<8x32xf32>
    %793 = vector.extract_strided_slice %789 {offsets = [0, 96], sizes = [8, 32], strides = [1, 1]} : vector<8x128xf32> to vector<8x32xf32>
    %794 = arith.mulf %791, %729 : vector<8x32xf32>
    %795 = arith.mulf %790, %792 : vector<8x32xf32>
    %796 = arith.addf %794, %795 : vector<8x32xf32>
    %797 = math.tanh %796 : vector<8x32xf32>
    %798 = arith.mulf %793, %797 : vector<8x32xf32>
    %799 = tpu.iota {dimensions = array<i32: 1>} : vector<8x128xi32>
    %c64_i32_238 = arith.constant 64 : i32
    %800 = vector.broadcast %c64_i32_238 : i32 to vector<8x128xi32>
    %801 = arith.cmpi sge, %799, %800 : vector<8x128xi32>
    %c96_i32_239 = arith.constant 96 : i32
    %802 = vector.broadcast %c96_i32_239 : i32 to vector<8x128xi32>
    %803 = arith.cmpi slt, %799, %802 : vector<8x128xi32>
    %804 = arith.andi %801, %803 : vector<8x128xi1>
    %cst_240 = arith.constant 5.000000e-01 : f32
    %805 = vector.broadcast %cst_240 : f32 to vector<8x128xf32>
    %806 = arith.mulf %805, %774 : vector<8x128xf32>
    %807 = math.tanh %806 : vector<8x128xf32>
    %cst_241 = arith.constant 1.000000e+00 : f32
    %808 = vector.broadcast %cst_241 : f32 to vector<8x128xf32>
    %809 = arith.addf %807, %808 : vector<8x128xf32>
    %cst_242 = arith.constant 5.000000e-01 : f32
    %810 = vector.broadcast %cst_242 : f32 to vector<8x128xf32>
    %811 = arith.mulf %810, %809 : vector<8x128xf32>
    %812 = math.tanh %774 : vector<8x128xf32>
    %813 = arith.select %804, %812, %811 : vector<8x128xi1>, vector<8x128xf32>
    %814 = vector.extract_strided_slice %813 {offsets = [0, 0], sizes = [8, 32], strides = [1, 1]} : vector<8x128xf32> to vector<8x32xf32>
    %815 = vector.extract_strided_slice %813 {offsets = [0, 32], sizes = [8, 32], strides = [1, 1]} : vector<8x128xf32> to vector<8x32xf32>
    %816 = vector.extract_strided_slice %813 {offsets = [0, 64], sizes = [8, 32], strides = [1, 1]} : vector<8x128xf32> to vector<8x32xf32>
    %817 = vector.extract_strided_slice %813 {offsets = [0, 96], sizes = [8, 32], strides = [1, 1]} : vector<8x128xf32> to vector<8x32xf32>
    %818 = arith.mulf %815, %753 : vector<8x32xf32>
    %819 = arith.mulf %814, %816 : vector<8x32xf32>
    %820 = arith.addf %818, %819 : vector<8x32xf32>
    %821 = math.tanh %820 : vector<8x32xf32>
    %822 = arith.mulf %817, %821 : vector<8x32xf32>
    %823 = arith.index_cast %762 : i32 to index
    %c0_243 = arith.constant 0 : index
    %824 = vector.load %arg14[%823, %c0_243] : memref<64x32xf32, #tpu.memory_space<vmem>>, vector<8x32xf32>
    tpu.vector_store %arg14[%823, %c0_243], %798 {strides = array<i32>} : memref<64x32xf32, #tpu.memory_space<vmem>>, vector<8x32xf32>,
    %825 = arith.index_cast %765 : i32 to index
    %c0_244 = arith.constant 0 : index
    %826 = vector.load %arg15[%825, %c0_244] : memref<64x32xf32, #tpu.memory_space<vmem>>, vector<8x32xf32>
    tpu.vector_store %arg15[%825, %c0_244], %822 {strides = array<i32>} : memref<64x32xf32, #tpu.memory_space<vmem>>, vector<8x32xf32>,
    %827 = tpu.concatenate %798, %822 in 1 : vector<8x32xf32>, vector<8x32xf32> -> vector<8x64xf32>
    %c4_i32_245 = arith.constant 4 : i32
    %c8_i32_246 = arith.constant 8 : i32
    %828 = arith.muli %c4_i32_245, %c8_i32_246 : i32
    %829 = tpu.assume_multiple %828, 8 : i32
    %c7_i32_247 = arith.constant 7 : i32
    %830 = arith.subi %c7_i32_247, %c4_i32_245 : i32
    %c8_i32_248 = arith.constant 8 : i32
    %831 = arith.muli %830, %c8_i32_248 : i32
    %832 = tpu.assume_multiple %831, 8 : i32
    %cst_249 = arith.constant dense<0.000000e+00> : vector<8x256xf32>
    %833 = tpu.matmul %827, %557, %cst_249 {dimension_numbers = #tpu.dot_dimension_numbers<[1], [0], [0], [1], [0, 0, 1, 1], [], []>} : vector<8x64xf32>, vector<64x256xf32>, vector<8x256xf32> -> vector<8x256xf32>
    %834 = vector.extract_strided_slice %833 {offsets = [0, 0], sizes = [8, 128], strides = [1, 1]} : vector<8x256xf32> to vector<8x128xf32>
    %835 = arith.index_cast %829 : i32 to index
    %c0_250 = arith.constant 0 : index
    %836 = vector.load %arg16[%835, %c0_250] : memref<64x256xf32, #tpu.memory_space<vmem>>, vector<8x128xf32>
    %837 = arith.addf %834, %836 : vector<8x128xf32>
    %838 = vector.extract_strided_slice %833 {offsets = [0, 128], sizes = [8, 128], strides = [1, 1]} : vector<8x256xf32> to vector<8x128xf32>
    %839 = arith.index_cast %832 : i32 to index
    %c128_251 = arith.constant 128 : index
    %840 = vector.load %arg16[%839, %c128_251] : memref<64x256xf32, #tpu.memory_space<vmem>>, vector<8x128xf32>
    %841 = arith.addf %838, %840 : vector<8x128xf32>
    %842 = tpu.iota {dimensions = array<i32: 1>} : vector<8x128xi32>
    %c64_i32_252 = arith.constant 64 : i32
    %843 = vector.broadcast %c64_i32_252 : i32 to vector<8x128xi32>
    %844 = arith.cmpi sge, %842, %843 : vector<8x128xi32>
    %c96_i32_253 = arith.constant 96 : i32
    %845 = vector.broadcast %c96_i32_253 : i32 to vector<8x128xi32>
    %846 = arith.cmpi slt, %842, %845 : vector<8x128xi32>
    %847 = arith.andi %844, %846 : vector<8x128xi1>
    %cst_254 = arith.constant 5.000000e-01 : f32
    %848 = vector.broadcast %cst_254 : f32 to vector<8x128xf32>
    %849 = arith.mulf %848, %837 : vector<8x128xf32>
    %850 = math.tanh %849 : vector<8x128xf32>
    %cst_255 = arith.constant 1.000000e+00 : f32
    %851 = vector.broadcast %cst_255 : f32 to vector<8x128xf32>
    %852 = arith.addf %850, %851 : vector<8x128xf32>
    %cst_256 = arith.constant 5.000000e-01 : f32
    %853 = vector.broadcast %cst_256 : f32 to vector<8x128xf32>
    %854 = arith.mulf %853, %852 : vector<8x128xf32>
    %855 = math.tanh %837 : vector<8x128xf32>
    %856 = arith.select %847, %855, %854 : vector<8x128xi1>, vector<8x128xf32>
    %857 = vector.extract_strided_slice %856 {offsets = [0, 0], sizes = [8, 32], strides = [1, 1]} : vector<8x128xf32> to vector<8x32xf32>
    %858 = vector.extract_strided_slice %856 {offsets = [0, 32], sizes = [8, 32], strides = [1, 1]} : vector<8x128xf32> to vector<8x32xf32>
    %859 = vector.extract_strided_slice %856 {offsets = [0, 64], sizes = [8, 32], strides = [1, 1]} : vector<8x128xf32> to vector<8x32xf32>
    %860 = vector.extract_strided_slice %856 {offsets = [0, 96], sizes = [8, 32], strides = [1, 1]} : vector<8x128xf32> to vector<8x32xf32>
    %861 = arith.mulf %858, %796 : vector<8x32xf32>
    %862 = arith.mulf %857, %859 : vector<8x32xf32>
    %863 = arith.addf %861, %862 : vector<8x32xf32>
    %864 = math.tanh %863 : vector<8x32xf32>
    %865 = arith.mulf %860, %864 : vector<8x32xf32>
    %866 = tpu.iota {dimensions = array<i32: 1>} : vector<8x128xi32>
    %c64_i32_257 = arith.constant 64 : i32
    %867 = vector.broadcast %c64_i32_257 : i32 to vector<8x128xi32>
    %868 = arith.cmpi sge, %866, %867 : vector<8x128xi32>
    %c96_i32_258 = arith.constant 96 : i32
    %869 = vector.broadcast %c96_i32_258 : i32 to vector<8x128xi32>
    %870 = arith.cmpi slt, %866, %869 : vector<8x128xi32>
    %871 = arith.andi %868, %870 : vector<8x128xi1>
    %cst_259 = arith.constant 5.000000e-01 : f32
    %872 = vector.broadcast %cst_259 : f32 to vector<8x128xf32>
    %873 = arith.mulf %872, %841 : vector<8x128xf32>
    %874 = math.tanh %873 : vector<8x128xf32>
    %cst_260 = arith.constant 1.000000e+00 : f32
    %875 = vector.broadcast %cst_260 : f32 to vector<8x128xf32>
    %876 = arith.addf %874, %875 : vector<8x128xf32>
    %cst_261 = arith.constant 5.000000e-01 : f32
    %877 = vector.broadcast %cst_261 : f32 to vector<8x128xf32>
    %878 = arith.mulf %877, %876 : vector<8x128xf32>
    %879 = math.tanh %841 : vector<8x128xf32>
    %880 = arith.select %871, %879, %878 : vector<8x128xi1>, vector<8x128xf32>
    %881 = vector.extract_strided_slice %880 {offsets = [0, 0], sizes = [8, 32], strides = [1, 1]} : vector<8x128xf32> to vector<8x32xf32>
    %882 = vector.extract_strided_slice %880 {offsets = [0, 32], sizes = [8, 32], strides = [1, 1]} : vector<8x128xf32> to vector<8x32xf32>
    %883 = vector.extract_strided_slice %880 {offsets = [0, 64], sizes = [8, 32], strides = [1, 1]} : vector<8x128xf32> to vector<8x32xf32>
    %884 = vector.extract_strided_slice %880 {offsets = [0, 96], sizes = [8, 32], strides = [1, 1]} : vector<8x128xf32> to vector<8x32xf32>
    %885 = arith.mulf %882, %820 : vector<8x32xf32>
    %886 = arith.mulf %881, %883 : vector<8x32xf32>
    %887 = arith.addf %885, %886 : vector<8x32xf32>
    %888 = math.tanh %887 : vector<8x32xf32>
    %889 = arith.mulf %884, %888 : vector<8x32xf32>
    %890 = arith.index_cast %829 : i32 to index
    %c0_262 = arith.constant 0 : index
    %891 = vector.load %arg14[%890, %c0_262] : memref<64x32xf32, #tpu.memory_space<vmem>>, vector<8x32xf32>
    tpu.vector_store %arg14[%890, %c0_262], %865 {strides = array<i32>} : memref<64x32xf32, #tpu.memory_space<vmem>>, vector<8x32xf32>,
    %892 = arith.index_cast %832 : i32 to index
    %c0_263 = arith.constant 0 : index
    %893 = vector.load %arg15[%892, %c0_263] : memref<64x32xf32, #tpu.memory_space<vmem>>, vector<8x32xf32>
    tpu.vector_store %arg15[%892, %c0_263], %889 {strides = array<i32>} : memref<64x32xf32, #tpu.memory_space<vmem>>, vector<8x32xf32>,
    %894 = tpu.concatenate %865, %889 in 1 : vector<8x32xf32>, vector<8x32xf32> -> vector<8x64xf32>
    %c5_i32_264 = arith.constant 5 : i32
    %c8_i32_265 = arith.constant 8 : i32
    %895 = arith.muli %c5_i32_264, %c8_i32_265 : i32
    %896 = tpu.assume_multiple %895, 8 : i32
    %c7_i32_266 = arith.constant 7 : i32
    %897 = arith.subi %c7_i32_266, %c5_i32_264 : i32
    %c8_i32_267 = arith.constant 8 : i32
    %898 = arith.muli %897, %c8_i32_267 : i32
    %899 = tpu.assume_multiple %898, 8 : i32
    %cst_268 = arith.constant dense<0.000000e+00> : vector<8x256xf32>
    %900 = tpu.matmul %894, %557, %cst_268 {dimension_numbers = #tpu.dot_dimension_numbers<[1], [0], [0], [1], [0, 0, 1, 1], [], []>} : vector<8x64xf32>, vector<64x256xf32>, vector<8x256xf32> -> vector<8x256xf32>
    %901 = vector.extract_strided_slice %900 {offsets = [0, 0], sizes = [8, 128], strides = [1, 1]} : vector<8x256xf32> to vector<8x128xf32>
    %902 = arith.index_cast %896 : i32 to index
    %c0_269 = arith.constant 0 : index
    %903 = vector.load %arg16[%902, %c0_269] : memref<64x256xf32, #tpu.memory_space<vmem>>, vector<8x128xf32>
    %904 = arith.addf %901, %903 : vector<8x128xf32>
    %905 = vector.extract_strided_slice %900 {offsets = [0, 128], sizes = [8, 128], strides = [1, 1]} : vector<8x256xf32> to vector<8x128xf32>
    %906 = arith.index_cast %899 : i32 to index
    %c128_270 = arith.constant 128 : index
    %907 = vector.load %arg16[%906, %c128_270] : memref<64x256xf32, #tpu.memory_space<vmem>>, vector<8x128xf32>
    %908 = arith.addf %905, %907 : vector<8x128xf32>
    %909 = tpu.iota {dimensions = array<i32: 1>} : vector<8x128xi32>
    %c64_i32_271 = arith.constant 64 : i32
    %910 = vector.broadcast %c64_i32_271 : i32 to vector<8x128xi32>
    %911 = arith.cmpi sge, %909, %910 : vector<8x128xi32>
    %c96_i32_272 = arith.constant 96 : i32
    %912 = vector.broadcast %c96_i32_272 : i32 to vector<8x128xi32>
    %913 = arith.cmpi slt, %909, %912 : vector<8x128xi32>
    %914 = arith.andi %911, %913 : vector<8x128xi1>
    %cst_273 = arith.constant 5.000000e-01 : f32
    %915 = vector.broadcast %cst_273 : f32 to vector<8x128xf32>
    %916 = arith.mulf %915, %904 : vector<8x128xf32>
    %917 = math.tanh %916 : vector<8x128xf32>
    %cst_274 = arith.constant 1.000000e+00 : f32
    %918 = vector.broadcast %cst_274 : f32 to vector<8x128xf32>
    %919 = arith.addf %917, %918 : vector<8x128xf32>
    %cst_275 = arith.constant 5.000000e-01 : f32
    %920 = vector.broadcast %cst_275 : f32 to vector<8x128xf32>
    %921 = arith.mulf %920, %919 : vector<8x128xf32>
    %922 = math.tanh %904 : vector<8x128xf32>
    %923 = arith.select %914, %922, %921 : vector<8x128xi1>, vector<8x128xf32>
    %924 = vector.extract_strided_slice %923 {offsets = [0, 0], sizes = [8, 32], strides = [1, 1]} : vector<8x128xf32> to vector<8x32xf32>
    %925 = vector.extract_strided_slice %923 {offsets = [0, 32], sizes = [8, 32], strides = [1, 1]} : vector<8x128xf32> to vector<8x32xf32>
    %926 = vector.extract_strided_slice %923 {offsets = [0, 64], sizes = [8, 32], strides = [1, 1]} : vector<8x128xf32> to vector<8x32xf32>
    %927 = vector.extract_strided_slice %923 {offsets = [0, 96], sizes = [8, 32], strides = [1, 1]} : vector<8x128xf32> to vector<8x32xf32>
    %928 = arith.mulf %925, %863 : vector<8x32xf32>
    %929 = arith.mulf %924, %926 : vector<8x32xf32>
    %930 = arith.addf %928, %929 : vector<8x32xf32>
    %931 = math.tanh %930 : vector<8x32xf32>
    %932 = arith.mulf %927, %931 : vector<8x32xf32>
    %933 = tpu.iota {dimensions = array<i32: 1>} : vector<8x128xi32>
    %c64_i32_276 = arith.constant 64 : i32
    %934 = vector.broadcast %c64_i32_276 : i32 to vector<8x128xi32>
    %935 = arith.cmpi sge, %933, %934 : vector<8x128xi32>
    %c96_i32_277 = arith.constant 96 : i32
    %936 = vector.broadcast %c96_i32_277 : i32 to vector<8x128xi32>
    %937 = arith.cmpi slt, %933, %936 : vector<8x128xi32>
    %938 = arith.andi %935, %937 : vector<8x128xi1>
    %cst_278 = arith.constant 5.000000e-01 : f32
    %939 = vector.broadcast %cst_278 : f32 to vector<8x128xf32>
    %940 = arith.mulf %939, %908 : vector<8x128xf32>
    %941 = math.tanh %940 : vector<8x128xf32>
    %cst_279 = arith.constant 1.000000e+00 : f32
    %942 = vector.broadcast %cst_279 : f32 to vector<8x128xf32>
    %943 = arith.addf %941, %942 : vector<8x128xf32>
    %cst_280 = arith.constant 5.000000e-01 : f32
    %944 = vector.broadcast %cst_280 : f32 to vector<8x128xf32>
    %945 = arith.mulf %944, %943 : vector<8x128xf32>
    %946 = math.tanh %908 : vector<8x128xf32>
    %947 = arith.select %938, %946, %945 : vector<8x128xi1>, vector<8x128xf32>
    %948 = vector.extract_strided_slice %947 {offsets = [0, 0], sizes = [8, 32], strides = [1, 1]} : vector<8x128xf32> to vector<8x32xf32>
    %949 = vector.extract_strided_slice %947 {offsets = [0, 32], sizes = [8, 32], strides = [1, 1]} : vector<8x128xf32> to vector<8x32xf32>
    %950 = vector.extract_strided_slice %947 {offsets = [0, 64], sizes = [8, 32], strides = [1, 1]} : vector<8x128xf32> to vector<8x32xf32>
    %951 = vector.extract_strided_slice %947 {offsets = [0, 96], sizes = [8, 32], strides = [1, 1]} : vector<8x128xf32> to vector<8x32xf32>
    %952 = arith.mulf %949, %887 : vector<8x32xf32>
    %953 = arith.mulf %948, %950 : vector<8x32xf32>
    %954 = arith.addf %952, %953 : vector<8x32xf32>
    %955 = math.tanh %954 : vector<8x32xf32>
    %956 = arith.mulf %951, %955 : vector<8x32xf32>
    %957 = arith.index_cast %896 : i32 to index
    %c0_281 = arith.constant 0 : index
    %958 = vector.load %arg14[%957, %c0_281] : memref<64x32xf32, #tpu.memory_space<vmem>>, vector<8x32xf32>
    tpu.vector_store %arg14[%957, %c0_281], %932 {strides = array<i32>} : memref<64x32xf32, #tpu.memory_space<vmem>>, vector<8x32xf32>,
    %959 = arith.index_cast %899 : i32 to index
    %c0_282 = arith.constant 0 : index
    %960 = vector.load %arg15[%959, %c0_282] : memref<64x32xf32, #tpu.memory_space<vmem>>, vector<8x32xf32>
    tpu.vector_store %arg15[%959, %c0_282], %956 {strides = array<i32>} : memref<64x32xf32, #tpu.memory_space<vmem>>, vector<8x32xf32>,
    %961 = tpu.concatenate %932, %956 in 1 : vector<8x32xf32>, vector<8x32xf32> -> vector<8x64xf32>
    %c6_i32_283 = arith.constant 6 : i32
    %c8_i32_284 = arith.constant 8 : i32
    %962 = arith.muli %c6_i32_283, %c8_i32_284 : i32
    %963 = tpu.assume_multiple %962, 8 : i32
    %c7_i32_285 = arith.constant 7 : i32
    %964 = arith.subi %c7_i32_285, %c6_i32_283 : i32
    %c8_i32_286 = arith.constant 8 : i32
    %965 = arith.muli %964, %c8_i32_286 : i32
    %966 = tpu.assume_multiple %965, 8 : i32
    %cst_287 = arith.constant dense<0.000000e+00> : vector<8x256xf32>
    %967 = tpu.matmul %961, %557, %cst_287 {dimension_numbers = #tpu.dot_dimension_numbers<[1], [0], [0], [1], [0, 0, 1, 1], [], []>} : vector<8x64xf32>, vector<64x256xf32>, vector<8x256xf32> -> vector<8x256xf32>
    %968 = vector.extract_strided_slice %967 {offsets = [0, 0], sizes = [8, 128], strides = [1, 1]} : vector<8x256xf32> to vector<8x128xf32>
    %969 = arith.index_cast %963 : i32 to index
    %c0_288 = arith.constant 0 : index
    %970 = vector.load %arg16[%969, %c0_288] : memref<64x256xf32, #tpu.memory_space<vmem>>, vector<8x128xf32>
    %971 = arith.addf %968, %970 : vector<8x128xf32>
    %972 = vector.extract_strided_slice %967 {offsets = [0, 128], sizes = [8, 128], strides = [1, 1]} : vector<8x256xf32> to vector<8x128xf32>
    %973 = arith.index_cast %966 : i32 to index
    %c128_289 = arith.constant 128 : index
    %974 = vector.load %arg16[%973, %c128_289] : memref<64x256xf32, #tpu.memory_space<vmem>>, vector<8x128xf32>
    %975 = arith.addf %972, %974 : vector<8x128xf32>
    %976 = tpu.iota {dimensions = array<i32: 1>} : vector<8x128xi32>
    %c64_i32_290 = arith.constant 64 : i32
    %977 = vector.broadcast %c64_i32_290 : i32 to vector<8x128xi32>
    %978 = arith.cmpi sge, %976, %977 : vector<8x128xi32>
    %c96_i32_291 = arith.constant 96 : i32
    %979 = vector.broadcast %c96_i32_291 : i32 to vector<8x128xi32>
    %980 = arith.cmpi slt, %976, %979 : vector<8x128xi32>
    %981 = arith.andi %978, %980 : vector<8x128xi1>
    %cst_292 = arith.constant 5.000000e-01 : f32
    %982 = vector.broadcast %cst_292 : f32 to vector<8x128xf32>
    %983 = arith.mulf %982, %971 : vector<8x128xf32>
    %984 = math.tanh %983 : vector<8x128xf32>
    %cst_293 = arith.constant 1.000000e+00 : f32
    %985 = vector.broadcast %cst_293 : f32 to vector<8x128xf32>
    %986 = arith.addf %984, %985 : vector<8x128xf32>
    %cst_294 = arith.constant 5.000000e-01 : f32
    %987 = vector.broadcast %cst_294 : f32 to vector<8x128xf32>
    %988 = arith.mulf %987, %986 : vector<8x128xf32>
    %989 = math.tanh %971 : vector<8x128xf32>
    %990 = arith.select %981, %989, %988 : vector<8x128xi1>, vector<8x128xf32>
    %991 = vector.extract_strided_slice %990 {offsets = [0, 0], sizes = [8, 32], strides = [1, 1]} : vector<8x128xf32> to vector<8x32xf32>
    %992 = vector.extract_strided_slice %990 {offsets = [0, 32], sizes = [8, 32], strides = [1, 1]} : vector<8x128xf32> to vector<8x32xf32>
    %993 = vector.extract_strided_slice %990 {offsets = [0, 64], sizes = [8, 32], strides = [1, 1]} : vector<8x128xf32> to vector<8x32xf32>
    %994 = vector.extract_strided_slice %990 {offsets = [0, 96], sizes = [8, 32], strides = [1, 1]} : vector<8x128xf32> to vector<8x32xf32>
    %995 = arith.mulf %992, %930 : vector<8x32xf32>
    %996 = arith.mulf %991, %993 : vector<8x32xf32>
    %997 = arith.addf %995, %996 : vector<8x32xf32>
    %998 = math.tanh %997 : vector<8x32xf32>
    %999 = arith.mulf %994, %998 : vector<8x32xf32>
    %1000 = tpu.iota {dimensions = array<i32: 1>} : vector<8x128xi32>
    %c64_i32_295 = arith.constant 64 : i32
    %1001 = vector.broadcast %c64_i32_295 : i32 to vector<8x128xi32>
    %1002 = arith.cmpi sge, %1000, %1001 : vector<8x128xi32>
    %c96_i32_296 = arith.constant 96 : i32
    %1003 = vector.broadcast %c96_i32_296 : i32 to vector<8x128xi32>
    %1004 = arith.cmpi slt, %1000, %1003 : vector<8x128xi32>
    %1005 = arith.andi %1002, %1004 : vector<8x128xi1>
    %cst_297 = arith.constant 5.000000e-01 : f32
    %1006 = vector.broadcast %cst_297 : f32 to vector<8x128xf32>
    %1007 = arith.mulf %1006, %975 : vector<8x128xf32>
    %1008 = math.tanh %1007 : vector<8x128xf32>
    %cst_298 = arith.constant 1.000000e+00 : f32
    %1009 = vector.broadcast %cst_298 : f32 to vector<8x128xf32>
    %1010 = arith.addf %1008, %1009 : vector<8x128xf32>
    %cst_299 = arith.constant 5.000000e-01 : f32
    %1011 = vector.broadcast %cst_299 : f32 to vector<8x128xf32>
    %1012 = arith.mulf %1011, %1010 : vector<8x128xf32>
    %1013 = math.tanh %975 : vector<8x128xf32>
    %1014 = arith.select %1005, %1013, %1012 : vector<8x128xi1>, vector<8x128xf32>
    %1015 = vector.extract_strided_slice %1014 {offsets = [0, 0], sizes = [8, 32], strides = [1, 1]} : vector<8x128xf32> to vector<8x32xf32>
    %1016 = vector.extract_strided_slice %1014 {offsets = [0, 32], sizes = [8, 32], strides = [1, 1]} : vector<8x128xf32> to vector<8x32xf32>
    %1017 = vector.extract_strided_slice %1014 {offsets = [0, 64], sizes = [8, 32], strides = [1, 1]} : vector<8x128xf32> to vector<8x32xf32>
    %1018 = vector.extract_strided_slice %1014 {offsets = [0, 96], sizes = [8, 32], strides = [1, 1]} : vector<8x128xf32> to vector<8x32xf32>
    %1019 = arith.mulf %1016, %954 : vector<8x32xf32>
    %1020 = arith.mulf %1015, %1017 : vector<8x32xf32>
    %1021 = arith.addf %1019, %1020 : vector<8x32xf32>
    %1022 = math.tanh %1021 : vector<8x32xf32>
    %1023 = arith.mulf %1018, %1022 : vector<8x32xf32>
    %1024 = arith.index_cast %963 : i32 to index
    %c0_300 = arith.constant 0 : index
    %1025 = vector.load %arg14[%1024, %c0_300] : memref<64x32xf32, #tpu.memory_space<vmem>>, vector<8x32xf32>
    tpu.vector_store %arg14[%1024, %c0_300], %999 {strides = array<i32>} : memref<64x32xf32, #tpu.memory_space<vmem>>, vector<8x32xf32>,
    %1026 = arith.index_cast %966 : i32 to index
    %c0_301 = arith.constant 0 : index
    %1027 = vector.load %arg15[%1026, %c0_301] : memref<64x32xf32, #tpu.memory_space<vmem>>, vector<8x32xf32>
    tpu.vector_store %arg15[%1026, %c0_301], %1023 {strides = array<i32>} : memref<64x32xf32, #tpu.memory_space<vmem>>, vector<8x32xf32>,
    %1028 = tpu.concatenate %999, %1023 in 1 : vector<8x32xf32>, vector<8x32xf32> -> vector<8x64xf32>
    %c7_i32_302 = arith.constant 7 : i32
    %c8_i32_303 = arith.constant 8 : i32
    %1029 = arith.muli %c7_i32_302, %c8_i32_303 : i32
    %1030 = tpu.assume_multiple %1029, 8 : i32
    %c7_i32_304 = arith.constant 7 : i32
    %1031 = arith.subi %c7_i32_304, %c7_i32_302 : i32
    %c8_i32_305 = arith.constant 8 : i32
    %1032 = arith.muli %1031, %c8_i32_305 : i32
    %1033 = tpu.assume_multiple %1032, 8 : i32
    %cst_306 = arith.constant dense<0.000000e+00> : vector<8x256xf32>
    %1034 = tpu.matmul %1028, %557, %cst_306 {dimension_numbers = #tpu.dot_dimension_numbers<[1], [0], [0], [1], [0, 0, 1, 1], [], []>} : vector<8x64xf32>, vector<64x256xf32>, vector<8x256xf32> -> vector<8x256xf32>
    %1035 = vector.extract_strided_slice %1034 {offsets = [0, 0], sizes = [8, 128], strides = [1, 1]} : vector<8x256xf32> to vector<8x128xf32>
    %1036 = arith.index_cast %1030 : i32 to index
    %c0_307 = arith.constant 0 : index
    %1037 = vector.load %arg16[%1036, %c0_307] : memref<64x256xf32, #tpu.memory_space<vmem>>, vector<8x128xf32>
    %1038 = arith.addf %1035, %1037 : vector<8x128xf32>
    %1039 = vector.extract_strided_slice %1034 {offsets = [0, 128], sizes = [8, 128], strides = [1, 1]} : vector<8x256xf32> to vector<8x128xf32>
    %1040 = arith.index_cast %1033 : i32 to index
    %c128_308 = arith.constant 128 : index
    %1041 = vector.load %arg16[%1040, %c128_308] : memref<64x256xf32, #tpu.memory_space<vmem>>, vector<8x128xf32>
    %1042 = arith.addf %1039, %1041 : vector<8x128xf32>
    %1043 = tpu.iota {dimensions = array<i32: 1>} : vector<8x128xi32>
    %c64_i32_309 = arith.constant 64 : i32
    %1044 = vector.broadcast %c64_i32_309 : i32 to vector<8x128xi32>
    %1045 = arith.cmpi sge, %1043, %1044 : vector<8x128xi32>
    %c96_i32_310 = arith.constant 96 : i32
    %1046 = vector.broadcast %c96_i32_310 : i32 to vector<8x128xi32>
    %1047 = arith.cmpi slt, %1043, %1046 : vector<8x128xi32>
    %1048 = arith.andi %1045, %1047 : vector<8x128xi1>
    %cst_311 = arith.constant 5.000000e-01 : f32
    %1049 = vector.broadcast %cst_311 : f32 to vector<8x128xf32>
    %1050 = arith.mulf %1049, %1038 : vector<8x128xf32>
    %1051 = math.tanh %1050 : vector<8x128xf32>
    %cst_312 = arith.constant 1.000000e+00 : f32
    %1052 = vector.broadcast %cst_312 : f32 to vector<8x128xf32>
    %1053 = arith.addf %1051, %1052 : vector<8x128xf32>
    %cst_313 = arith.constant 5.000000e-01 : f32
    %1054 = vector.broadcast %cst_313 : f32 to vector<8x128xf32>
    %1055 = arith.mulf %1054, %1053 : vector<8x128xf32>
    %1056 = math.tanh %1038 : vector<8x128xf32>
    %1057 = arith.select %1048, %1056, %1055 : vector<8x128xi1>, vector<8x128xf32>
    %1058 = vector.extract_strided_slice %1057 {offsets = [0, 0], sizes = [8, 32], strides = [1, 1]} : vector<8x128xf32> to vector<8x32xf32>
    %1059 = vector.extract_strided_slice %1057 {offsets = [0, 32], sizes = [8, 32], strides = [1, 1]} : vector<8x128xf32> to vector<8x32xf32>
    %1060 = vector.extract_strided_slice %1057 {offsets = [0, 64], sizes = [8, 32], strides = [1, 1]} : vector<8x128xf32> to vector<8x32xf32>
    %1061 = vector.extract_strided_slice %1057 {offsets = [0, 96], sizes = [8, 32], strides = [1, 1]} : vector<8x128xf32> to vector<8x32xf32>
    %1062 = arith.mulf %1059, %997 : vector<8x32xf32>
    %1063 = arith.mulf %1058, %1060 : vector<8x32xf32>
    %1064 = arith.addf %1062, %1063 : vector<8x32xf32>
    %1065 = math.tanh %1064 : vector<8x32xf32>
    %1066 = arith.mulf %1061, %1065 : vector<8x32xf32>
    %1067 = tpu.iota {dimensions = array<i32: 1>} : vector<8x128xi32>
    %c64_i32_314 = arith.constant 64 : i32
    %1068 = vector.broadcast %c64_i32_314 : i32 to vector<8x128xi32>
    %1069 = arith.cmpi sge, %1067, %1068 : vector<8x128xi32>
    %c96_i32_315 = arith.constant 96 : i32
    %1070 = vector.broadcast %c96_i32_315 : i32 to vector<8x128xi32>
    %1071 = arith.cmpi slt, %1067, %1070 : vector<8x128xi32>
    %1072 = arith.andi %1069, %1071 : vector<8x128xi1>
    %cst_316 = arith.constant 5.000000e-01 : f32
    %1073 = vector.broadcast %cst_316 : f32 to vector<8x128xf32>
    %1074 = arith.mulf %1073, %1042 : vector<8x128xf32>
    %1075 = math.tanh %1074 : vector<8x128xf32>
    %cst_317 = arith.constant 1.000000e+00 : f32
    %1076 = vector.broadcast %cst_317 : f32 to vector<8x128xf32>
    %1077 = arith.addf %1075, %1076 : vector<8x128xf32>
    %cst_318 = arith.constant 5.000000e-01 : f32
    %1078 = vector.broadcast %cst_318 : f32 to vector<8x128xf32>
    %1079 = arith.mulf %1078, %1077 : vector<8x128xf32>
    %1080 = math.tanh %1042 : vector<8x128xf32>
    %1081 = arith.select %1072, %1080, %1079 : vector<8x128xi1>, vector<8x128xf32>
    %1082 = vector.extract_strided_slice %1081 {offsets = [0, 0], sizes = [8, 32], strides = [1, 1]} : vector<8x128xf32> to vector<8x32xf32>
    %1083 = vector.extract_strided_slice %1081 {offsets = [0, 32], sizes = [8, 32], strides = [1, 1]} : vector<8x128xf32> to vector<8x32xf32>
    %1084 = vector.extract_strided_slice %1081 {offsets = [0, 64], sizes = [8, 32], strides = [1, 1]} : vector<8x128xf32> to vector<8x32xf32>
    %1085 = vector.extract_strided_slice %1081 {offsets = [0, 96], sizes = [8, 32], strides = [1, 1]} : vector<8x128xf32> to vector<8x32xf32>
    %1086 = arith.mulf %1083, %1021 : vector<8x32xf32>
    %1087 = arith.mulf %1082, %1084 : vector<8x32xf32>
    %1088 = arith.addf %1086, %1087 : vector<8x32xf32>
    %1089 = math.tanh %1088 : vector<8x32xf32>
    %1090 = arith.mulf %1085, %1089 : vector<8x32xf32>
    %1091 = arith.index_cast %1030 : i32 to index
    %c0_319 = arith.constant 0 : index
    %1092 = vector.load %arg14[%1091, %c0_319] : memref<64x32xf32, #tpu.memory_space<vmem>>, vector<8x32xf32>
    tpu.vector_store %arg14[%1091, %c0_319], %1066 {strides = array<i32>} : memref<64x32xf32, #tpu.memory_space<vmem>>, vector<8x32xf32>,
    %1093 = arith.index_cast %1033 : i32 to index
    %c0_320 = arith.constant 0 : index
    %1094 = vector.load %arg15[%1093, %c0_320] : memref<64x32xf32, #tpu.memory_space<vmem>>, vector<8x32xf32>
    tpu.vector_store %arg15[%1093, %c0_320], %1090 {strides = array<i32>} : memref<64x32xf32, #tpu.memory_space<vmem>>, vector<8x32xf32>,
    %1095 = tpu.concatenate %1066, %1090 in 1 : vector<8x32xf32>, vector<8x32xf32> -> vector<8x64xf32>
    %c8_i32_321 = arith.constant 8 : i32
    %c0_322 = arith.constant 0 : index
    %c0_323 = arith.constant 0 : index
    %1096 = vector.load %arg14[%c0_322, %c0_323] : memref<64x32xf32, #tpu.memory_space<vmem>>, vector<64x32xf32>
    %c0_324 = arith.constant 0 : index
    %c0_325 = arith.constant 0 : index
    %1097 = vector.load %arg7[%c0_324, %c0_325] : memref<64x8xf32, #tpu.memory_space<vmem>>, vector<32x8xf32>
    %cst_326 = arith.constant dense<0.000000e+00> : vector<64x8xf32>
    %1098 = tpu.matmul %1096, %1097, %cst_326 {dimension_numbers = #tpu.dot_dimension_numbers<[1], [0], [0], [1], [0, 0, 1, 1], [], []>} : vector<64x32xf32>, vector<32x8xf32>, vector<64x8xf32> -> vector<64x8xf32>
    %c0_327 = arith.constant 0 : index
    %c0_328 = arith.constant 0 : index
    %1099 = vector.load %arg15[%c0_327, %c0_328] : memref<64x32xf32, #tpu.memory_space<vmem>>, vector<64x32xf32>
    %c32_329 = arith.constant 32 : index
    %c0_330 = arith.constant 0 : index
    %1100 = vector.load %arg7[%c32_329, %c0_330] : memref<64x8xf32, #tpu.memory_space<vmem>>, vector<32x8xf32>
    %cst_331 = arith.constant dense<0.000000e+00> : vector<64x8xf32>
    %1101 = tpu.matmul %1099, %1100, %cst_331 {dimension_numbers = #tpu.dot_dimension_numbers<[1], [0], [0], [1], [0, 0, 1, 1], [], []>} : vector<64x32xf32>, vector<32x8xf32>, vector<64x8xf32> -> vector<64x8xf32>
    %1102 = arith.addf %1098, %1101 : vector<64x8xf32>
    %c0_332 = arith.constant 0 : index
    %c0_333 = arith.constant 0 : index
    %1103 = vector.load %arg8[%c0_332, %c0_333] : memref<1x8xf32, #tpu.memory_space<vmem>>, vector<1x8xf32>
    %1104 = vector.broadcast %1103 : vector<1x8xf32> to vector<64x8xf32>
    %1105 = arith.addf %1102, %1104 : vector<64x8xf32>
    %1106 = math.tanh %1105 : vector<64x8xf32>
    %c0_334 = arith.constant 0 : index
    %c0_335 = arith.constant 0 : index
    %1107 = vector.load %arg9[%c0_334, %c0_335] : memref<8x4xf32, #tpu.memory_space<vmem>>, vector<8x4xf32>
    %cst_336 = arith.constant dense<0.000000e+00> : vector<64x4xf32>
    %1108 = tpu.matmul %1106, %1107, %cst_336 {dimension_numbers = #tpu.dot_dimension_numbers<[1], [0], [0], [1], [0, 0, 1, 1], [], []>} : vector<64x8xf32>, vector<8x4xf32>, vector<64x4xf32> -> vector<64x4xf32>
    %c0_337 = arith.constant 0 : index
    %c0_338 = arith.constant 0 : index
    %1109 = vector.load %arg10[%c0_337, %c0_338] : memref<1x4xf32, #tpu.memory_space<vmem>>, vector<1x4xf32>
    %1110 = vector.broadcast %1109 : vector<1x4xf32> to vector<64x4xf32>
    %1111 = arith.addf %1108, %1110 : vector<64x4xf32>
    %1112 = math.tanh %1111 : vector<64x4xf32>
    %c0_339 = arith.constant 0 : index
    %c0_340 = arith.constant 0 : index
    %1113 = vector.load %arg11[%c0_339, %c0_340] : memref<4x128xf32, #tpu.memory_space<vmem>>, vector<4x128xf32>
    %cst_341 = arith.constant dense<0.000000e+00> : vector<64x128xf32>
    %1114 = tpu.matmul %1112, %1113, %cst_341 {dimension_numbers = #tpu.dot_dimension_numbers<[1], [0], [0], [1], [0, 0, 1, 1], [], []>} : vector<64x4xf32>, vector<4x128xf32>, vector<64x128xf32> -> vector<64x128xf32>
    %c0_342 = arith.constant 0 : index
    %c0_343 = arith.constant 0 : index
    %1115 = vector.load %arg12[%c0_342, %c0_343] : memref<1x128xf32, #tpu.memory_space<vmem>>, vector<1x128xf32>
    %1116 = vector.broadcast %1115 : vector<1x128xf32> to vector<64x128xf32>
    %1117 = arith.addf %1114, %1116 : vector<64x128xf32>
    %c0_344 = arith.constant 0 : index
    %c0_345 = arith.constant 0 : index
    %1118 = vector.load %arg13[%c0_344, %c0_345] : memref<64x128xf32, #tpu.memory_space<vmem>>, vector<64x128xf32>
    tpu.vector_store %arg13[%c0_344, %c0_345], %1117 {strides = array<i32>} : memref<64x128xf32, #tpu.memory_space<vmem>>, vector<64x128xf32>,
    return
  }
}

</mosaic_0001>

<llo_original>
// kernel: ner_lstm_forward.1
$region0: #{ner_lstm_forward.1}
  #allocation0 [shape = 'u32[]', space=smem, size = 0x4, offset = 0x4, fixed_abs, tag = 'smem constant byte address 0x4 - core index']
  #allocation1 [shape = 'u32[72,128]{1,0:T(1,128)}', space=vmem, size = 0x9000, scoped, tag = 'internal scratch']
  #allocation2 [shape = 'f32[64,32]{1,0:T(8,128)}', space=vmem, size = 0x8000, scoped, tag = 'scratch operand']
  #allocation3 [shape = 'f32[64,32]{1,0:T(8,128)}', space=vmem, size = 0x8000, scoped, tag = 'scratch operand']
  #allocation4 [shape = 'f32[64,256]{1,0:T(8,128)}', space=vmem, size = 0x10000, scoped, tag = 'scratch operand']
  %s0 = inlined_call_operand.vmem [shape: f32[64,16], index: 0, kind: input, shape index: {}]
  %s1 = inlined_call_operand.vmem [shape: f32[16,256], index: 1, kind: input, shape index: {}]
  %s2 = inlined_call_operand.vmem [shape: f32[64,256], index: 2, kind: input, shape index: {}]
  %s3 = inlined_call_operand.vmem [shape: f32[1,256], index: 3, kind: input, shape index: {}]
  %s4 = inlined_call_operand.hbm [shape: f32[64,256], index: 4, kind: input, shape index: {}]
  %s5 = inlined_call_operand.hbm [shape: f32[64,256], index: 5, kind: input, shape index: {}]
  %s6 = inlined_call_operand.vmem [shape: f32[1,256], index: 6, kind: input, shape index: {}]
  %s7 = inlined_call_operand.vmem [shape: f32[64,8], index: 7, kind: input, shape index: {}]
  %s8 = inlined_call_operand.vmem [shape: f32[1,8], index: 8, kind: input, shape index: {}]
  %s9 = inlined_call_operand.vmem [shape: f32[8,4], index: 9, kind: input, shape index: {}]
  %s10 = inlined_call_operand.vmem [shape: f32[1,4], index: 10, kind: input, shape index: {}]
  %s11 = inlined_call_operand.vmem [shape: f32[4,128], index: 11, kind: input, shape index: {}]
  %s12 = inlined_call_operand.vmem [shape: f32[1,128], index: 12, kind: input, shape index: {}]
  %s13 = inlined_call_operand.vmem [shape: f32[64,128], index: 13, kind: output, shape index: {}]
  %s14 = sld [smem:[#allocation0]]
  $region70: #{ner_lstm_forward.1} parent=0
    _
  %s16 = ssub.s32 1, %s14
  %s17 = scalar_select 0, %s16, %s14
  $region1: #{ner_lstm_forward.1} parent=0
    #allocation5 [shape = 'u8[65536]{0}', space=vmem, size = 0x10000, scoped, tag = 'input window, operand 4, single buffered']
    #allocation6 [shape = 's32[1]{0}', space=sflag, size = 0x4, scoped, tag = 'scoped memory for ner_lstm_forward.1']
    #allocation7 [shape = 'u8[65536]{0}', space=vmem, size = 0x10000, scoped, tag = 'input window, operand 5, single buffered']
    #allocation8 [shape = 's32[1]{0}', space=sflag, size = 0x4, scoped, tag = 'scoped memory for ner_lstm_forward.1']
    %18 = vsyncpa [#allocation6], 0
    %19 = vsyncpa [#allocation8], 0
    // Predicated region
    $region2: #{ner_lstm_forward.1} parent=1 // pred_check
      _
    $region3: #{ner_lstm_forward.1} parent=1 // pred_check_branch
      %21 = sbr.rel (0) target = $region5
    $region4: #{ner_lstm_forward.1} parent=1 // pred_region
      _
    $region5: #{ner_lstm_forward.1} parent=1 // pred_fallthru
      _
    // Predicated region
    $region6: #{ner_lstm_forward.1} parent=1 // pred_check
      _
    $region7: #{ner_lstm_forward.1} parent=1 // pred_check_branch
      %23 = sbr.rel (0) target = $region9
    $region8: #{ner_lstm_forward.1} parent=1 // pred_region
      _
    $region9: #{ner_lstm_forward.1} parent=1 // pred_fallthru
      _
    // Predicated region
    $region10: #{ner_lstm_forward.1} parent=1 // pred_check
      _
    $region11: #{ner_lstm_forward.1} parent=1 // pred_check_branch
      %25 = sbr.rel (0) target = $region13
    $region12: #{ner_lstm_forward.1} parent=1 // pred_region
      _
    $region13: #{ner_lstm_forward.1} parent=1 // pred_fallthru
      _
    // Predicated region
    $region14: #{ner_lstm_forward.1} parent=1 // pred_check
      _
    $region15: #{ner_lstm_forward.1} parent=1 // pred_check_branch
      %27 = sbr.rel (0) target = $region17
    $region16: #{ner_lstm_forward.1} parent=1 // pred_region
      _
    $region17: #{ner_lstm_forward.1} parent=1 // pred_fallthru
      _
    // Predicated region
    $region18: #{ner_lstm_forward.1} parent=1 // pred_check
      _
    $region19: #{ner_lstm_forward.1} parent=1 // pred_check_branch
      %29 = sbr.rel (0) target = $region21
    $region20: #{ner_lstm_forward.1} parent=1 // pred_region
      %31 = vsyncadd [#allocation6], 0
      %s32 = sshll.u32 %s4, 4
      %s33 = int_to_ptr.hbm [resolvable:$true] %s32
      %s34 = sshll.u32 [#allocation5], 4
      %s35 = int_to_ptr.vmem [resolvable:$true] %s34
      %40 = dma.hbm_to_vmem [thread:$0]  %s33, 2048, %s35, [#allocation6], 256, 256, 16
    $region21: #{ner_lstm_forward.1} parent=1 // pred_fallthru
      _
    // Predicated region
    $region22: #{ner_lstm_forward.1} parent=1 // pred_check
      _
    $region23: #{ner_lstm_forward.1} parent=1 // pred_check_branch
      %42 = sbr.rel (0) target = $region25
    $region24: #{ner_lstm_forward.1} parent=1 // pred_region
      %44 = vsyncadd [#allocation8], 0
      %s45 = sshll.u32 %s5, 4
      %s46 = int_to_ptr.hbm [resolvable:$true] %s45
      %s47 = sshll.u32 [#allocation7], 4
      %s48 = int_to_ptr.vmem [resolvable:$true] %s47
      %53 = dma.hbm_to_vmem [thread:$0]  %s46, 2048, %s48, [#allocation8], 256, 256, 16
    $region25: #{ner_lstm_forward.1} parent=1 // pred_fallthru
      _
    // Predicated region
    $region26: #{ner_lstm_forward.1} parent=1 // pred_check
      _
    $region27: #{ner_lstm_forward.1} parent=1 // pred_check_branch
      %55 = sbr.rel (0) target = $region29
    $region28: #{ner_lstm_forward.1} parent=1 // pred_region
      _
    $region29: #{ner_lstm_forward.1} parent=1 // pred_fallthru
      _
    // Predicated region
    $region30: #{ner_lstm_forward.1} parent=1 // pred_check
      _
    $region31: #{ner_lstm_forward.1} parent=1 // pred_check_branch
      %57 = sbr.rel (0) target = $region33
    $region32: #{ner_lstm_forward.1} parent=1 // pred_region
      _
    $region33: #{ner_lstm_forward.1} parent=1 // pred_fallthru
      _
    // Predicated region
    $region34: #{ner_lstm_forward.1} parent=1 // pred_check
      _
    $region35: #{ner_lstm_forward.1} parent=1 // pred_check_branch
      %59 = sbr.rel (0) target = $region37
    $region36: #{ner_lstm_forward.1} parent=1 // pred_region
      _
    $region37: #{ner_lstm_forward.1} parent=1 // pred_fallthru
      _
    // Predicated region
    $region38: #{ner_lstm_forward.1} parent=1 // pred_check
      _
    $region39: #{ner_lstm_forward.1} parent=1 // pred_check_branch
      %61 = sbr.rel (0) target = $region41
    $region40: #{ner_lstm_forward.1} parent=1 // pred_region
      _
    $region41: #{ner_lstm_forward.1} parent=1 // pred_fallthru
      _
    // Predicated region
    $region42: #{ner_lstm_forward.1} parent=1 // pred_check
      _
    $region43: #{ner_lstm_forward.1} parent=1 // pred_check_branch
      %63 = sbr.rel (0) target = $region45
    $region44: #{ner_lstm_forward.1} parent=1 // pred_region
      _
    $region45: #{ner_lstm_forward.1} parent=1 // pred_fallthru
      _
    // Predicated region
    $region46: #{ner_lstm_forward.1} parent=1 // pred_check
      _
    $region47: #{ner_lstm_forward.1} parent=1 // pred_check_branch
      %65 = sbr.rel (0) target = $region49
    $region48: #{ner_lstm_forward.1} parent=1 // pred_region
      _
    $region49: #{ner_lstm_forward.1} parent=1 // pred_fallthru
      _
    // Predicated region
    $region50: #{ner_lstm_forward.1} parent=1 // pred_check
      _
    $region51: #{ner_lstm_forward.1} parent=1 // pred_check_branch
      %67 = sbr.rel (0) target = $region53
    $region52: #{ner_lstm_forward.1} parent=1 // pred_region
      _
    $region53: #{ner_lstm_forward.1} parent=1 // pred_fallthru
      _
    // Predicated region
    $region54: #{ner_lstm_forward.1} parent=1 // pred_check
      _
    $region55: #{ner_lstm_forward.1} parent=1 // pred_check_branch
      %69 = sbr.rel (0) target = $region57
    $region56: #{ner_lstm_forward.1} parent=1 // pred_region
      %71 = dma.done [#allocation6], 2048
    $region57: #{ner_lstm_forward.1} parent=1 // pred_fallthru
      _
    // Predicated region
    $region58: #{ner_lstm_forward.1} parent=1 // pred_check
      _
    $region59: #{ner_lstm_forward.1} parent=1 // pred_check_branch
      %73 = sbr.rel (0) target = $region61
    $region60: #{ner_lstm_forward.1} parent=1 // pred_region
      %75 = dma.done [#allocation8], 2048
    $region61: #{ner_lstm_forward.1} parent=1 // pred_fallthru
      _
    %v76 = vld [vmem:[%s0] sm:$0xff]
    %v77 = vld [vmem:[%s0 + $0x8] sm:$0xff]
    %v78 = vld [vmem:[%s0 + $0x10] sm:$0xff]
    %v79 = vld [vmem:[%s0 + $0x18] sm:$0xff]
    %v80 = vld [vmem:[%s0 + $0x20] sm:$0xff]
    %v81 = vld [vmem:[%s0 + $0x28] sm:$0xff]
    %v82 = vld [vmem:[%s0 + $0x30] sm:$0xff]
    %v83 = vld [vmem:[%s0 + $0x38] sm:$0xff]
    %v84 = vld [vmem:[%s1] sm:$0xff]
    %v85 = vld [vmem:[%s1 + $0x8] sm:$0xff]
    %v86 = vld [vmem:[%s1 + $0x10] sm:$0xff]
    %v87 = vld [vmem:[%s1 + $0x18] sm:$0xff]
    %v88 = vld [vmem:[%s3] sm:$0x3]
    %v90 = vperm.slane %v88, 0
    %v91 = vperm.slane %v88, 1
    %vm94 = vcmask 130048
    %v96 = vsel %vm94, %v76, 0
    %v99 = vsel %vm94, %v77, 0
    %v102 = vsel %vm94, %v78, 0
    %v105 = vsel %vm94, %v79, 0
    %v108 = vsel %vm94, %v80, 0
    %v111 = vsel %vm94, %v81, 0
    %v114 = vsel %vm94, %v82, 0
    %v117 = vsel %vm94, %v83, 0
    %119 = vmatpush.msra.mxu0 0.0
    %120 = vmatpush.msra.mxu0 0.0
    %121 = vmatpush.msra.mxu0 0.0
    %122 = vmatpush.msra.mxu0 0.0
    %123 = vmatpush.msra.mxu0 0.0
    %124 = vmatpush.msra.mxu0 0.0
    %125 = vmatpush.msra.mxu0 0.0
    %126 = vmatpush.msra.mxu0 0.0
    %127 = vmatpush.msra.mxu0 0.0
    %128 = vmatpush.msra.mxu0 0.0
    %129 = vmatpush.msra.mxu0 0.0
    %130 = vmatpush.msra.mxu0 0.0
    %131 = vmatpush.msra.mxu0 0.0
    %132 = vmatpush.msra.mxu0 0.0
    %133 = vmatpush.msra.mxu0 %v86
    %134 = vmatpush.msra.mxu0 %v84
    %135 = vmatmul.f32.gmra.mxu0 %v96
    %v136 = vpop.f32.mrf.mxu0
    %v137 = vadd.f32 %v90, %v136
    %138 = vmatmul.f32.gmra.mxu0 %v99
    %v139 = vpop.f32.mrf.mxu0
    %v140 = vadd.f32 %v90, %v139
    %141 = vmatmul.f32.gmra.mxu0 %v102
    %v142 = vpop.f32.mrf.mxu0
    %v143 = vadd.f32 %v90, %v142
    %144 = vmatmul.f32.gmra.mxu0 %v105
    %v145 = vpop.f32.mrf.mxu0
    %v146 = vadd.f32 %v90, %v145
    %147 = vmatmul.f32.gmra.mxu0 %v108
    %v148 = vpop.f32.mrf.mxu0
    %v149 = vadd.f32 %v90, %v148
    %150 = vmatmul.f32.gmra.mxu0 %v111
    %v151 = vpop.f32.mrf.mxu0
    %v152 = vadd.f32 %v90, %v151
    %153 = vmatmul.f32.gmra.mxu0 %v114
    %v154 = vpop.f32.mrf.mxu0
    %v155 = vadd.f32 %v90, %v154
    %156 = vmatmul.f32.gmra.mxu0 %v117
    %v157 = vpop.f32.mrf.mxu0
    %v158 = vadd.f32 %v90, %v157
    %159 = vdwg.mxu0
    %160 = vmatpush.msra.mxu0 0.0
    %161 = vmatpush.msra.mxu0 0.0
    %162 = vmatpush.msra.mxu0 0.0
    %163 = vmatpush.msra.mxu0 0.0
    %164 = vmatpush.msra.mxu0 0.0
    %165 = vmatpush.msra.mxu0 0.0
    %166 = vmatpush.msra.mxu0 0.0
    %167 = vmatpush.msra.mxu0 0.0
    %168 = vmatpush.msra.mxu0 0.0
    %169 = vmatpush.msra.mxu0 0.0
    %170 = vmatpush.msra.mxu0 0.0
    %171 = vmatpush.msra.mxu0 0.0
    %172 = vmatpush.msra.mxu0 0.0
    %173 = vmatpush.msra.mxu0 0.0
    %174 = vmatpush.msra.mxu0 %v87
    %175 = vmatpush.msra.mxu0 %v85
    %176 = vmatmul.f32.gmra.mxu0 %v96
    %v177 = vpop.f32.mrf.mxu0
    %v178 = vadd.f32 %v91, %v177
    %179 = vmatmul.f32.gmra.mxu0 %v99
    %v180 = vpop.f32.mrf.mxu0
    %v181 = vadd.f32 %v91, %v180
    %182 = vmatmul.f32.gmra.mxu0 %v102
    %v183 = vpop.f32.mrf.mxu0
    %v184 = vadd.f32 %v91, %v183
    %185 = vmatmul.f32.gmra.mxu0 %v105
    %v186 = vpop.f32.mrf.mxu0
    %v187 = vadd.f32 %v91, %v186
    %188 = vmatmul.f32.gmra.mxu0 %v108
    %v189 = vpop.f32.mrf.mxu0
    %v190 = vadd.f32 %v91, %v189
    %191 = vmatmul.f32.gmra.mxu0 %v111
    %v192 = vpop.f32.mrf.mxu0
    %v193 = vadd.f32 %v91, %v192
    %194 = vmatmul.f32.gmra.mxu0 %v114
    %v195 = vpop.f32.mrf.mxu0
    %v196 = vadd.f32 %v91, %v195
    %197 = vmatmul.f32.gmra.mxu0 %v117
    %v198 = vpop.f32.mrf.mxu0
    %v199 = vadd.f32 %v91, %v198
    %200 = vdwg.mxu0
    %201 = vst [vmem:[#allocation4] sm:$0xff] %v137
    %202 = vst [vmem:[#allocation4 + $0x8] sm:$0xff] %v178
    %203 = vst [vmem:[#allocation4 + $0x10] sm:$0xff] %v140
    %204 = vst [vmem:[#allocation4 + $0x18] sm:$0xff] %v181
    %205 = vst [vmem:[#allocation4 + $0x20] sm:$0xff] %v143
    %206 = vst [vmem:[#allocation4 + $0x28] sm:$0xff] %v184
    %207 = vst [vmem:[#allocation4 + $0x30] sm:$0xff] %v146
    %208 = vst [vmem:[#allocation4 + $0x38] sm:$0xff] %v187
    %209 = vst [vmem:[#allocation4 + $0x40] sm:$0xff] %v149
    %210 = vst [vmem:[#allocation4 + $0x48] sm:$0xff] %v190
    %211 = vst [vmem:[#allocation4 + $0x50] sm:$0xff] %v152
    %212 = vst [vmem:[#allocation4 + $0x58] sm:$0xff] %v193
    %213 = vst [vmem:[#allocation4 + $0x60] sm:$0xff] %v155
    %214 = vst [vmem:[#allocation4 + $0x68] sm:$0xff] %v196
    %215 = vst [vmem:[#allocation4 + $0x70] sm:$0xff] %v158
    %216 = vst [vmem:[#allocation4 + $0x78] sm:$0xff] %v199
    %v217 = vld [vmem:[%s2] sm:$0xff]
    %v218 = vld [vmem:[%s2 + $0x8] sm:$0xff]
    %v219 = vld [vmem:[%s2 + $0x10] sm:$0xff]
    %v220 = vld [vmem:[%s2 + $0x18] sm:$0xff]
    %v221 = vld [vmem:[%s2 + $0x20] sm:$0xff]
    %v222 = vld [vmem:[%s2 + $0x28] sm:$0xff]
    %v223 = vld [vmem:[%s2 + $0x30] sm:$0xff]
    %v224 = vld [vmem:[%s2 + $0x38] sm:$0xff]
    %v225 = vld [vmem:[%s2 + $0x40] sm:$0xff]
    %v226 = vld [vmem:[%s2 + $0x48] sm:$0xff]
    %v227 = vld [vmem:[%s2 + $0x50] sm:$0xff]
    %v228 = vld [vmem:[%s2 + $0x58] sm:$0xff]
    %v229 = vld [vmem:[%s2 + $0x60] sm:$0xff]
    %v230 = vld [vmem:[%s2 + $0x68] sm:$0xff]
    %v231 = vld [vmem:[%s2 + $0x70] sm:$0xff]
    %v232 = vld [vmem:[%s2 + $0x78] sm:$0xff]
    %vm233 = vcmask 523264
    %v235 = vsel %vm233, 0.0, 0
    %237 = vmatpush.msra.mxu0 0.0
    %238 = vmatpush.msra.mxu0 0.0
    %239 = vmatpush.msra.mxu0 0.0
    %240 = vmatpush.msra.mxu0 0.0
    %241 = vmatpush.msra.mxu0 0.0
    %242 = vmatpush.msra.mxu0 0.0
    %243 = vmatpush.msra.mxu0 0.0
    %244 = vmatpush.msra.mxu0 0.0
    %245 = vmatpush.msra.mxu0 %v231
    %246 = vmatpush.msra.mxu0 %v229
    %247 = vmatpush.msra.mxu0 %v227
    %248 = vmatpush.msra.mxu0 %v225
    %249 = vmatpush.msra.mxu0 %v223
    %250 = vmatpush.msra.mxu0 %v221
    %251 = vmatpush.msra.mxu0 %v219
    %252 = vmatpush.msra.mxu0 %v217
    %253 = vmatmul.f32.gmra.mxu0 %v235
    %v254 = vpop.f32.mrf.mxu0
    %v255 = vadd.f32 0.0, %v254
    %256 = vdwg.mxu0
    %257 = vmatpush.msra.mxu0 0.0
    %258 = vmatpush.msra.mxu0 0.0
    %259 = vmatpush.msra.mxu0 0.0
    %260 = vmatpush.msra.mxu0 0.0
    %261 = vmatpush.msra.mxu0 0.0
    %262 = vmatpush.msra.mxu0 0.0
    %263 = vmatpush.msra.mxu0 0.0
    %264 = vmatpush.msra.mxu0 0.0
    %265 = vmatpush.msra.mxu0 %v232
    %266 = vmatpush.msra.mxu0 %v230
    %267 = vmatpush.msra.mxu0 %v228
    %268 = vmatpush.msra.mxu0 %v226
    %269 = vmatpush.msra.mxu0 %v224
    %270 = vmatpush.msra.mxu0 %v222
    %271 = vmatpush.msra.mxu0 %v220
    %272 = vmatpush.msra.mxu0 %v218
    %273 = vmatmul.f32.gmra.mxu0 %v235
    %v274 = vpop.f32.mrf.mxu0
    %v275 = vadd.f32 0.0, %v274
    %276 = vdwg.mxu0
    %s277 = smul.u32 0, 2
    %s278 = smul.addr %s277, 8
    %s279 = scalar_lea.vmem [#allocation4], %s278
    %v280 = vld [vmem:[%s279] sm:$0xff]
    %v281 = vadd.f32 %v255, %v280
    %s282 = smul.u32 7, 2
    %s283 = smul.addr %s282, 8
    %s284 = scalar_lea.vmem [#allocation4], %s283
    %v285 = vld [vmem:[%s284 + $0x8] sm:$0xff]
    %v286 = vadd.f32 %v275, %v285
    %v287 = vlaneseq
    %v288 = vand.u32 %v287, 127
    %vm289 = vcmp.ge.s32.totalorder %v288, 64
    %vm290 = vcmp.lt.s32.totalorder %v288, 96
    %vm291 = vmand %vm289, %vm290
    %v292 = vmul.f32 %v281, 0.5
    %v293 = vtanh.pop %v292
    %v294 = vadd.f32 %v293, 1.0
    %v295 = vmul.f32 %v294, 0.5
    %v296 = vtanh.pop %v281
    %v297 = vsel %vm291, %v296, %v295
    %v298 = vmul.f32 %v297, 0.0
    %300 = vrot.lane.b32.xlu0 %v297, 64
    %v301 = vpop.permute.xlu0 %300
    %v303 = vmul.f32 %v297, %v301
    %305 = vrot.lane.b32.xlu0 %v303, 32
    %v306 = vpop.permute.xlu0 %305
    %v308 = vadd.f32 %v298, %v306
    %v309 = vtanh.pop %v308
    %311 = vrot.lane.b32.xlu0 %v309, 64
    %v312 = vpop.permute.xlu0 %311
    %v314 = vmul.f32 %v297, %v312
    %v315 = vmul.f32 %v286, 0.5
    %v316 = vtanh.pop %v315
    %v317 = vadd.f32 %v316, 1.0
    %v318 = vmul.f32 %v317, 0.5
    %v319 = vtanh.pop %v286
    %v320 = vsel %vm291, %v319, %v318
    %v321 = vmul.f32 %v320, 0.0
    %323 = vrot.lane.b32.xlu0 %v320, 64
    %v324 = vpop.permute.xlu0 %323
    %v326 = vmul.f32 %v320, %v324
    %328 = vrot.lane.b32.xlu0 %v326, 32
    %v329 = vpop.permute.xlu0 %328
    %v331 = vadd.f32 %v321, %v329
    %v332 = vtanh.pop %v331
    %334 = vrot.lane.b32.xlu0 %v332, 64
    %v335 = vpop.permute.xlu0 %334
    %v337 = vmul.f32 %v320, %v335
    %339 = vrot.lane.b32.xlu0 %v314, 32
    %v340 = vpop.permute.xlu0 %339
    %vm342 = vcmask 261120
    %343 = vst.msk [vmem:[#allocation2] sm:$0xff] %vm342, %v340
    %345 = vrot.lane.b32.xlu0 %v337, 32
    %v346 = vpop.permute.xlu0 %345
    %s348 = scalar_lea.vmem [#allocation3], 56
    %349 = vst.msk [vmem:[%s348] sm:$0xff] %vm342, %v346
    %350 = vrot.lane.b32.xlu0 %v337, 64
    %v351 = vpop.permute.xlu0 %350
    %v353 = vsel %vm342, %v340, %v351
    %v355 = vsel %vm233, %v353, 0
    %357 = vmatpush.msra.mxu0 0.0
    %358 = vmatpush.msra.mxu0 0.0
    %359 = vmatpush.msra.mxu0 0.0
    %360 = vmatpush.msra.mxu0 0.0
    %361 = vmatpush.msra.mxu0 0.0
    %362 = vmatpush.msra.mxu0 0.0
    %363 = vmatpush.msra.mxu0 0.0
    %364 = vmatpush.msra.mxu0 0.0
    %365 = vmatpush.msra.mxu0 %v231
    %366 = vmatpush.msra.mxu0 %v229
    %367 = vmatpush.msra.mxu0 %v227
    %368 = vmatpush.msra.mxu0 %v225
    %369 = vmatpush.msra.mxu0 %v223
    %370 = vmatpush.msra.mxu0 %v221
    %371 = vmatpush.msra.mxu0 %v219
    %372 = vmatpush.msra.mxu0 %v217
    %373 = vmatmul.f32.gmra.mxu0 %v355
    %v374 = vpop.f32.mrf.mxu0
    %v375 = vadd.f32 0.0, %v374
    %376 = vdwg.mxu0
    %377 = vmatpush.msra.mxu0 0.0
    %378 = vmatpush.msra.mxu0 0.0
    %379 = vmatpush.msra.mxu0 0.0
    %380 = vmatpush.msra.mxu0 0.0
    %381 = vmatpush.msra.mxu0 0.0
    %382 = vmatpush.msra.mxu0 0.0
    %383 = vmatpush.msra.mxu0 0.0
    %384 = vmatpush.msra.mxu0 0.0
    %385 = vmatpush.msra.mxu0 %v232
    %386 = vmatpush.msra.mxu0 %v230
    %387 = vmatpush.msra.mxu0 %v228
    %388 = vmatpush.msra.mxu0 %v226
    %389 = vmatpush.msra.mxu0 %v224
    %390 = vmatpush.msra.mxu0 %v222
    %391 = vmatpush.msra.mxu0 %v220
    %392 = vmatpush.msra.mxu0 %v218
    %393 = vmatmul.f32.gmra.mxu0 %v355
    %v394 = vpop.f32.mrf.mxu0
    %v395 = vadd.f32 0.0, %v394
    %396 = vdwg.mxu0
    %s397 = smul.u32 1, 2
    %s398 = smul.addr %s397, 8
    %s399 = scalar_lea.vmem [#allocation4], %s398
    %v400 = vld [vmem:[%s399] sm:$0xff]
    %v401 = vadd.f32 %v375, %v400
    %s402 = smul.u32 6, 2
    %s403 = smul.addr %s402, 8
    %s404 = scalar_lea.vmem [#allocation4], %s403
    %v405 = vld [vmem:[%s404 + $0x8] sm:$0xff]
    %v406 = vadd.f32 %v395, %v405
    %v407 = vmul.f32 %v401, 0.5
    %v408 = vtanh.pop %v407
    %v409 = vadd.f32 %v408, 1.0
    %v410 = vmul.f32 %v409, 0.5
    %v411 = vtanh.pop %v401
    %v412 = vsel %vm291, %v411, %v410
    %v413 = vmul.f32 %v412, %v308
    %415 = vrot.lane.b32.xlu0 %v412, 64
    %v416 = vpop.permute.xlu0 %415
    %v418 = vmul.f32 %v412, %v416
    %420 = vrot.lane.b32.xlu0 %v418, 32
    %v421 = vpop.permute.xlu0 %420
    %v423 = vadd.f32 %v413, %v421
    %v424 = vtanh.pop %v423
    %426 = vrot.lane.b32.xlu0 %v424, 64
    %v427 = vpop.permute.xlu0 %426
    %v429 = vmul.f32 %v412, %v427
    %v430 = vmul.f32 %v406, 0.5
    %v431 = vtanh.pop %v430
    %v432 = vadd.f32 %v431, 1.0
    %v433 = vmul.f32 %v432, 0.5
    %v434 = vtanh.pop %v406
    %v435 = vsel %vm291, %v434, %v433
    %v436 = vmul.f32 %v435, %v331
    %438 = vrot.lane.b32.xlu0 %v435, 64
    %v439 = vpop.permute.xlu0 %438
    %v441 = vmul.f32 %v435, %v439
    %443 = vrot.lane.b32.xlu0 %v441, 32
    %v444 = vpop.permute.xlu0 %443
    %v446 = vadd.f32 %v436, %v444
    %v447 = vtanh.pop %v446
    %449 = vrot.lane.b32.xlu0 %v447, 64
    %v450 = vpop.permute.xlu0 %449
    %v452 = vmul.f32 %v435, %v450
    %454 = vrot.lane.b32.xlu0 %v429, 32
    %v455 = vpop.permute.xlu0 %454
    %s457 = scalar_lea.vmem [#allocation2], 8
    %458 = vst.msk [vmem:[%s457] sm:$0xff] %vm342, %v455
    %460 = vrot.lane.b32.xlu0 %v452, 32
    %v461 = vpop.permute.xlu0 %460
    %s463 = scalar_lea.vmem [#allocation3], 48
    %464 = vst.msk [vmem:[%s463] sm:$0xff] %vm342, %v461
    %465 = vrot.lane.b32.xlu0 %v452, 64
    %v466 = vpop.permute.xlu0 %465
    %v468 = vsel %vm342, %v455, %v466
    %v470 = vsel %vm233, %v468, 0
    %472 = vmatpush.msra.mxu0 0.0
    %473 = vmatpush.msra.mxu0 0.0
    %474 = vmatpush.msra.mxu0 0.0
    %475 = vmatpush.msra.mxu0 0.0
    %476 = vmatpush.msra.mxu0 0.0
    %477 = vmatpush.msra.mxu0 0.0
    %478 = vmatpush.msra.mxu0 0.0
    %479 = vmatpush.msra.mxu0 0.0
    %480 = vmatpush.msra.mxu0 %v231
    %481 = vmatpush.msra.mxu0 %v229
    %482 = vmatpush.msra.mxu0 %v227
    %483 = vmatpush.msra.mxu0 %v225
    %484 = vmatpush.msra.mxu0 %v223
    %485 = vmatpush.msra.mxu0 %v221
    %486 = vmatpush.msra.mxu0 %v219
    %487 = vmatpush.msra.mxu0 %v217
    %488 = vmatmul.f32.gmra.mxu0 %v470
    %v489 = vpop.f32.mrf.mxu0
    %v490 = vadd.f32 0.0, %v489
    %491 = vdwg.mxu0
    %492 = vmatpush.msra.mxu0 0.0
    %493 = vmatpush.msra.mxu0 0.0
    %494 = vmatpush.msra.mxu0 0.0
    %495 = vmatpush.msra.mxu0 0.0
    %496 = vmatpush.msra.mxu0 0.0
    %497 = vmatpush.msra.mxu0 0.0
    %498 = vmatpush.msra.mxu0 0.0
    %499 = vmatpush.msra.mxu0 0.0
    %500 = vmatpush.msra.mxu0 %v232
    %501 = vmatpush.msra.mxu0 %v230
    %502 = vmatpush.msra.mxu0 %v228
    %503 = vmatpush.msra.mxu0 %v226
    %504 = vmatpush.msra.mxu0 %v224
    %505 = vmatpush.msra.mxu0 %v222
    %506 = vmatpush.msra.mxu0 %v220
    %507 = vmatpush.msra.mxu0 %v218
    %508 = vmatmul.f32.gmra.mxu0 %v470
    %v509 = vpop.f32.mrf.mxu0
    %v510 = vadd.f32 0.0, %v509
    %511 = vdwg.mxu0
    %s512 = smul.u32 2, 2
    %s513 = smul.addr %s512, 8
    %s514 = scalar_lea.vmem [#allocation4], %s513
    %v515 = vld [vmem:[%s514] sm:$0xff]
    %v516 = vadd.f32 %v490, %v515
    %s517 = smul.u32 5, 2
    %s518 = smul.addr %s517, 8
    %s519 = scalar_lea.vmem [#allocation4], %s518
    %v520 = vld [vmem:[%s519 + $0x8] sm:$0xff]
    %v521 = vadd.f32 %v510, %v520
    %v522 = vmul.f32 %v516, 0.5
    %v523 = vtanh.pop %v522
    %v524 = vadd.f32 %v523, 1.0
    %v525 = vmul.f32 %v524, 0.5
    %v526 = vtanh.pop %v516
    %v527 = vsel %vm291, %v526, %v525
    %v528 = vmul.f32 %v527, %v423
    %530 = vrot.lane.b32.xlu0 %v527, 64
    %v531 = vpop.permute.xlu0 %530
    %v533 = vmul.f32 %v527, %v531
    %535 = vrot.lane.b32.xlu0 %v533, 32
    %v536 = vpop.permute.xlu0 %535
    %v538 = vadd.f32 %v528, %v536
    %v539 = vtanh.pop %v538
    %541 = vrot.lane.b32.xlu0 %v539, 64
    %v542 = vpop.permute.xlu0 %541
    %v544 = vmul.f32 %v527, %v542
    %v545 = vmul.f32 %v521, 0.5
    %v546 = vtanh.pop %v545
    %v547 = vadd.f32 %v546, 1.0
    %v548 = vmul.f32 %v547, 0.5
    %v549 = vtanh.pop %v521
    %v550 = vsel %vm291, %v549, %v548
    %v551 = vmul.f32 %v550, %v446
    %553 = vrot.lane.b32.xlu0 %v550, 64
    %v554 = vpop.permute.xlu0 %553
    %v556 = vmul.f32 %v550, %v554
    %558 = vrot.lane.b32.xlu0 %v556, 32
    %v559 = vpop.permute.xlu0 %558
    %v561 = vadd.f32 %v551, %v559
    %v562 = vtanh.pop %v561
    %564 = vrot.lane.b32.xlu0 %v562, 64
    %v565 = vpop.permute.xlu0 %564
    %v567 = vmul.f32 %v550, %v565
    %569 = vrot.lane.b32.xlu0 %v544, 32
    %v570 = vpop.permute.xlu0 %569
    %s572 = scalar_lea.vmem [#allocation2], 16
    %573 = vst.msk [vmem:[%s572] sm:$0xff] %vm342, %v570
    %575 = vrot.lane.b32.xlu0 %v567, 32
    %v576 = vpop.permute.xlu0 %575
    %s578 = scalar_lea.vmem [#allocation3], 40
    %579 = vst.msk [vmem:[%s578] sm:$0xff] %vm342, %v576
    %580 = vrot.lane.b32.xlu0 %v567, 64
    %v581 = vpop.permute.xlu0 %580
    %v583 = vsel %vm342, %v570, %v581
    %v585 = vsel %vm233, %v583, 0
    %587 = vmatpush.msra.mxu0 0.0
    %588 = vmatpush.msra.mxu0 0.0
    %589 = vmatpush.msra.mxu0 0.0
    %590 = vmatpush.msra.mxu0 0.0
    %591 = vmatpush.msra.mxu0 0.0
    %592 = vmatpush.msra.mxu0 0.0
    %593 = vmatpush.msra.mxu0 0.0
    %594 = vmatpush.msra.mxu0 0.0
    %595 = vmatpush.msra.mxu0 %v231
    %596 = vmatpush.msra.mxu0 %v229
    %597 = vmatpush.msra.mxu0 %v227
    %598 = vmatpush.msra.mxu0 %v225
    %599 = vmatpush.msra.mxu0 %v223
    %600 = vmatpush.msra.mxu0 %v221
    %601 = vmatpush.msra.mxu0 %v219
    %602 = vmatpush.msra.mxu0 %v217
    %603 = vmatmul.f32.gmra.mxu0 %v585
    %v604 = vpop.f32.mrf.mxu0
    %v605 = vadd.f32 0.0, %v604
    %606 = vdwg.mxu0
    %607 = vmatpush.msra.mxu0 0.0
    %608 = vmatpush.msra.mxu0 0.0
    %609 = vmatpush.msra.mxu0 0.0
    %610 = vmatpush.msra.mxu0 0.0
    %611 = vmatpush.msra.mxu0 0.0
    %612 = vmatpush.msra.mxu0 0.0
    %613 = vmatpush.msra.mxu0 0.0
    %614 = vmatpush.msra.mxu0 0.0
    %615 = vmatpush.msra.mxu0 %v232
    %616 = vmatpush.msra.mxu0 %v230
    %617 = vmatpush.msra.mxu0 %v228
    %618 = vmatpush.msra.mxu0 %v226
    %619 = vmatpush.msra.mxu0 %v224
    %620 = vmatpush.msra.mxu0 %v222
    %621 = vmatpush.msra.mxu0 %v220
    %622 = vmatpush.msra.mxu0 %v218
    %623 = vmatmul.f32.gmra.mxu0 %v585
    %v624 = vpop.f32.mrf.mxu0
    %v625 = vadd.f32 0.0, %v624
    %626 = vdwg.mxu0
    %s627 = smul.u32 3, 2
    %s628 = smul.addr %s627, 8
    %s629 = scalar_lea.vmem [#allocation4], %s628
    %v630 = vld [vmem:[%s629] sm:$0xff]
    %v631 = vadd.f32 %v605, %v630
    %s632 = smul.u32 4, 2
    %s633 = smul.addr %s632, 8
    %s634 = scalar_lea.vmem [#allocation4], %s633
    %v635 = vld [vmem:[%s634 + $0x8] sm:$0xff]
    %v636 = vadd.f32 %v625, %v635
    %v637 = vmul.f32 %v631, 0.5
    %v638 = vtanh.pop %v637
    %v639 = vadd.f32 %v638, 1.0
    %v640 = vmul.f32 %v639, 0.5
    %v641 = vtanh.pop %v631
    %v642 = vsel %vm291, %v641, %v640
    %v643 = vmul.f32 %v642, %v538
    %645 = vrot.lane.b32.xlu0 %v642, 64
    %v646 = vpop.permute.xlu0 %645
    %v648 = vmul.f32 %v642, %v646
    %650 = vrot.lane.b32.xlu0 %v648, 32
    %v651 = vpop.permute.xlu0 %650
    %v653 = vadd.f32 %v643, %v651
    %v654 = vtanh.pop %v653
    %656 = vrot.lane.b32.xlu0 %v654, 64
    %v657 = vpop.permute.xlu0 %656
    %v659 = vmul.f32 %v642, %v657
    %v660 = vmul.f32 %v636, 0.5
    %v661 = vtanh.pop %v660
    %v662 = vadd.f32 %v661, 1.0
    %v663 = vmul.f32 %v662, 0.5
    %v664 = vtanh.pop %v636
    %v665 = vsel %vm291, %v664, %v663
    %v666 = vmul.f32 %v665, %v561
    %668 = vrot.lane.b32.xlu0 %v665, 64
    %v669 = vpop.permute.xlu0 %668
    %v671 = vmul.f32 %v665, %v669
    %673 = vrot.lane.b32.xlu0 %v671, 32
    %v674 = vpop.permute.xlu0 %673
    %v676 = vadd.f32 %v666, %v674
    %v677 = vtanh.pop %v676
    %679 = vrot.lane.b32.xlu0 %v677, 64
    %v680 = vpop.permute.xlu0 %679
    %v682 = vmul.f32 %v665, %v680
    %684 = vrot.lane.b32.xlu0 %v659, 32
    %v685 = vpop.permute.xlu0 %684
    %s687 = scalar_lea.vmem [#allocation2], 24
    %688 = vst.msk [vmem:[%s687] sm:$0xff] %vm342, %v685
    %690 = vrot.lane.b32.xlu0 %v682, 32
    %v691 = vpop.permute.xlu0 %690
    %s693 = scalar_lea.vmem [#allocation3], 32
    %694 = vst.msk [vmem:[%s693] sm:$0xff] %vm342, %v691
    %695 = vrot.lane.b32.xlu0 %v682, 64
    %v696 = vpop.permute.xlu0 %695
    %v698 = vsel %vm342, %v685, %v696
    %v700 = vsel %vm233, %v698, 0
    %702 = vmatpush.msra.mxu0 0.0
    %703 = vmatpush.msra.mxu0 0.0
    %704 = vmatpush.msra.mxu0 0.0
    %705 = vmatpush.msra.mxu0 0.0
    %706 = vmatpush.msra.mxu0 0.0
    %707 = vmatpush.msra.mxu0 0.0
    %708 = vmatpush.msra.mxu0 0.0
    %709 = vmatpush.msra.mxu0 0.0
    %710 = vmatpush.msra.mxu0 %v231
    %711 = vmatpush.msra.mxu0 %v229
    %712 = vmatpush.msra.mxu0 %v227
    %713 = vmatpush.msra.mxu0 %v225
    %714 = vmatpush.msra.mxu0 %v223
    %715 = vmatpush.msra.mxu0 %v221
    %716 = vmatpush.msra.mxu0 %v219
    %717 = vmatpush.msra.mxu0 %v217
    %718 = vmatmul.f32.gmra.mxu0 %v700
    %v719 = vpop.f32.mrf.mxu0
    %v720 = vadd.f32 0.0, %v719
    %721 = vdwg.mxu0
    %722 = vmatpush.msra.mxu0 0.0
    %723 = vmatpush.msra.mxu0 0.0
    %724 = vmatpush.msra.mxu0 0.0
    %725 = vmatpush.msra.mxu0 0.0
    %726 = vmatpush.msra.mxu0 0.0
    %727 = vmatpush.msra.mxu0 0.0
    %728 = vmatpush.msra.mxu0 0.0
    %729 = vmatpush.msra.mxu0 0.0
    %730 = vmatpush.msra.mxu0 %v232
    %731 = vmatpush.msra.mxu0 %v230
    %732 = vmatpush.msra.mxu0 %v228
    %733 = vmatpush.msra.mxu0 %v226
    %734 = vmatpush.msra.mxu0 %v224
    %735 = vmatpush.msra.mxu0 %v222
    %736 = vmatpush.msra.mxu0 %v220
    %737 = vmatpush.msra.mxu0 %v218
    %738 = vmatmul.f32.gmra.mxu0 %v700
    %v739 = vpop.f32.mrf.mxu0
    %v740 = vadd.f32 0.0, %v739
    %741 = vdwg.mxu0
    %v742 = vld [vmem:[%s634] sm:$0xff]
    %v743 = vadd.f32 %v720, %v742
    %v744 = vld [vmem:[%s629 + $0x8] sm:$0xff]
    %v745 = vadd.f32 %v740, %v744
    %v746 = vmul.f32 %v743, 0.5
    %v747 = vtanh.pop %v746
    %v748 = vadd.f32 %v747, 1.0
    %v749 = vmul.f32 %v748, 0.5
    %v750 = vtanh.pop %v743
    %v751 = vsel %vm291, %v750, %v749
    %v752 = vmul.f32 %v751, %v653
    %754 = vrot.lane.b32.xlu0 %v751, 64
    %v755 = vpop.permute.xlu0 %754
    %v757 = vmul.f32 %v751, %v755
    %759 = vrot.lane.b32.xlu0 %v757, 32
    %v760 = vpop.permute.xlu0 %759
    %v762 = vadd.f32 %v752, %v760
    %v763 = vtanh.pop %v762
    %765 = vrot.lane.b32.xlu0 %v763, 64
    %v766 = vpop.permute.xlu0 %765
    %v768 = vmul.f32 %v751, %v766
    %v769 = vmul.f32 %v745, 0.5
    %v770 = vtanh.pop %v769
    %v771 = vadd.f32 %v770, 1.0
    %v772 = vmul.f32 %v771, 0.5
    %v773 = vtanh.pop %v745
    %v774 = vsel %vm291, %v773, %v772
    %v775 = vmul.f32 %v774, %v676
    %777 = vrot.lane.b32.xlu0 %v774, 64
    %v778 = vpop.permute.xlu0 %777
    %v780 = vmul.f32 %v774, %v778
    %782 = vrot.lane.b32.xlu0 %v780, 32
    %v783 = vpop.permute.xlu0 %782
    %v785 = vadd.f32 %v775, %v783
    %v786 = vtanh.pop %v785
    %788 = vrot.lane.b32.xlu0 %v786, 64
    %v789 = vpop.permute.xlu0 %788
    %v791 = vmul.f32 %v774, %v789
    %793 = vrot.lane.b32.xlu0 %v768, 32
    %v794 = vpop.permute.xlu0 %793
    %s796 = scalar_lea.vmem [#allocation2], 32
    %797 = vst.msk [vmem:[%s796] sm:$0xff] %vm342, %v794
    %799 = vrot.lane.b32.xlu0 %v791, 32
    %v800 = vpop.permute.xlu0 %799
    %s802 = scalar_lea.vmem [#allocation3], 24
    %803 = vst.msk [vmem:[%s802] sm:$0xff] %vm342, %v800
    %804 = vrot.lane.b32.xlu0 %v791, 64
    %v805 = vpop.permute.xlu0 %804
    %v807 = vsel %vm342, %v794, %v805
    %v809 = vsel %vm233, %v807, 0
    %811 = vmatpush.msra.mxu0 0.0
    %812 = vmatpush.msra.mxu0 0.0
    %813 = vmatpush.msra.mxu0 0.0
    %814 = vmatpush.msra.mxu0 0.0
    %815 = vmatpush.msra.mxu0 0.0
    %816 = vmatpush.msra.mxu0 0.0
    %817 = vmatpush.msra.mxu0 0.0
    %818 = vmatpush.msra.mxu0 0.0
    %819 = vmatpush.msra.mxu0 %v231
    %820 = vmatpush.msra.mxu0 %v229
    %821 = vmatpush.msra.mxu0 %v227
    %822 = vmatpush.msra.mxu0 %v225
    %823 = vmatpush.msra.mxu0 %v223
    %824 = vmatpush.msra.mxu0 %v221
    %825 = vmatpush.msra.mxu0 %v219
    %826 = vmatpush.msra.mxu0 %v217
    %827 = vmatmul.f32.gmra.mxu0 %v809
    %v828 = vpop.f32.mrf.mxu0
    %v829 = vadd.f32 0.0, %v828
    %830 = vdwg.mxu0
    %831 = vmatpush.msra.mxu0 0.0
    %832 = vmatpush.msra.mxu0 0.0
    %833 = vmatpush.msra.mxu0 0.0
    %834 = vmatpush.msra.mxu0 0.0
    %835 = vmatpush.msra.mxu0 0.0
    %836 = vmatpush.msra.mxu0 0.0
    %837 = vmatpush.msra.mxu0 0.0
    %838 = vmatpush.msra.mxu0 0.0
    %839 = vmatpush.msra.mxu0 %v232
    %840 = vmatpush.msra.mxu0 %v230
    %841 = vmatpush.msra.mxu0 %v228
    %842 = vmatpush.msra.mxu0 %v226
    %843 = vmatpush.msra.mxu0 %v224
    %844 = vmatpush.msra.mxu0 %v222
    %845 = vmatpush.msra.mxu0 %v220
    %846 = vmatpush.msra.mxu0 %v218
    %847 = vmatmul.f32.gmra.mxu0 %v809
    %v848 = vpop.f32.mrf.mxu0
    %v849 = vadd.f32 0.0, %v848
    %850 = vdwg.mxu0
    %v851 = vld [vmem:[%s519] sm:$0xff]
    %v852 = vadd.f32 %v829, %v851
    %v853 = vld [vmem:[%s514 + $0x8] sm:$0xff]
    %v854 = vadd.f32 %v849, %v853
    %v855 = vmul.f32 %v852, 0.5
    %v856 = vtanh.pop %v855
    %v857 = vadd.f32 %v856, 1.0
    %v858 = vmul.f32 %v857, 0.5
    %v859 = vtanh.pop %v852
    %v860 = vsel %vm291, %v859, %v858
    %v861 = vmul.f32 %v860, %v762
    %863 = vrot.lane.b32.xlu0 %v860, 64
    %v864 = vpop.permute.xlu0 %863
    %v866 = vmul.f32 %v860, %v864
    %868 = vrot.lane.b32.xlu0 %v866, 32
    %v869 = vpop.permute.xlu0 %868
    %v871 = vadd.f32 %v861, %v869
    %v872 = vtanh.pop %v871
    %874 = vrot.lane.b32.xlu0 %v872, 64
    %v875 = vpop.permute.xlu0 %874
    %v877 = vmul.f32 %v860, %v875
    %v878 = vmul.f32 %v854, 0.5
    %v879 = vtanh.pop %v878
    %v880 = vadd.f32 %v879, 1.0
    %v881 = vmul.f32 %v880, 0.5
    %v882 = vtanh.pop %v854
    %v883 = vsel %vm291, %v882, %v881
    %v884 = vmul.f32 %v883, %v785
    %886 = vrot.lane.b32.xlu0 %v883, 64
    %v887 = vpop.permute.xlu0 %886
    %v889 = vmul.f32 %v883, %v887
    %891 = vrot.lane.b32.xlu0 %v889, 32
    %v892 = vpop.permute.xlu0 %891
    %v894 = vadd.f32 %v884, %v892
    %v895 = vtanh.pop %v894
    %897 = vrot.lane.b32.xlu0 %v895, 64
    %v898 = vpop.permute.xlu0 %897
    %v900 = vmul.f32 %v883, %v898
    %902 = vrot.lane.b32.xlu0 %v877, 32
    %v903 = vpop.permute.xlu0 %902
    %s905 = scalar_lea.vmem [#allocation2], 40
    %906 = vst.msk [vmem:[%s905] sm:$0xff] %vm342, %v903
    %908 = vrot.lane.b32.xlu0 %v900, 32
    %v909 = vpop.permute.xlu0 %908
    %s911 = scalar_lea.vmem [#allocation3], 16
    %912 = vst.msk [vmem:[%s911] sm:$0xff] %vm342, %v909
    %913 = vrot.lane.b32.xlu0 %v900, 64
    %v914 = vpop.permute.xlu0 %913
    %v916 = vsel %vm342, %v903, %v914
    %v918 = vsel %vm233, %v916, 0
    %920 = vmatpush.msra.mxu0 0.0
    %921 = vmatpush.msra.mxu0 0.0
    %922 = vmatpush.msra.mxu0 0.0
    %923 = vmatpush.msra.mxu0 0.0
    %924 = vmatpush.msra.mxu0 0.0
    %925 = vmatpush.msra.mxu0 0.0
    %926 = vmatpush.msra.mxu0 0.0
    %927 = vmatpush.msra.mxu0 0.0
    %928 = vmatpush.msra.mxu0 %v231
    %929 = vmatpush.msra.mxu0 %v229
    %930 = vmatpush.msra.mxu0 %v227
    %931 = vmatpush.msra.mxu0 %v225
    %932 = vmatpush.msra.mxu0 %v223
    %933 = vmatpush.msra.mxu0 %v221
    %934 = vmatpush.msra.mxu0 %v219
    %935 = vmatpush.msra.mxu0 %v217
    %936 = vmatmul.f32.gmra.mxu0 %v918
    %v937 = vpop.f32.mrf.mxu0
    %v938 = vadd.f32 0.0, %v937
    %939 = vdwg.mxu0
    %940 = vmatpush.msra.mxu0 0.0
    %941 = vmatpush.msra.mxu0 0.0
    %942 = vmatpush.msra.mxu0 0.0
    %943 = vmatpush.msra.mxu0 0.0
    %944 = vmatpush.msra.mxu0 0.0
    %945 = vmatpush.msra.mxu0 0.0
    %946 = vmatpush.msra.mxu0 0.0
    %947 = vmatpush.msra.mxu0 0.0
    %948 = vmatpush.msra.mxu0 %v232
    %949 = vmatpush.msra.mxu0 %v230
    %950 = vmatpush.msra.mxu0 %v228
    %951 = vmatpush.msra.mxu0 %v226
    %952 = vmatpush.msra.mxu0 %v224
    %953 = vmatpush.msra.mxu0 %v222
    %954 = vmatpush.msra.mxu0 %v220
    %955 = vmatpush.msra.mxu0 %v218
    %956 = vmatmul.f32.gmra.mxu0 %v918
    %v957 = vpop.f32.mrf.mxu0
    %v958 = vadd.f32 0.0, %v957
    %959 = vdwg.mxu0
    %v960 = vld [vmem:[%s404] sm:$0xff]
    %v961 = vadd.f32 %v938, %v960
    %v962 = vld [vmem:[%s399 + $0x8] sm:$0xff]
    %v963 = vadd.f32 %v958, %v962
    %v964 = vmul.f32 %v961, 0.5
    %v965 = vtanh.pop %v964
    %v966 = vadd.f32 %v965, 1.0
    %v967 = vmul.f32 %v966, 0.5
    %v968 = vtanh.pop %v961
    %v969 = vsel %vm291, %v968, %v967
    %v970 = vmul.f32 %v969, %v871
    %972 = vrot.lane.b32.xlu0 %v969, 64
    %v973 = vpop.permute.xlu0 %972
    %v975 = vmul.f32 %v969, %v973
    %977 = vrot.lane.b32.xlu0 %v975, 32
    %v978 = vpop.permute.xlu0 %977
    %v980 = vadd.f32 %v970, %v978
    %v981 = vtanh.pop %v980
    %983 = vrot.lane.b32.xlu0 %v981, 64
    %v984 = vpop.permute.xlu0 %983
    %v986 = vmul.f32 %v969, %v984
    %v987 = vmul.f32 %v963, 0.5
    %v988 = vtanh.pop %v987
    %v989 = vadd.f32 %v988, 1.0
    %v990 = vmul.f32 %v989, 0.5
    %v991 = vtanh.pop %v963
    %v992 = vsel %vm291, %v991, %v990
    %v993 = vmul.f32 %v992, %v894
    %995 = vrot.lane.b32.xlu0 %v992, 64
    %v996 = vpop.permute.xlu0 %995
    %v998 = vmul.f32 %v992, %v996
    %1000 = vrot.lane.b32.xlu0 %v998, 32
    %v1001 = vpop.permute.xlu0 %1000
    %v1003 = vadd.f32 %v993, %v1001
    %v1004 = vtanh.pop %v1003
    %1006 = vrot.lane.b32.xlu0 %v1004, 64
    %v1007 = vpop.permute.xlu0 %1006
    %v1009 = vmul.f32 %v992, %v1007
    %1011 = vrot.lane.b32.xlu0 %v986, 32
    %v1012 = vpop.permute.xlu0 %1011
    %s1014 = scalar_lea.vmem [#allocation2], 48
    %1015 = vst.msk [vmem:[%s1014] sm:$0xff] %vm342, %v1012
    %1017 = vrot.lane.b32.xlu0 %v1009, 32
    %v1018 = vpop.permute.xlu0 %1017
    %s1020 = scalar_lea.vmem [#allocation3], 8
    %1021 = vst.msk [vmem:[%s1020] sm:$0xff] %vm342, %v1018
    %1022 = vrot.lane.b32.xlu0 %v1009, 64
    %v1023 = vpop.permute.xlu0 %1022
    %v1025 = vsel %vm342, %v1012, %v1023
    %v1027 = vsel %vm233, %v1025, 0
    %1029 = vmatpush.msra.mxu0 0.0
    %1030 = vmatpush.msra.mxu0 0.0
    %1031 = vmatpush.msra.mxu0 0.0
    %1032 = vmatpush.msra.mxu0 0.0
    %1033 = vmatpush.msra.mxu0 0.0
    %1034 = vmatpush.msra.mxu0 0.0
    %1035 = vmatpush.msra.mxu0 0.0
    %1036 = vmatpush.msra.mxu0 0.0
    %1037 = vmatpush.msra.mxu0 %v231
    %1038 = vmatpush.msra.mxu0 %v229
    %1039 = vmatpush.msra.mxu0 %v227
    %1040 = vmatpush.msra.mxu0 %v225
    %1041 = vmatpush.msra.mxu0 %v223
    %1042 = vmatpush.msra.mxu0 %v221
    %1043 = vmatpush.msra.mxu0 %v219
    %1044 = vmatpush.msra.mxu0 %v217
    %1045 = vmatmul.f32.gmra.mxu0 %v1027
    %v1046 = vpop.f32.mrf.mxu0
    %v1047 = vadd.f32 0.0, %v1046
    %1048 = vdwg.mxu0
    %1049 = vmatpush.msra.mxu0 0.0
    %1050 = vmatpush.msra.mxu0 0.0
    %1051 = vmatpush.msra.mxu0 0.0
    %1052 = vmatpush.msra.mxu0 0.0
    %1053 = vmatpush.msra.mxu0 0.0
    %1054 = vmatpush.msra.mxu0 0.0
    %1055 = vmatpush.msra.mxu0 0.0
    %1056 = vmatpush.msra.mxu0 0.0
    %1057 = vmatpush.msra.mxu0 %v232
    %1058 = vmatpush.msra.mxu0 %v230
    %1059 = vmatpush.msra.mxu0 %v228
    %1060 = vmatpush.msra.mxu0 %v226
    %1061 = vmatpush.msra.mxu0 %v224
    %1062 = vmatpush.msra.mxu0 %v222
    %1063 = vmatpush.msra.mxu0 %v220
    %1064 = vmatpush.msra.mxu0 %v218
    %1065 = vmatmul.f32.gmra.mxu0 %v1027
    %v1066 = vpop.f32.mrf.mxu0
    %v1067 = vadd.f32 0.0, %v1066
    %1068 = vdwg.mxu0
    %v1069 = vld [vmem:[%s284] sm:$0xff]
    %v1070 = vadd.f32 %v1047, %v1069
    %v1071 = vld [vmem:[%s279 + $0x8] sm:$0xff]
    %v1072 = vadd.f32 %v1067, %v1071
    %v1073 = vmul.f32 %v1070, 0.5
    %v1074 = vtanh.pop %v1073
    %v1075 = vadd.f32 %v1074, 1.0
    %v1076 = vmul.f32 %v1075, 0.5
    %v1077 = vtanh.pop %v1070
    %v1078 = vsel %vm291, %v1077, %v1076
    %v1079 = vmul.f32 %v1078, %v980
    %1081 = vrot.lane.b32.xlu0 %v1078, 64
    %v1082 = vpop.permute.xlu0 %1081
    %v1084 = vmul.f32 %v1078, %v1082
    %1086 = vrot.lane.b32.xlu0 %v1084, 32
    %v1087 = vpop.permute.xlu0 %1086
    %v1089 = vadd.f32 %v1079, %v1087
    %v1090 = vtanh.pop %v1089
    %1092 = vrot.lane.b32.xlu0 %v1090, 64
    %v1093 = vpop.permute.xlu0 %1092
    %v1095 = vmul.f32 %v1078, %v1093
    %v1096 = vmul.f32 %v1072, 0.5
    %v1097 = vtanh.pop %v1096
    %v1098 = vadd.f32 %v1097, 1.0
    %v1099 = vmul.f32 %v1098, 0.5
    %v1100 = vtanh.pop %v1072
    %v1101 = vsel %vm291, %v1100, %v1099
    %v1102 = vmul.f32 %v1101, %v1003
    %1104 = vrot.lane.b32.xlu0 %v1101, 64
    %v1105 = vpop.permute.xlu0 %1104
    %v1107 = vmul.f32 %v1101, %v1105
    %1109 = vrot.lane.b32.xlu0 %v1107, 32
    %v1110 = vpop.permute.xlu0 %1109
    %v1112 = vadd.f32 %v1102, %v1110
    %v1113 = vtanh.pop %v1112
    %1115 = vrot.lane.b32.xlu0 %v1113, 64
    %v1116 = vpop.permute.xlu0 %1115
    %v1118 = vmul.f32 %v1101, %v1116
    %1120 = vrot.lane.b32.xlu0 %v1095, 32
    %v1121 = vpop.permute.xlu0 %1120
    %s1123 = scalar_lea.vmem [#allocation2], 56
    %1124 = vst.msk [vmem:[%s1123] sm:$0xff] %vm342, %v1121
    %1126 = vrot.lane.b32.xlu0 %v1118, 32
    %v1127 = vpop.permute.xlu0 %1126
    %1129 = vst.msk [vmem:[#allocation3] sm:$0xff] %vm342, %v1127
    %v1130 = vld [vmem:[#allocation2] sm:$0xff]
    %v1131 = vld [vmem:[#allocation2 + $0x8] sm:$0xff]
    %v1132 = vld [vmem:[#allocation2 + $0x10] sm:$0xff]
    %v1133 = vld [vmem:[#allocation2 + $0x18] sm:$0xff]
    %v1134 = vld [vmem:[#allocation2 + $0x20] sm:$0xff]
    %v1135 = vld [vmem:[#allocation2 + $0x28] sm:$0xff]
    %v1136 = vld [vmem:[#allocation2 + $0x30] sm:$0xff]
    %v1137 = vld [vmem:[#allocation2 + $0x38] sm:$0xff]
    %v1138 = vld [vmem:[#allocation5] sm:$0xff]
    %v1139 = vld [vmem:[#allocation5 + $0x8] sm:$0xff]
    %v1140 = vld [vmem:[#allocation5 + $0x10] sm:$0xff]
    %v1141 = vld [vmem:[#allocation5 + $0x18] sm:$0xff]
    %v1142 = vld [vmem:[#allocation5 + $0x20] sm:$0xff]
    %v1143 = vld [vmem:[#allocation5 + $0x28] sm:$0xff]
    %v1144 = vld [vmem:[#allocation5 + $0x30] sm:$0xff]
    %v1145 = vld [vmem:[#allocation5 + $0x38] sm:$0xff]
    %v1146 = vld [vmem:[#allocation3] sm:$0xff]
    %v1147 = vld [vmem:[#allocation3 + $0x8] sm:$0xff]
    %v1148 = vld [vmem:[#allocation3 + $0x10] sm:$0xff]
    %v1149 = vld [vmem:[#allocation3 + $0x18] sm:$0xff]
    %v1150 = vld [vmem:[#allocation3 + $0x20] sm:$0xff]
    %v1151 = vld [vmem:[#allocation3 + $0x28] sm:$0xff]
    %v1152 = vld [vmem:[#allocation3 + $0x30] sm:$0xff]
    %v1153 = vld [vmem:[#allocation3 + $0x38] sm:$0xff]
    %v1154 = vld [vmem:[#allocation5 + $0x40] sm:$0xff]
    %v1155 = vld [vmem:[#allocation5 + $0x48] sm:$0xff]
    %v1156 = vld [vmem:[#allocation5 + $0x50] sm:$0xff]
    %v1157 = vld [vmem:[#allocation5 + $0x58] sm:$0xff]
    %v1158 = vld [vmem:[#allocation5 + $0x60] sm:$0xff]
    %v1159 = vld [vmem:[#allocation5 + $0x68] sm:$0xff]
    %v1160 = vld [vmem:[#allocation5 + $0x70] sm:$0xff]
    %v1161 = vld [vmem:[#allocation5 + $0x78] sm:$0xff]
    %v1163 = vsel %vm342, %v1146, 0
    %v1166 = vsel %vm342, %v1147, 0
    %v1169 = vsel %vm342, %v1148, 0
    %v1172 = vsel %vm342, %v1149, 0
    %v1175 = vsel %vm342, %v1150, 0
    %v1178 = vsel %vm342, %v1151, 0
    %v1181 = vsel %vm342, %v1152, 0
    %v1184 = vsel %vm342, %v1153, 0
    %1186 = vmatpush.msra.mxu0 0.0
    %1187 = vmatpush.msra.mxu0 0.0
    %1188 = vmatpush.msra.mxu0 0.0
    %1189 = vmatpush.msra.mxu0 0.0
    %1190 = vmatpush.msra.mxu0 0.0
    %1191 = vmatpush.msra.mxu0 0.0
    %1192 = vmatpush.msra.mxu0 0.0
    %1193 = vmatpush.msra.mxu0 0.0
    %1194 = vmatpush.msra.mxu0 0.0
    %1195 = vmatpush.msra.mxu0 0.0
    %1196 = vmatpush.msra.mxu0 0.0
    %1197 = vmatpush.msra.mxu0 0.0
    %1198 = vmatpush.msra.mxu0 %v1160
    %1199 = vmatpush.msra.mxu0 %v1158
    %1200 = vmatpush.msra.mxu0 %v1156
    %1201 = vmatpush.msra.mxu0 %v1154
    %1202 = vmatmul.f32.gmra.mxu0 %v1163
    %v1203 = vpop.f32.mrf.mxu0
    %v1204 = vadd.f32 0.0, %v1203
    %1205 = vmatmul.f32.gmra.mxu0 %v1166
    %v1206 = vpop.f32.mrf.mxu0
    %v1207 = vadd.f32 0.0, %v1206
    %1208 = vmatmul.f32.gmra.mxu0 %v1169
    %v1209 = vpop.f32.mrf.mxu0
    %v1210 = vadd.f32 0.0, %v1209
    %1211 = vmatmul.f32.gmra.mxu0 %v1172
    %v1212 = vpop.f32.mrf.mxu0
    %v1213 = vadd.f32 0.0, %v1212
    %1214 = vmatmul.f32.gmra.mxu0 %v1175
    %v1215 = vpop.f32.mrf.mxu0
    %v1216 = vadd.f32 0.0, %v1215
    %1217 = vmatmul.f32.gmra.mxu0 %v1178
    %v1218 = vpop.f32.mrf.mxu0
    %v1219 = vadd.f32 0.0, %v1218
    %1220 = vmatmul.f32.gmra.mxu0 %v1181
    %v1221 = vpop.f32.mrf.mxu0
    %v1222 = vadd.f32 0.0, %v1221
    %1223 = vmatmul.f32.gmra.mxu0 %v1184
    %v1224 = vpop.f32.mrf.mxu0
    %v1225 = vadd.f32 0.0, %v1224
    %1226 = vdwg.mxu0
    %1227 = vmatpush.msra.mxu0 0.0
    %1228 = vmatpush.msra.mxu0 0.0
    %1229 = vmatpush.msra.mxu0 0.0
    %1230 = vmatpush.msra.mxu0 0.0
    %1231 = vmatpush.msra.mxu0 0.0
    %1232 = vmatpush.msra.mxu0 0.0
    %1233 = vmatpush.msra.mxu0 0.0
    %1234 = vmatpush.msra.mxu0 0.0
    %1235 = vmatpush.msra.mxu0 0.0
    %1236 = vmatpush.msra.mxu0 0.0
    %1237 = vmatpush.msra.mxu0 0.0
    %1238 = vmatpush.msra.mxu0 0.0
    %1239 = vmatpush.msra.mxu0 %v1161
    %1240 = vmatpush.msra.mxu0 %v1159
    %1241 = vmatpush.msra.mxu0 %v1157
    %1242 = vmatpush.msra.mxu0 %v1155
    %1243 = vmatmul.f32.gmra.mxu0 %v1163
    %v1244 = vpop.f32.mrf.mxu0
    %v1245 = vadd.f32 0.0, %v1244
    %1246 = vmatmul.f32.gmra.mxu0 %v1166
    %v1247 = vpop.f32.mrf.mxu0
    %v1248 = vadd.f32 0.0, %v1247
    %1249 = vmatmul.f32.gmra.mxu0 %v1169
    %v1250 = vpop.f32.mrf.mxu0
    %v1251 = vadd.f32 0.0, %v1250
    %1252 = vmatmul.f32.gmra.mxu0 %v1172
    %v1253 = vpop.f32.mrf.mxu0
    %v1254 = vadd.f32 0.0, %v1253
    %1255 = vmatmul.f32.gmra.mxu0 %v1175
    %v1256 = vpop.f32.mrf.mxu0
    %v1257 = vadd.f32 0.0, %v1256
    %1258 = vmatmul.f32.gmra.mxu0 %v1178
    %v1259 = vpop.f32.mrf.mxu0
    %v1260 = vadd.f32 0.0, %v1259
    %1261 = vmatmul.f32.gmra.mxu0 %v1181
    %v1262 = vpop.f32.mrf.mxu0
    %v1263 = vadd.f32 0.0, %v1262
    %1264 = vmatmul.f32.gmra.mxu0 %v1184
    %v1265 = vpop.f32.mrf.mxu0
    %v1266 = vadd.f32 0.0, %v1265
    %1267 = vdwg.mxu0
    %v1269 = vsel %vm342, %v1130, 0
    %v1272 = vsel %vm342, %v1131, 0
    %v1275 = vsel %vm342, %v1132, 0
    %v1278 = vsel %vm342, %v1133, 0
    %v1281 = vsel %vm342, %v1134, 0
    %v1284 = vsel %vm342, %v1135, 0
    %v1287 = vsel %vm342, %v1136, 0
    %v1290 = vsel %vm342, %v1137, 0
    %1292 = vmatpush.msra.mxu0 0.0
    %1293 = vmatpush.msra.mxu0 0.0
    %1294 = vmatpush.msra.mxu0 0.0
    %1295 = vmatpush.msra.mxu0 0.0
    %1296 = vmatpush.msra.mxu0 0.0
    %1297 = vmatpush.msra.mxu0 0.0
    %1298 = vmatpush.msra.mxu0 0.0
    %1299 = vmatpush.msra.mxu0 0.0
    %1300 = vmatpush.msra.mxu0 0.0
    %1301 = vmatpush.msra.mxu0 0.0
    %1302 = vmatpush.msra.mxu0 0.0
    %1303 = vmatpush.msra.mxu0 0.0
    %1304 = vmatpush.msra.mxu0 %v1144
    %1305 = vmatpush.msra.mxu0 %v1142
    %1306 = vmatpush.msra.mxu0 %v1140
    %1307 = vmatpush.msra.mxu0 %v1138
    %1308 = vmatmul.f32.gmra.mxu0 %v1269
    %v1309 = vpop.f32.mrf.mxu0
    %v1310 = vadd.f32 %v1204, %v1309
    %1311 = vmatmul.f32.gmra.mxu0 %v1272
    %v1312 = vpop.f32.mrf.mxu0
    %v1313 = vadd.f32 %v1207, %v1312
    %1314 = vmatmul.f32.gmra.mxu0 %v1275
    %v1315 = vpop.f32.mrf.mxu0
    %v1316 = vadd.f32 %v1210, %v1315
    %1317 = vmatmul.f32.gmra.mxu0 %v1278
    %v1318 = vpop.f32.mrf.mxu0
    %v1319 = vadd.f32 %v1213, %v1318
    %1320 = vmatmul.f32.gmra.mxu0 %v1281
    %v1321 = vpop.f32.mrf.mxu0
    %v1322 = vadd.f32 %v1216, %v1321
    %1323 = vmatmul.f32.gmra.mxu0 %v1284
    %v1324 = vpop.f32.mrf.mxu0
    %v1325 = vadd.f32 %v1219, %v1324
    %1326 = vmatmul.f32.gmra.mxu0 %v1287
    %v1327 = vpop.f32.mrf.mxu0
    %v1328 = vadd.f32 %v1222, %v1327
    %1329 = vmatmul.f32.gmra.mxu0 %v1290
    %v1330 = vpop.f32.mrf.mxu0
    %v1331 = vadd.f32 %v1225, %v1330
    %1332 = vdwg.mxu0
    %1333 = vmatpush.msra.mxu0 0.0
    %1334 = vmatpush.msra.mxu0 0.0
    %1335 = vmatpush.msra.mxu0 0.0
    %1336 = vmatpush.msra.mxu0 0.0
    %1337 = vmatpush.msra.mxu0 0.0
    %1338 = vmatpush.msra.mxu0 0.0
    %1339 = vmatpush.msra.mxu0 0.0
    %1340 = vmatpush.msra.mxu0 0.0
    %1341 = vmatpush.msra.mxu0 0.0
    %1342 = vmatpush.msra.mxu0 0.0
    %1343 = vmatpush.msra.mxu0 0.0
    %1344 = vmatpush.msra.mxu0 0.0
    %1345 = vmatpush.msra.mxu0 %v1145
    %1346 = vmatpush.msra.mxu0 %v1143
    %1347 = vmatpush.msra.mxu0 %v1141
    %1348 = vmatpush.msra.mxu0 %v1139
    %1349 = vmatmul.f32.gmra.mxu0 %v1269
    %v1350 = vpop.f32.mrf.mxu0
    %v1351 = vadd.f32 %v1245, %v1350
    %1352 = vmatmul.f32.gmra.mxu0 %v1272
    %v1353 = vpop.f32.mrf.mxu0
    %v1354 = vadd.f32 %v1248, %v1353
    %1355 = vmatmul.f32.gmra.mxu0 %v1275
    %v1356 = vpop.f32.mrf.mxu0
    %v1357 = vadd.f32 %v1251, %v1356
    %1358 = vmatmul.f32.gmra.mxu0 %v1278
    %v1359 = vpop.f32.mrf.mxu0
    %v1360 = vadd.f32 %v1254, %v1359
    %1361 = vmatmul.f32.gmra.mxu0 %v1281
    %v1362 = vpop.f32.mrf.mxu0
    %v1363 = vadd.f32 %v1257, %v1362
    %1364 = vmatmul.f32.gmra.mxu0 %v1284
    %v1365 = vpop.f32.mrf.mxu0
    %v1366 = vadd.f32 %v1260, %v1365
    %1367 = vmatmul.f32.gmra.mxu0 %v1287
    %v1368 = vpop.f32.mrf.mxu0
    %v1369 = vadd.f32 %v1263, %v1368
    %1370 = vmatmul.f32.gmra.mxu0 %v1290
    %v1371 = vpop.f32.mrf.mxu0
    %v1372 = vadd.f32 %v1266, %v1371
    %1373 = vdwg.mxu0
    %v1374 = vld [vmem:[%s6] sm:$0x3]
    %v1376 = vperm.slane %v1374, 0
    %v1377 = vperm.slane %v1374, 1
    %v1380 = vadd.f32 %v1310, %v1376
    %v1381 = vadd.f32 %v1351, %v1377
    %v1382 = vadd.f32 %v1313, %v1376
    %v1383 = vadd.f32 %v1354, %v1377
    %v1384 = vadd.f32 %v1316, %v1376
    %v1385 = vadd.f32 %v1357, %v1377
    %v1386 = vadd.f32 %v1319, %v1376
    %v1387 = vadd.f32 %v1360, %v1377
    %v1388 = vadd.f32 %v1322, %v1376
    %v1389 = vadd.f32 %v1363, %v1377
    %v1390 = vadd.f32 %v1325, %v1376
    %v1391 = vadd.f32 %v1366, %v1377
    %v1392 = vadd.f32 %v1328, %v1376
    %v1393 = vadd.f32 %v1369, %v1377
    %v1394 = vadd.f32 %v1331, %v1376
    %v1395 = vadd.f32 %v1372, %v1377
    %1396 = vst [vmem:[#allocation4] sm:$0xff] %v1380
    %1397 = vst [vmem:[#allocation4 + $0x8] sm:$0xff] %v1381
    %1398 = vst [vmem:[#allocation4 + $0x10] sm:$0xff] %v1382
    %1399 = vst [vmem:[#allocation4 + $0x18] sm:$0xff] %v1383
    %1400 = vst [vmem:[#allocation4 + $0x20] sm:$0xff] %v1384
    %1401 = vst [vmem:[#allocation4 + $0x28] sm:$0xff] %v1385
    %1402 = vst [vmem:[#allocation4 + $0x30] sm:$0xff] %v1386
    %1403 = vst [vmem:[#allocation4 + $0x38] sm:$0xff] %v1387
    %1404 = vst [vmem:[#allocation4 + $0x40] sm:$0xff] %v1388
    %1405 = vst [vmem:[#allocation4 + $0x48] sm:$0xff] %v1389
    %1406 = vst [vmem:[#allocation4 + $0x50] sm:$0xff] %v1390
    %1407 = vst [vmem:[#allocation4 + $0x58] sm:$0xff] %v1391
    %1408 = vst [vmem:[#allocation4 + $0x60] sm:$0xff] %v1392
    %1409 = vst [vmem:[#allocation4 + $0x68] sm:$0xff] %v1393
    %1410 = vst [vmem:[#allocation4 + $0x70] sm:$0xff] %v1394
    %1411 = vst [vmem:[#allocation4 + $0x78] sm:$0xff] %v1395
    %v1412 = vld [vmem:[#allocation7] sm:$0xff]
    %v1413 = vld [vmem:[#allocation7 + $0x8] sm:$0xff]
    %v1414 = vld [vmem:[#allocation7 + $0x10] sm:$0xff]
    %v1415 = vld [vmem:[#allocation7 + $0x18] sm:$0xff]
    %v1416 = vld [vmem:[#allocation7 + $0x20] sm:$0xff]
    %v1417 = vld [vmem:[#allocation7 + $0x28] sm:$0xff]
    %v1418 = vld [vmem:[#allocation7 + $0x30] sm:$0xff]
    %v1419 = vld [vmem:[#allocation7 + $0x38] sm:$0xff]
    %v1420 = vld [vmem:[#allocation7 + $0x40] sm:$0xff]
    %v1421 = vld [vmem:[#allocation7 + $0x48] sm:$0xff]
    %v1422 = vld [vmem:[#allocation7 + $0x50] sm:$0xff]
    %v1423 = vld [vmem:[#allocation7 + $0x58] sm:$0xff]
    %v1424 = vld [vmem:[#allocation7 + $0x60] sm:$0xff]
    %v1425 = vld [vmem:[#allocation7 + $0x68] sm:$0xff]
    %v1426 = vld [vmem:[#allocation7 + $0x70] sm:$0xff]
    %v1427 = vld [vmem:[#allocation7 + $0x78] sm:$0xff]
    %1428 = vmatpush.msra.mxu0 0.0
    %1429 = vmatpush.msra.mxu0 0.0
    %1430 = vmatpush.msra.mxu0 0.0
    %1431 = vmatpush.msra.mxu0 0.0
    %1432 = vmatpush.msra.mxu0 0.0
    %1433 = vmatpush.msra.mxu0 0.0
    %1434 = vmatpush.msra.mxu0 0.0
    %1435 = vmatpush.msra.mxu0 0.0
    %1436 = vmatpush.msra.mxu0 %v1426
    %1437 = vmatpush.msra.mxu0 %v1424
    %1438 = vmatpush.msra.mxu0 %v1422
    %1439 = vmatpush.msra.mxu0 %v1420
    %1440 = vmatpush.msra.mxu0 %v1418
    %1441 = vmatpush.msra.mxu0 %v1416
    %1442 = vmatpush.msra.mxu0 %v1414
    %1443 = vmatpush.msra.mxu0 %v1412
    %1444 = vmatmul.f32.gmra.mxu0 %v235
    %v1445 = vpop.f32.mrf.mxu0
    %v1446 = vadd.f32 0.0, %v1445
    %1447 = vdwg.mxu0
    %1448 = vmatpush.msra.mxu0 0.0
    %1449 = vmatpush.msra.mxu0 0.0
    %1450 = vmatpush.msra.mxu0 0.0
    %1451 = vmatpush.msra.mxu0 0.0
    %1452 = vmatpush.msra.mxu0 0.0
    %1453 = vmatpush.msra.mxu0 0.0
    %1454 = vmatpush.msra.mxu0 0.0
    %1455 = vmatpush.msra.mxu0 0.0
    %1456 = vmatpush.msra.mxu0 %v1427
    %1457 = vmatpush.msra.mxu0 %v1425
    %1458 = vmatpush.msra.mxu0 %v1423
    %1459 = vmatpush.msra.mxu0 %v1421
    %1460 = vmatpush.msra.mxu0 %v1419
    %1461 = vmatpush.msra.mxu0 %v1417
    %1462 = vmatpush.msra.mxu0 %v1415
    %1463 = vmatpush.msra.mxu0 %v1413
    %1464 = vmatmul.f32.gmra.mxu0 %v235
    %v1465 = vpop.f32.mrf.mxu0
    %v1466 = vadd.f32 0.0, %v1465
    %1467 = vdwg.mxu0
    %v1468 = vld [vmem:[%s279] sm:$0xff]
    %v1469 = vadd.f32 %v1446, %v1468
    %v1470 = vld [vmem:[%s284 + $0x8] sm:$0xff]
    %v1471 = vadd.f32 %v1466, %v1470
    %v1472 = vmul.f32 %v1469, 0.5
    %v1473 = vtanh.pop %v1472
    %v1474 = vadd.f32 %v1473, 1.0
    %v1475 = vmul.f32 %v1474, 0.5
    %v1476 = vtanh.pop %v1469
    %v1477 = vsel %vm291, %v1476, %v1475
    %v1478 = vmul.f32 %v1477, 0.0
    %1480 = vrot.lane.b32.xlu0 %v1477, 64
    %v1481 = vpop.permute.xlu0 %1480
    %v1483 = vmul.f32 %v1477, %v1481
    %1485 = vrot.lane.b32.xlu0 %v1483, 32
    %v1486 = vpop.permute.xlu0 %1485
    %v1488 = vadd.f32 %v1478, %v1486
    %v1489 = vtanh.pop %v1488
    %1491 = vrot.lane.b32.xlu0 %v1489, 64
    %v1492 = vpop.permute.xlu0 %1491
    %v1494 = vmul.f32 %v1477, %v1492
    %v1495 = vmul.f32 %v1471, 0.5
    %v1496 = vtanh.pop %v1495
    %v1497 = vadd.f32 %v1496, 1.0
    %v1498 = vmul.f32 %v1497, 0.5
    %v1499 = vtanh.pop %v1471
    %v1500 = vsel %vm291, %v1499, %v1498
    %v1501 = vmul.f32 %v1500, 0.0
    %1503 = vrot.lane.b32.xlu0 %v1500, 64
    %v1504 = vpop.permute.xlu0 %1503
    %v1506 = vmul.f32 %v1500, %v1504
    %1508 = vrot.lane.b32.xlu0 %v1506, 32
    %v1509 = vpop.permute.xlu0 %1508
    %v1511 = vadd.f32 %v1501, %v1509
    %v1512 = vtanh.pop %v1511
    %1514 = vrot.lane.b32.xlu0 %v1512, 64
    %v1515 = vpop.permute.xlu0 %1514
    %v1517 = vmul.f32 %v1500, %v1515
    %1519 = vrot.lane.b32.xlu0 %v1494, 32
    %v1520 = vpop.permute.xlu0 %1519
    %1522 = vst.msk [vmem:[#allocation2] sm:$0xff] %vm342, %v1520
    %1524 = vrot.lane.b32.xlu0 %v1517, 32
    %v1525 = vpop.permute.xlu0 %1524
    %1527 = vst.msk [vmem:[%s348] sm:$0xff] %vm342, %v1525
    %1528 = vrot.lane.b32.xlu0 %v1517, 64
    %v1529 = vpop.permute.xlu0 %1528
    %v1531 = vsel %vm342, %v1520, %v1529
    %v1533 = vsel %vm233, %v1531, 0
    %1535 = vmatpush.msra.mxu0 0.0
    %1536 = vmatpush.msra.mxu0 0.0
    %1537 = vmatpush.msra.mxu0 0.0
    %1538 = vmatpush.msra.mxu0 0.0
    %1539 = vmatpush.msra.mxu0 0.0
    %1540 = vmatpush.msra.mxu0 0.0
    %1541 = vmatpush.msra.mxu0 0.0
    %1542 = vmatpush.msra.mxu0 0.0
    %1543 = vmatpush.msra.mxu0 %v1426
    %1544 = vmatpush.msra.mxu0 %v1424
    %1545 = vmatpush.msra.mxu0 %v1422
    %1546 = vmatpush.msra.mxu0 %v1420
    %1547 = vmatpush.msra.mxu0 %v1418
    %1548 = vmatpush.msra.mxu0 %v1416
    %1549 = vmatpush.msra.mxu0 %v1414
    %1550 = vmatpush.msra.mxu0 %v1412
    %1551 = vmatmul.f32.gmra.mxu0 %v1533
    %v1552 = vpop.f32.mrf.mxu0
    %v1553 = vadd.f32 0.0, %v1552
    %1554 = vdwg.mxu0
    %1555 = vmatpush.msra.mxu0 0.0
    %1556 = vmatpush.msra.mxu0 0.0
    %1557 = vmatpush.msra.mxu0 0.0
    %1558 = vmatpush.msra.mxu0 0.0
    %1559 = vmatpush.msra.mxu0 0.0
    %1560 = vmatpush.msra.mxu0 0.0
    %1561 = vmatpush.msra.mxu0 0.0
    %1562 = vmatpush.msra.mxu0 0.0
    %1563 = vmatpush.msra.mxu0 %v1427
    %1564 = vmatpush.msra.mxu0 %v1425
    %1565 = vmatpush.msra.mxu0 %v1423
    %1566 = vmatpush.msra.mxu0 %v1421
    %1567 = vmatpush.msra.mxu0 %v1419
    %1568 = vmatpush.msra.mxu0 %v1417
    %1569 = vmatpush.msra.mxu0 %v1415
    %1570 = vmatpush.msra.mxu0 %v1413
    %1571 = vmatmul.f32.gmra.mxu0 %v1533
    %v1572 = vpop.f32.mrf.mxu0
    %v1573 = vadd.f32 0.0, %v1572
    %1574 = vdwg.mxu0
    %v1575 = vld [vmem:[%s399] sm:$0xff]
    %v1576 = vadd.f32 %v1553, %v1575
    %v1577 = vld [vmem:[%s404 + $0x8] sm:$0xff]
    %v1578 = vadd.f32 %v1573, %v1577
    %v1579 = vmul.f32 %v1576, 0.5
    %v1580 = vtanh.pop %v1579
    %v1581 = vadd.f32 %v1580, 1.0
    %v1582 = vmul.f32 %v1581, 0.5
    %v1583 = vtanh.pop %v1576
    %v1584 = vsel %vm291, %v1583, %v1582
    %v1585 = vmul.f32 %v1584, %v1488
    %1587 = vrot.lane.b32.xlu0 %v1584, 64
    %v1588 = vpop.permute.xlu0 %1587
    %v1590 = vmul.f32 %v1584, %v1588
    %1592 = vrot.lane.b32.xlu0 %v1590, 32
    %v1593 = vpop.permute.xlu0 %1592
    %v1595 = vadd.f32 %v1585, %v1593
    %v1596 = vtanh.pop %v1595
    %1598 = vrot.lane.b32.xlu0 %v1596, 64
    %v1599 = vpop.permute.xlu0 %1598
    %v1601 = vmul.f32 %v1584, %v1599
    %v1602 = vmul.f32 %v1578, 0.5
    %v1603 = vtanh.pop %v1602
    %v1604 = vadd.f32 %v1603, 1.0
    %v1605 = vmul.f32 %v1604, 0.5
    %v1606 = vtanh.pop %v1578
    %v1607 = vsel %vm291, %v1606, %v1605
    %v1608 = vmul.f32 %v1607, %v1511
    %1610 = vrot.lane.b32.xlu0 %v1607, 64
    %v1611 = vpop.permute.xlu0 %1610
    %v1613 = vmul.f32 %v1607, %v1611
    %1615 = vrot.lane.b32.xlu0 %v1613, 32
    %v1616 = vpop.permute.xlu0 %1615
    %v1618 = vadd.f32 %v1608, %v1616
    %v1619 = vtanh.pop %v1618
    %1621 = vrot.lane.b32.xlu0 %v1619, 64
    %v1622 = vpop.permute.xlu0 %1621
    %v1624 = vmul.f32 %v1607, %v1622
    %1626 = vrot.lane.b32.xlu0 %v1601, 32
    %v1627 = vpop.permute.xlu0 %1626
    %1629 = vst.msk [vmem:[%s457] sm:$0xff] %vm342, %v1627
    %1631 = vrot.lane.b32.xlu0 %v1624, 32
    %v1632 = vpop.permute.xlu0 %1631
    %1634 = vst.msk [vmem:[%s463] sm:$0xff] %vm342, %v1632
    %1635 = vrot.lane.b32.xlu0 %v1624, 64
    %v1636 = vpop.permute.xlu0 %1635
    %v1638 = vsel %vm342, %v1627, %v1636
    %v1640 = vsel %vm233, %v1638, 0
    %1642 = vmatpush.msra.mxu0 0.0
    %1643 = vmatpush.msra.mxu0 0.0
    %1644 = vmatpush.msra.mxu0 0.0
    %1645 = vmatpush.msra.mxu0 0.0
    %1646 = vmatpush.msra.mxu0 0.0
    %1647 = vmatpush.msra.mxu0 0.0
    %1648 = vmatpush.msra.mxu0 0.0
    %1649 = vmatpush.msra.mxu0 0.0
    %1650 = vmatpush.msra.mxu0 %v1426
    %1651 = vmatpush.msra.mxu0 %v1424
    %1652 = vmatpush.msra.mxu0 %v1422
    %1653 = vmatpush.msra.mxu0 %v1420
    %1654 = vmatpush.msra.mxu0 %v1418
    %1655 = vmatpush.msra.mxu0 %v1416
    %1656 = vmatpush.msra.mxu0 %v1414
    %1657 = vmatpush.msra.mxu0 %v1412
    %1658 = vmatmul.f32.gmra.mxu0 %v1640
    %v1659 = vpop.f32.mrf.mxu0
    %v1660 = vadd.f32 0.0, %v1659
    %1661 = vdwg.mxu0
    %1662 = vmatpush.msra.mxu0 0.0
    %1663 = vmatpush.msra.mxu0 0.0
    %1664 = vmatpush.msra.mxu0 0.0
    %1665 = vmatpush.msra.mxu0 0.0
    %1666 = vmatpush.msra.mxu0 0.0
    %1667 = vmatpush.msra.mxu0 0.0
    %1668 = vmatpush.msra.mxu0 0.0
    %1669 = vmatpush.msra.mxu0 0.0
    %1670 = vmatpush.msra.mxu0 %v1427
    %1671 = vmatpush.msra.mxu0 %v1425
    %1672 = vmatpush.msra.mxu0 %v1423
    %1673 = vmatpush.msra.mxu0 %v1421
    %1674 = vmatpush.msra.mxu0 %v1419
    %1675 = vmatpush.msra.mxu0 %v1417
    %1676 = vmatpush.msra.mxu0 %v1415
    %1677 = vmatpush.msra.mxu0 %v1413
    %1678 = vmatmul.f32.gmra.mxu0 %v1640
    %v1679 = vpop.f32.mrf.mxu0
    %v1680 = vadd.f32 0.0, %v1679
    %1681 = vdwg.mxu0
    %v1682 = vld [vmem:[%s514] sm:$0xff]
    %v1683 = vadd.f32 %v1660, %v1682
    %v1684 = vld [vmem:[%s519 + $0x8] sm:$0xff]
    %v1685 = vadd.f32 %v1680, %v1684
    %v1686 = vmul.f32 %v1683, 0.5
    %v1687 = vtanh.pop %v1686
    %v1688 = vadd.f32 %v1687, 1.0
    %v1689 = vmul.f32 %v1688, 0.5
    %v1690 = vtanh.pop %v1683
    %v1691 = vsel %vm291, %v1690, %v1689
    %v1692 = vmul.f32 %v1691, %v1595
    %1694 = vrot.lane.b32.xlu0 %v1691, 64
    %v1695 = vpop.permute.xlu0 %1694
    %v1697 = vmul.f32 %v1691, %v1695
    %1699 = vrot.lane.b32.xlu0 %v1697, 32
    %v1700 = vpop.permute.xlu0 %1699
    %v1702 = vadd.f32 %v1692, %v1700
    %v1703 = vtanh.pop %v1702
    %1705 = vrot.lane.b32.xlu0 %v1703, 64
    %v1706 = vpop.permute.xlu0 %1705
    %v1708 = vmul.f32 %v1691, %v1706
    %v1709 = vmul.f32 %v1685, 0.5
    %v1710 = vtanh.pop %v1709
    %v1711 = vadd.f32 %v1710, 1.0
    %v1712 = vmul.f32 %v1711, 0.5
    %v1713 = vtanh.pop %v1685
    %v1714 = vsel %vm291, %v1713, %v1712
    %v1715 = vmul.f32 %v1714, %v1618
    %1717 = vrot.lane.b32.xlu0 %v1714, 64
    %v1718 = vpop.permute.xlu0 %1717
    %v1720 = vmul.f32 %v1714, %v1718
    %1722 = vrot.lane.b32.xlu0 %v1720, 32
    %v1723 = vpop.permute.xlu0 %1722
    %v1725 = vadd.f32 %v1715, %v1723
    %v1726 = vtanh.pop %v1725
    %1728 = vrot.lane.b32.xlu0 %v1726, 64
    %v1729 = vpop.permute.xlu0 %1728
    %v1731 = vmul.f32 %v1714, %v1729
    %1733 = vrot.lane.b32.xlu0 %v1708, 32
    %v1734 = vpop.permute.xlu0 %1733
    %1736 = vst.msk [vmem:[%s572] sm:$0xff] %vm342, %v1734
    %1738 = vrot.lane.b32.xlu0 %v1731, 32
    %v1739 = vpop.permute.xlu0 %1738
    %1741 = vst.msk [vmem:[%s578] sm:$0xff] %vm342, %v1739
    %1742 = vrot.lane.b32.xlu0 %v1731, 64
    %v1743 = vpop.permute.xlu0 %1742
    %v1745 = vsel %vm342, %v1734, %v1743
    %v1747 = vsel %vm233, %v1745, 0
    %1749 = vmatpush.msra.mxu0 0.0
    %1750 = vmatpush.msra.mxu0 0.0
    %1751 = vmatpush.msra.mxu0 0.0
    %1752 = vmatpush.msra.mxu0 0.0
    %1753 = vmatpush.msra.mxu0 0.0
    %1754 = vmatpush.msra.mxu0 0.0
    %1755 = vmatpush.msra.mxu0 0.0
    %1756 = vmatpush.msra.mxu0 0.0
    %1757 = vmatpush.msra.mxu0 %v1426
    %1758 = vmatpush.msra.mxu0 %v1424
    %1759 = vmatpush.msra.mxu0 %v1422
    %1760 = vmatpush.msra.mxu0 %v1420
    %1761 = vmatpush.msra.mxu0 %v1418
    %1762 = vmatpush.msra.mxu0 %v1416
    %1763 = vmatpush.msra.mxu0 %v1414
    %1764 = vmatpush.msra.mxu0 %v1412
    %1765 = vmatmul.f32.gmra.mxu0 %v1747
    %v1766 = vpop.f32.mrf.mxu0
    %v1767 = vadd.f32 0.0, %v1766
    %1768 = vdwg.mxu0
    %1769 = vmatpush.msra.mxu0 0.0
    %1770 = vmatpush.msra.mxu0 0.0
    %1771 = vmatpush.msra.mxu0 0.0
    %1772 = vmatpush.msra.mxu0 0.0
    %1773 = vmatpush.msra.mxu0 0.0
    %1774 = vmatpush.msra.mxu0 0.0
    %1775 = vmatpush.msra.mxu0 0.0
    %1776 = vmatpush.msra.mxu0 0.0
    %1777 = vmatpush.msra.mxu0 %v1427
    %1778 = vmatpush.msra.mxu0 %v1425
    %1779 = vmatpush.msra.mxu0 %v1423
    %1780 = vmatpush.msra.mxu0 %v1421
    %1781 = vmatpush.msra.mxu0 %v1419
    %1782 = vmatpush.msra.mxu0 %v1417
    %1783 = vmatpush.msra.mxu0 %v1415
    %1784 = vmatpush.msra.mxu0 %v1413
    %1785 = vmatmul.f32.gmra.mxu0 %v1747
    %v1786 = vpop.f32.mrf.mxu0
    %v1787 = vadd.f32 0.0, %v1786
    %1788 = vdwg.mxu0
    %v1789 = vld [vmem:[%s629] sm:$0xff]
    %v1790 = vadd.f32 %v1767, %v1789
    %v1791 = vld [vmem:[%s634 + $0x8] sm:$0xff]
    %v1792 = vadd.f32 %v1787, %v1791
    %v1793 = vmul.f32 %v1790, 0.5
    %v1794 = vtanh.pop %v1793
    %v1795 = vadd.f32 %v1794, 1.0
    %v1796 = vmul.f32 %v1795, 0.5
    %v1797 = vtanh.pop %v1790
    %v1798 = vsel %vm291, %v1797, %v1796
    %v1799 = vmul.f32 %v1798, %v1702
    %1801 = vrot.lane.b32.xlu0 %v1798, 64
    %v1802 = vpop.permute.xlu0 %1801
    %v1804 = vmul.f32 %v1798, %v1802
    %1806 = vrot.lane.b32.xlu0 %v1804, 32
    %v1807 = vpop.permute.xlu0 %1806
    %v1809 = vadd.f32 %v1799, %v1807
    %v1810 = vtanh.pop %v1809
    %1812 = vrot.lane.b32.xlu0 %v1810, 64
    %v1813 = vpop.permute.xlu0 %1812
    %v1815 = vmul.f32 %v1798, %v1813
    %v1816 = vmul.f32 %v1792, 0.5
    %v1817 = vtanh.pop %v1816
    %v1818 = vadd.f32 %v1817, 1.0
    %v1819 = vmul.f32 %v1818, 0.5
    %v1820 = vtanh.pop %v1792
    %v1821 = vsel %vm291, %v1820, %v1819
    %v1822 = vmul.f32 %v1821, %v1725
    %1824 = vrot.lane.b32.xlu0 %v1821, 64
    %v1825 = vpop.permute.xlu0 %1824
    %v1827 = vmul.f32 %v1821, %v1825
    %1829 = vrot.lane.b32.xlu0 %v1827, 32
    %v1830 = vpop.permute.xlu0 %1829
    %v1832 = vadd.f32 %v1822, %v1830
    %v1833 = vtanh.pop %v1832
    %1835 = vrot.lane.b32.xlu0 %v1833, 64
    %v1836 = vpop.permute.xlu0 %1835
    %v1838 = vmul.f32 %v1821, %v1836
    %1840 = vrot.lane.b32.xlu0 %v1815, 32
    %v1841 = vpop.permute.xlu0 %1840
    %1843 = vst.msk [vmem:[%s687] sm:$0xff] %vm342, %v1841
    %1845 = vrot.lane.b32.xlu0 %v1838, 32
    %v1846 = vpop.permute.xlu0 %1845
    %1848 = vst.msk [vmem:[%s693] sm:$0xff] %vm342, %v1846
    %1849 = vrot.lane.b32.xlu0 %v1838, 64
    %v1850 = vpop.permute.xlu0 %1849
    %v1852 = vsel %vm342, %v1841, %v1850
    %v1854 = vsel %vm233, %v1852, 0
    %1856 = vmatpush.msra.mxu0 0.0
    %1857 = vmatpush.msra.mxu0 0.0
    %1858 = vmatpush.msra.mxu0 0.0
    %1859 = vmatpush.msra.mxu0 0.0
    %1860 = vmatpush.msra.mxu0 0.0
    %1861 = vmatpush.msra.mxu0 0.0
    %1862 = vmatpush.msra.mxu0 0.0
    %1863 = vmatpush.msra.mxu0 0.0
    %1864 = vmatpush.msra.mxu0 %v1426
    %1865 = vmatpush.msra.mxu0 %v1424
    %1866 = vmatpush.msra.mxu0 %v1422
    %1867 = vmatpush.msra.mxu0 %v1420
    %1868 = vmatpush.msra.mxu0 %v1418
    %1869 = vmatpush.msra.mxu0 %v1416
    %1870 = vmatpush.msra.mxu0 %v1414
    %1871 = vmatpush.msra.mxu0 %v1412
    %1872 = vmatmul.f32.gmra.mxu0 %v1854
    %v1873 = vpop.f32.mrf.mxu0
    %v1874 = vadd.f32 0.0, %v1873
    %1875 = vdwg.mxu0
    %1876 = vmatpush.msra.mxu0 0.0
    %1877 = vmatpush.msra.mxu0 0.0
    %1878 = vmatpush.msra.mxu0 0.0
    %1879 = vmatpush.msra.mxu0 0.0
    %1880 = vmatpush.msra.mxu0 0.0
    %1881 = vmatpush.msra.mxu0 0.0
    %1882 = vmatpush.msra.mxu0 0.0
    %1883 = vmatpush.msra.mxu0 0.0
    %1884 = vmatpush.msra.mxu0 %v1427
    %1885 = vmatpush.msra.mxu0 %v1425
    %1886 = vmatpush.msra.mxu0 %v1423
    %1887 = vmatpush.msra.mxu0 %v1421
    %1888 = vmatpush.msra.mxu0 %v1419
    %1889 = vmatpush.msra.mxu0 %v1417
    %1890 = vmatpush.msra.mxu0 %v1415
    %1891 = vmatpush.msra.mxu0 %v1413
    %1892 = vmatmul.f32.gmra.mxu0 %v1854
    %v1893 = vpop.f32.mrf.mxu0
    %v1894 = vadd.f32 0.0, %v1893
    %1895 = vdwg.mxu0
    %v1896 = vld [vmem:[%s634] sm:$0xff]
    %v1897 = vadd.f32 %v1874, %v1896
    %v1898 = vld [vmem:[%s629 + $0x8] sm:$0xff]
    %v1899 = vadd.f32 %v1894, %v1898
    %v1900 = vmul.f32 %v1897, 0.5
    %v1901 = vtanh.pop %v1900
    %v1902 = vadd.f32 %v1901, 1.0
    %v1903 = vmul.f32 %v1902, 0.5
    %v1904 = vtanh.pop %v1897
    %v1905 = vsel %vm291, %v1904, %v1903
    %v1906 = vmul.f32 %v1905, %v1809
    %1908 = vrot.lane.b32.xlu0 %v1905, 64
    %v1909 = vpop.permute.xlu0 %1908
    %v1911 = vmul.f32 %v1905, %v1909
    %1913 = vrot.lane.b32.xlu0 %v1911, 32
    %v1914 = vpop.permute.xlu0 %1913
    %v1916 = vadd.f32 %v1906, %v1914
    %v1917 = vtanh.pop %v1916
    %1919 = vrot.lane.b32.xlu0 %v1917, 64
    %v1920 = vpop.permute.xlu0 %1919
    %v1922 = vmul.f32 %v1905, %v1920
    %v1923 = vmul.f32 %v1899, 0.5
    %v1924 = vtanh.pop %v1923
    %v1925 = vadd.f32 %v1924, 1.0
    %v1926 = vmul.f32 %v1925, 0.5
    %v1927 = vtanh.pop %v1899
    %v1928 = vsel %vm291, %v1927, %v1926
    %v1929 = vmul.f32 %v1928, %v1832
    %1931 = vrot.lane.b32.xlu0 %v1928, 64
    %v1932 = vpop.permute.xlu0 %1931
    %v1934 = vmul.f32 %v1928, %v1932
    %1936 = vrot.lane.b32.xlu0 %v1934, 32
    %v1937 = vpop.permute.xlu0 %1936
    %v1939 = vadd.f32 %v1929, %v1937
    %v1940 = vtanh.pop %v1939
    %1942 = vrot.lane.b32.xlu0 %v1940, 64
    %v1943 = vpop.permute.xlu0 %1942
    %v1945 = vmul.f32 %v1928, %v1943
    %1947 = vrot.lane.b32.xlu0 %v1922, 32
    %v1948 = vpop.permute.xlu0 %1947
    %1950 = vst.msk [vmem:[%s796] sm:$0xff] %vm342, %v1948
    %1952 = vrot.lane.b32.xlu0 %v1945, 32
    %v1953 = vpop.permute.xlu0 %1952
    %1955 = vst.msk [vmem:[%s802] sm:$0xff] %vm342, %v1953
    %1956 = vrot.lane.b32.xlu0 %v1945, 64
    %v1957 = vpop.permute.xlu0 %1956
    %v1959 = vsel %vm342, %v1948, %v1957
    %v1961 = vsel %vm233, %v1959, 0
    %1963 = vmatpush.msra.mxu0 0.0
    %1964 = vmatpush.msra.mxu0 0.0
    %1965 = vmatpush.msra.mxu0 0.0
    %1966 = vmatpush.msra.mxu0 0.0
    %1967 = vmatpush.msra.mxu0 0.0
    %1968 = vmatpush.msra.mxu0 0.0
    %1969 = vmatpush.msra.mxu0 0.0
    %1970 = vmatpush.msra.mxu0 0.0
    %1971 = vmatpush.msra.mxu0 %v1426
    %1972 = vmatpush.msra.mxu0 %v1424
    %1973 = vmatpush.msra.mxu0 %v1422
    %1974 = vmatpush.msra.mxu0 %v1420
    %1975 = vmatpush.msra.mxu0 %v1418
    %1976 = vmatpush.msra.mxu0 %v1416
    %1977 = vmatpush.msra.mxu0 %v1414
    %1978 = vmatpush.msra.mxu0 %v1412
    %1979 = vmatmul.f32.gmra.mxu0 %v1961
    %v1980 = vpop.f32.mrf.mxu0
    %v1981 = vadd.f32 0.0, %v1980
    %1982 = vdwg.mxu0
    %1983 = vmatpush.msra.mxu0 0.0
    %1984 = vmatpush.msra.mxu0 0.0
    %1985 = vmatpush.msra.mxu0 0.0
    %1986 = vmatpush.msra.mxu0 0.0
    %1987 = vmatpush.msra.mxu0 0.0
    %1988 = vmatpush.msra.mxu0 0.0
    %1989 = vmatpush.msra.mxu0 0.0
    %1990 = vmatpush.msra.mxu0 0.0
    %1991 = vmatpush.msra.mxu0 %v1427
    %1992 = vmatpush.msra.mxu0 %v1425
    %1993 = vmatpush.msra.mxu0 %v1423
    %1994 = vmatpush.msra.mxu0 %v1421
    %1995 = vmatpush.msra.mxu0 %v1419
    %1996 = vmatpush.msra.mxu0 %v1417
    %1997 = vmatpush.msra.mxu0 %v1415
    %1998 = vmatpush.msra.mxu0 %v1413
    %1999 = vmatmul.f32.gmra.mxu0 %v1961
    %v2000 = vpop.f32.mrf.mxu0
    %v2001 = vadd.f32 0.0, %v2000
    %2002 = vdwg.mxu0
    %v2003 = vld [vmem:[%s519] sm:$0xff]
    %v2004 = vadd.f32 %v1981, %v2003
    %v2005 = vld [vmem:[%s514 + $0x8] sm:$0xff]
    %v2006 = vadd.f32 %v2001, %v2005
    %v2007 = vmul.f32 %v2004, 0.5
    %v2008 = vtanh.pop %v2007
    %v2009 = vadd.f32 %v2008, 1.0
    %v2010 = vmul.f32 %v2009, 0.5
    %v2011 = vtanh.pop %v2004
    %v2012 = vsel %vm291, %v2011, %v2010
    %v2013 = vmul.f32 %v2012, %v1916
    %2015 = vrot.lane.b32.xlu0 %v2012, 64
    %v2016 = vpop.permute.xlu0 %2015
    %v2018 = vmul.f32 %v2012, %v2016
    %2020 = vrot.lane.b32.xlu0 %v2018, 32
    %v2021 = vpop.permute.xlu0 %2020
    %v2023 = vadd.f32 %v2013, %v2021
    %v2024 = vtanh.pop %v2023
    %2026 = vrot.lane.b32.xlu0 %v2024, 64
    %v2027 = vpop.permute.xlu0 %2026
    %v2029 = vmul.f32 %v2012, %v2027
    %v2030 = vmul.f32 %v2006, 0.5
    %v2031 = vtanh.pop %v2030
    %v2032 = vadd.f32 %v2031, 1.0
    %v2033 = vmul.f32 %v2032, 0.5
    %v2034 = vtanh.pop %v2006
    %v2035 = vsel %vm291, %v2034, %v2033
    %v2036 = vmul.f32 %v2035, %v1939
    %2038 = vrot.lane.b32.xlu0 %v2035, 64
    %v2039 = vpop.permute.xlu0 %2038
    %v2041 = vmul.f32 %v2035, %v2039
    %2043 = vrot.lane.b32.xlu0 %v2041, 32
    %v2044 = vpop.permute.xlu0 %2043
    %v2046 = vadd.f32 %v2036, %v2044
    %v2047 = vtanh.pop %v2046
    %2049 = vrot.lane.b32.xlu0 %v2047, 64
    %v2050 = vpop.permute.xlu0 %2049
    %v2052 = vmul.f32 %v2035, %v2050
    %2054 = vrot.lane.b32.xlu0 %v2029, 32
    %v2055 = vpop.permute.xlu0 %2054
    %2057 = vst.msk [vmem:[%s905] sm:$0xff] %vm342, %v2055
    %2059 = vrot.lane.b32.xlu0 %v2052, 32
    %v2060 = vpop.permute.xlu0 %2059
    %2062 = vst.msk [vmem:[%s911] sm:$0xff] %vm342, %v2060
    %2063 = vrot.lane.b32.xlu0 %v2052, 64
    %v2064 = vpop.permute.xlu0 %2063
    %v2066 = vsel %vm342, %v2055, %v2064
    %v2068 = vsel %vm233, %v2066, 0
    %2070 = vmatpush.msra.mxu0 0.0
    %2071 = vmatpush.msra.mxu0 0.0
    %2072 = vmatpush.msra.mxu0 0.0
    %2073 = vmatpush.msra.mxu0 0.0
    %2074 = vmatpush.msra.mxu0 0.0
    %2075 = vmatpush.msra.mxu0 0.0
    %2076 = vmatpush.msra.mxu0 0.0
    %2077 = vmatpush.msra.mxu0 0.0
    %2078 = vmatpush.msra.mxu0 %v1426
    %2079 = vmatpush.msra.mxu0 %v1424
    %2080 = vmatpush.msra.mxu0 %v1422
    %2081 = vmatpush.msra.mxu0 %v1420
    %2082 = vmatpush.msra.mxu0 %v1418
    %2083 = vmatpush.msra.mxu0 %v1416
    %2084 = vmatpush.msra.mxu0 %v1414
    %2085 = vmatpush.msra.mxu0 %v1412
    %2086 = vmatmul.f32.gmra.mxu0 %v2068
    %v2087 = vpop.f32.mrf.mxu0
    %v2088 = vadd.f32 0.0, %v2087
    %2089 = vdwg.mxu0
    %2090 = vmatpush.msra.mxu0 0.0
    %2091 = vmatpush.msra.mxu0 0.0
    %2092 = vmatpush.msra.mxu0 0.0
    %2093 = vmatpush.msra.mxu0 0.0
    %2094 = vmatpush.msra.mxu0 0.0
    %2095 = vmatpush.msra.mxu0 0.0
    %2096 = vmatpush.msra.mxu0 0.0
    %2097 = vmatpush.msra.mxu0 0.0
    %2098 = vmatpush.msra.mxu0 %v1427
    %2099 = vmatpush.msra.mxu0 %v1425
    %2100 = vmatpush.msra.mxu0 %v1423
    %2101 = vmatpush.msra.mxu0 %v1421
    %2102 = vmatpush.msra.mxu0 %v1419
    %2103 = vmatpush.msra.mxu0 %v1417
    %2104 = vmatpush.msra.mxu0 %v1415
    %2105 = vmatpush.msra.mxu0 %v1413
    %2106 = vmatmul.f32.gmra.mxu0 %v2068
    %v2107 = vpop.f32.mrf.mxu0
    %v2108 = vadd.f32 0.0, %v2107
    %2109 = vdwg.mxu0
    %v2110 = vld [vmem:[%s404] sm:$0xff]
    %v2111 = vadd.f32 %v2088, %v2110
    %v2112 = vld [vmem:[%s399 + $0x8] sm:$0xff]
    %v2113 = vadd.f32 %v2108, %v2112
    %v2114 = vmul.f32 %v2111, 0.5
    %v2115 = vtanh.pop %v2114
    %v2116 = vadd.f32 %v2115, 1.0
    %v2117 = vmul.f32 %v2116, 0.5
    %v2118 = vtanh.pop %v2111
    %v2119 = vsel %vm291, %v2118, %v2117
    %v2120 = vmul.f32 %v2119, %v2023
    %2122 = vrot.lane.b32.xlu0 %v2119, 64
    %v2123 = vpop.permute.xlu0 %2122
    %v2125 = vmul.f32 %v2119, %v2123
    %2127 = vrot.lane.b32.xlu0 %v2125, 32
    %v2128 = vpop.permute.xlu0 %2127
    %v2130 = vadd.f32 %v2120, %v2128
    %v2131 = vtanh.pop %v2130
    %2133 = vrot.lane.b32.xlu0 %v2131, 64
    %v2134 = vpop.permute.xlu0 %2133
    %v2136 = vmul.f32 %v2119, %v2134
    %v2137 = vmul.f32 %v2113, 0.5
    %v2138 = vtanh.pop %v2137
    %v2139 = vadd.f32 %v2138, 1.0
    %v2140 = vmul.f32 %v2139, 0.5
    %v2141 = vtanh.pop %v2113
    %v2142 = vsel %vm291, %v2141, %v2140
    %v2143 = vmul.f32 %v2142, %v2046
    %2145 = vrot.lane.b32.xlu0 %v2142, 64
    %v2146 = vpop.permute.xlu0 %2145
    %v2148 = vmul.f32 %v2142, %v2146
    %2150 = vrot.lane.b32.xlu0 %v2148, 32
    %v2151 = vpop.permute.xlu0 %2150
    %v2153 = vadd.f32 %v2143, %v2151
    %v2154 = vtanh.pop %v2153
    %2156 = vrot.lane.b32.xlu0 %v2154, 64
    %v2157 = vpop.permute.xlu0 %2156
    %v2159 = vmul.f32 %v2142, %v2157
    %2161 = vrot.lane.b32.xlu0 %v2136, 32
    %v2162 = vpop.permute.xlu0 %2161
    %2164 = vst.msk [vmem:[%s1014] sm:$0xff] %vm342, %v2162
    %2166 = vrot.lane.b32.xlu0 %v2159, 32
    %v2167 = vpop.permute.xlu0 %2166
    %2169 = vst.msk [vmem:[%s1020] sm:$0xff] %vm342, %v2167
    %2170 = vrot.lane.b32.xlu0 %v2159, 64
    %v2171 = vpop.permute.xlu0 %2170
    %v2173 = vsel %vm342, %v2162, %v2171
    %v2175 = vsel %vm233, %v2173, 0
    %2177 = vmatpush.msra.mxu0 0.0
    %2178 = vmatpush.msra.mxu0 0.0
    %2179 = vmatpush.msra.mxu0 0.0
    %2180 = vmatpush.msra.mxu0 0.0
    %2181 = vmatpush.msra.mxu0 0.0
    %2182 = vmatpush.msra.mxu0 0.0
    %2183 = vmatpush.msra.mxu0 0.0
    %2184 = vmatpush.msra.mxu0 0.0
    %2185 = vmatpush.msra.mxu0 %v1426
    %2186 = vmatpush.msra.mxu0 %v1424
    %2187 = vmatpush.msra.mxu0 %v1422
    %2188 = vmatpush.msra.mxu0 %v1420
    %2189 = vmatpush.msra.mxu0 %v1418
    %2190 = vmatpush.msra.mxu0 %v1416
    %2191 = vmatpush.msra.mxu0 %v1414
    %2192 = vmatpush.msra.mxu0 %v1412
    %2193 = vmatmul.f32.gmra.mxu0 %v2175
    %v2194 = vpop.f32.mrf.mxu0
    %v2195 = vadd.f32 0.0, %v2194
    %2196 = vdwg.mxu0
    %2197 = vmatpush.msra.mxu0 0.0
    %2198 = vmatpush.msra.mxu0 0.0
    %2199 = vmatpush.msra.mxu0 0.0
    %2200 = vmatpush.msra.mxu0 0.0
    %2201 = vmatpush.msra.mxu0 0.0
    %2202 = vmatpush.msra.mxu0 0.0
    %2203 = vmatpush.msra.mxu0 0.0
    %2204 = vmatpush.msra.mxu0 0.0
    %2205 = vmatpush.msra.mxu0 %v1427
    %2206 = vmatpush.msra.mxu0 %v1425
    %2207 = vmatpush.msra.mxu0 %v1423
    %2208 = vmatpush.msra.mxu0 %v1421
    %2209 = vmatpush.msra.mxu0 %v1419
    %2210 = vmatpush.msra.mxu0 %v1417
    %2211 = vmatpush.msra.mxu0 %v1415
    %2212 = vmatpush.msra.mxu0 %v1413
    %2213 = vmatmul.f32.gmra.mxu0 %v2175
    %v2214 = vpop.f32.mrf.mxu0
    %v2215 = vadd.f32 0.0, %v2214
    %2216 = vdwg.mxu0
    %v2217 = vld [vmem:[%s284] sm:$0xff]
    %v2218 = vadd.f32 %v2195, %v2217
    %v2219 = vld [vmem:[%s279 + $0x8] sm:$0xff]
    %v2220 = vadd.f32 %v2215, %v2219
    %v2221 = vmul.f32 %v2218, 0.5
    %v2222 = vtanh.pop %v2221
    %v2223 = vadd.f32 %v2222, 1.0
    %v2224 = vmul.f32 %v2223, 0.5
    %v2225 = vtanh.pop %v2218
    %v2226 = vsel %vm291, %v2225, %v2224
    %v2227 = vmul.f32 %v2226, %v2130
    %2229 = vrot.lane.b32.xlu0 %v2226, 64
    %v2230 = vpop.permute.xlu0 %2229
    %v2232 = vmul.f32 %v2226, %v2230
    %2234 = vrot.lane.b32.xlu0 %v2232, 32
    %v2235 = vpop.permute.xlu0 %2234
    %v2237 = vadd.f32 %v2227, %v2235
    %v2238 = vtanh.pop %v2237
    %2240 = vrot.lane.b32.xlu0 %v2238, 64
    %v2241 = vpop.permute.xlu0 %2240
    %v2243 = vmul.f32 %v2226, %v2241
    %v2244 = vmul.f32 %v2220, 0.5
    %v2245 = vtanh.pop %v2244
    %v2246 = vadd.f32 %v2245, 1.0
    %v2247 = vmul.f32 %v2246, 0.5
    %v2248 = vtanh.pop %v2220
    %v2249 = vsel %vm291, %v2248, %v2247
    %v2250 = vmul.f32 %v2249, %v2153
    %2252 = vrot.lane.b32.xlu0 %v2249, 64
    %v2253 = vpop.permute.xlu0 %2252
    %v2255 = vmul.f32 %v2249, %v2253
    %2257 = vrot.lane.b32.xlu0 %v2255, 32
    %v2258 = vpop.permute.xlu0 %2257
    %v2260 = vadd.f32 %v2250, %v2258
    %v2261 = vtanh.pop %v2260
    %2263 = vrot.lane.b32.xlu0 %v2261, 64
    %v2264 = vpop.permute.xlu0 %2263
    %v2266 = vmul.f32 %v2249, %v2264
    %2268 = vrot.lane.b32.xlu0 %v2243, 32
    %v2269 = vpop.permute.xlu0 %2268
    %2271 = vst.msk [vmem:[%s1123] sm:$0xff] %vm342, %v2269
    %2273 = vrot.lane.b32.xlu0 %v2266, 32
    %v2274 = vpop.permute.xlu0 %2273
    %2276 = vst.msk [vmem:[#allocation3] sm:$0xff] %vm342, %v2274
    %v2277 = vld [vmem:[#allocation2] sm:$0xff]
    %v2278 = vld [vmem:[#allocation2 + $0x8] sm:$0xff]
    %v2279 = vld [vmem:[#allocation2 + $0x10] sm:$0xff]
    %v2280 = vld [vmem:[#allocation2 + $0x18] sm:$0xff]
    %v2281 = vld [vmem:[#allocation2 + $0x20] sm:$0xff]
    %v2282 = vld [vmem:[#allocation2 + $0x28] sm:$0xff]
    %v2283 = vld [vmem:[#allocation2 + $0x30] sm:$0xff]
    %v2284 = vld [vmem:[#allocation2 + $0x38] sm:$0xff]
    %v2285 = vld [vmem:[%s7] sm:$0xff]
    %v2286 = vld [vmem:[%s7 + $0x8] sm:$0xff]
    %v2287 = vld [vmem:[%s7 + $0x10] sm:$0xff]
    %v2288 = vld [vmem:[%s7 + $0x18] sm:$0xff]
    %v2289 = vld [vmem:[#allocation3] sm:$0xff]
    %v2290 = vld [vmem:[#allocation3 + $0x8] sm:$0xff]
    %v2291 = vld [vmem:[#allocation3 + $0x10] sm:$0xff]
    %v2292 = vld [vmem:[#allocation3 + $0x18] sm:$0xff]
    %v2293 = vld [vmem:[#allocation3 + $0x20] sm:$0xff]
    %v2294 = vld [vmem:[#allocation3 + $0x28] sm:$0xff]
    %v2295 = vld [vmem:[#allocation3 + $0x30] sm:$0xff]
    %v2296 = vld [vmem:[#allocation3 + $0x38] sm:$0xff]
    %v2297 = vld [vmem:[%s7 + $0x20] sm:$0xff]
    %v2298 = vld [vmem:[%s7 + $0x28] sm:$0xff]
    %v2299 = vld [vmem:[%s7 + $0x30] sm:$0xff]
    %v2300 = vld [vmem:[%s7 + $0x38] sm:$0xff]
    %v2302 = vsel %vm342, %v2289, 0
    %v2305 = vsel %vm342, %v2290, 0
    %v2308 = vsel %vm342, %v2291, 0
    %v2311 = vsel %vm342, %v2292, 0
    %v2314 = vsel %vm342, %v2293, 0
    %v2317 = vsel %vm342, %v2294, 0
    %v2320 = vsel %vm342, %v2295, 0
    %v2323 = vsel %vm342, %v2296, 0
    %2325 = vmatpush.msra.mxu0 0.0
    %2326 = vmatpush.msra.mxu0 0.0
    %2327 = vmatpush.msra.mxu0 0.0
    %2328 = vmatpush.msra.mxu0 0.0
    %2329 = vmatpush.msra.mxu0 0.0
    %2330 = vmatpush.msra.mxu0 0.0
    %2331 = vmatpush.msra.mxu0 0.0
    %2332 = vmatpush.msra.mxu0 0.0
    %2333 = vmatpush.msra.mxu0 0.0
    %2334 = vmatpush.msra.mxu0 0.0
    %2335 = vmatpush.msra.mxu0 0.0
    %2336 = vmatpush.msra.mxu0 0.0
    %2337 = vmatpush.msra.mxu0 %v2300
    %2338 = vmatpush.msra.mxu0 %v2299
    %2339 = vmatpush.msra.mxu0 %v2298
    %2340 = vmatpush.msra.mxu0 %v2297
    %2341 = vmatmul.f32.gmra.mxu0 %v2302
    %v2342 = vpop.f32.mrf.mxu0
    %v2343 = vadd.f32 0.0, %v2342
    %2344 = vmatmul.f32.gmra.mxu0 %v2305
    %v2345 = vpop.f32.mrf.mxu0
    %v2346 = vadd.f32 0.0, %v2345
    %2347 = vmatmul.f32.gmra.mxu0 %v2308
    %v2348 = vpop.f32.mrf.mxu0
    %v2349 = vadd.f32 0.0, %v2348
    %2350 = vmatmul.f32.gmra.mxu0 %v2311
    %v2351 = vpop.f32.mrf.mxu0
    %v2352 = vadd.f32 0.0, %v2351
    %2353 = vmatmul.f32.gmra.mxu0 %v2314
    %v2354 = vpop.f32.mrf.mxu0
    %v2355 = vadd.f32 0.0, %v2354
    %2356 = vmatmul.f32.gmra.mxu0 %v2317
    %v2357 = vpop.f32.mrf.mxu0
    %v2358 = vadd.f32 0.0, %v2357
    %2359 = vmatmul.f32.gmra.mxu0 %v2320
    %v2360 = vpop.f32.mrf.mxu0
    %v2361 = vadd.f32 0.0, %v2360
    %2362 = vmatmul.f32.gmra.mxu0 %v2323
    %v2363 = vpop.f32.mrf.mxu0
    %v2364 = vadd.f32 0.0, %v2363
    %2365 = vdwg.mxu0
    %v2367 = vsel %vm342, %v2277, 0
    %v2370 = vsel %vm342, %v2278, 0
    %v2373 = vsel %vm342, %v2279, 0
    %v2376 = vsel %vm342, %v2280, 0
    %v2379 = vsel %vm342, %v2281, 0
    %v2382 = vsel %vm342, %v2282, 0
    %v2385 = vsel %vm342, %v2283, 0
    %v2388 = vsel %vm342, %v2284, 0
    %2390 = vmatpush.msra.mxu0 0.0
    %2391 = vmatpush.msra.mxu0 0.0
    %2392 = vmatpush.msra.mxu0 0.0
    %2393 = vmatpush.msra.mxu0 0.0
    %2394 = vmatpush.msra.mxu0 0.0
    %2395 = vmatpush.msra.mxu0 0.0
    %2396 = vmatpush.msra.mxu0 0.0
    %2397 = vmatpush.msra.mxu0 0.0
    %2398 = vmatpush.msra.mxu0 0.0
    %2399 = vmatpush.msra.mxu0 0.0
    %2400 = vmatpush.msra.mxu0 0.0
    %2401 = vmatpush.msra.mxu0 0.0
    %2402 = vmatpush.msra.mxu0 %v2288
    %2403 = vmatpush.msra.mxu0 %v2287
    %2404 = vmatpush.msra.mxu0 %v2286
    %2405 = vmatpush.msra.mxu0 %v2285
    %2406 = vmatmul.f32.gmra.mxu0 %v2367
    %v2407 = vpop.f32.mrf.mxu0
    %v2408 = vadd.f32 %v2343, %v2407
    %2409 = vmatmul.f32.gmra.mxu0 %v2370
    %v2410 = vpop.f32.mrf.mxu0
    %v2411 = vadd.f32 %v2346, %v2410
    %2412 = vmatmul.f32.gmra.mxu0 %v2373
    %v2413 = vpop.f32.mrf.mxu0
    %v2414 = vadd.f32 %v2349, %v2413
    %2415 = vmatmul.f32.gmra.mxu0 %v2376
    %v2416 = vpop.f32.mrf.mxu0
    %v2417 = vadd.f32 %v2352, %v2416
    %2418 = vmatmul.f32.gmra.mxu0 %v2379
    %v2419 = vpop.f32.mrf.mxu0
    %v2420 = vadd.f32 %v2355, %v2419
    %2421 = vmatmul.f32.gmra.mxu0 %v2382
    %v2422 = vpop.f32.mrf.mxu0
    %v2423 = vadd.f32 %v2358, %v2422
    %2424 = vmatmul.f32.gmra.mxu0 %v2385
    %v2425 = vpop.f32.mrf.mxu0
    %v2426 = vadd.f32 %v2361, %v2425
    %2427 = vmatmul.f32.gmra.mxu0 %v2388
    %v2428 = vpop.f32.mrf.mxu0
    %v2429 = vadd.f32 %v2364, %v2428
    %2430 = vdwg.mxu0
    %v2431 = vld [vmem:[%s8] sm:$0x1]
    %v2433 = vperm.slane %v2431, 0
    %v2435 = vadd.f32 %v2408, %v2433
    %v2436 = vadd.f32 %v2411, %v2433
    %v2437 = vadd.f32 %v2414, %v2433
    %v2438 = vadd.f32 %v2417, %v2433
    %v2439 = vadd.f32 %v2420, %v2433
    %v2440 = vadd.f32 %v2423, %v2433
    %v2441 = vadd.f32 %v2426, %v2433
    %v2442 = vadd.f32 %v2429, %v2433
    %v2443 = vtanh.pop %v2435
    %v2444 = vtanh.pop %v2436
    %v2445 = vtanh.pop %v2437
    %v2446 = vtanh.pop %v2438
    %v2447 = vtanh.pop %v2439
    %v2448 = vtanh.pop %v2440
    %v2449 = vtanh.pop %v2441
    %v2450 = vtanh.pop %v2442
    %v2451 = vld [vmem:[%s9] sm:$0xff]
    %v2452 = vld [vmem:[%s10] sm:$0x1]
    %v2454 = vperm.slane %v2452, 0
    %vm2456 = vcmask 64512
    %v2458 = vsel %vm2456, %v2443, 0
    %v2461 = vsel %vm2456, %v2444, 0
    %v2464 = vsel %vm2456, %v2445, 0
    %v2467 = vsel %vm2456, %v2446, 0
    %v2470 = vsel %vm2456, %v2447, 0
    %v2473 = vsel %vm2456, %v2448, 0
    %v2476 = vsel %vm2456, %v2449, 0
    %v2479 = vsel %vm2456, %v2450, 0
    %2481 = vmatpush.msra.mxu0 0.0
    %2482 = vmatpush.msra.mxu0 0.0
    %2483 = vmatpush.msra.mxu0 0.0
    %2484 = vmatpush.msra.mxu0 0.0
    %2485 = vmatpush.msra.mxu0 0.0
    %2486 = vmatpush.msra.mxu0 0.0
    %2487 = vmatpush.msra.mxu0 0.0
    %2488 = vmatpush.msra.mxu0 0.0
    %2489 = vmatpush.msra.mxu0 0.0
    %2490 = vmatpush.msra.mxu0 0.0
    %2491 = vmatpush.msra.mxu0 0.0
    %2492 = vmatpush.msra.mxu0 0.0
    %2493 = vmatpush.msra.mxu0 0.0
    %2494 = vmatpush.msra.mxu0 0.0
    %2495 = vmatpush.msra.mxu0 0.0
    %2496 = vmatpush.msra.mxu0 %v2451
    %2497 = vmatmul.f32.gmra.mxu0 %v2458
    %v2498 = vpop.f32.mrf.mxu0
    %v2499 = vadd.f32 %v2454, %v2498
    %2500 = vmatmul.f32.gmra.mxu0 %v2461
    %v2501 = vpop.f32.mrf.mxu0
    %v2502 = vadd.f32 %v2454, %v2501
    %2503 = vmatmul.f32.gmra.mxu0 %v2464
    %v2504 = vpop.f32.mrf.mxu0
    %v2505 = vadd.f32 %v2454, %v2504
    %2506 = vmatmul.f32.gmra.mxu0 %v2467
    %v2507 = vpop.f32.mrf.mxu0
    %v2508 = vadd.f32 %v2454, %v2507
    %2509 = vmatmul.f32.gmra.mxu0 %v2470
    %v2510 = vpop.f32.mrf.mxu0
    %v2511 = vadd.f32 %v2454, %v2510
    %2512 = vmatmul.f32.gmra.mxu0 %v2473
    %v2513 = vpop.f32.mrf.mxu0
    %v2514 = vadd.f32 %v2454, %v2513
    %2515 = vmatmul.f32.gmra.mxu0 %v2476
    %v2516 = vpop.f32.mrf.mxu0
    %v2517 = vadd.f32 %v2454, %v2516
    %2518 = vmatmul.f32.gmra.mxu0 %v2479
    %v2519 = vpop.f32.mrf.mxu0
    %v2520 = vadd.f32 %v2454, %v2519
    %2521 = vdwg.mxu0
    %v2522 = vtanh.pop %v2499
    %v2523 = vtanh.pop %v2502
    %v2524 = vtanh.pop %v2505
    %v2525 = vtanh.pop %v2508
    %v2526 = vtanh.pop %v2511
    %v2527 = vtanh.pop %v2514
    %v2528 = vtanh.pop %v2517
    %v2529 = vtanh.pop %v2520
    %v2530 = vld [vmem:[%s11] sm:$0xf]
    %v2531 = vld [vmem:[%s12] sm:$0x1]
    %v2533 = vperm.slane %v2531, 0
    %vm2535 = vcmask 31744
    %v2537 = vsel %vm2535, %v2522, 0
    %v2540 = vsel %vm2535, %v2523, 0
    %v2543 = vsel %vm2535, %v2524, 0
    %v2546 = vsel %vm2535, %v2525, 0
    %v2549 = vsel %vm2535, %v2526, 0
    %v2552 = vsel %vm2535, %v2527, 0
    %v2555 = vsel %vm2535, %v2528, 0
    %v2558 = vsel %vm2535, %v2529, 0
    %vm2560 = vcmask 1043456
    %v2562 = vsel %vm2560, %v2530, 0
    %2564 = vmatpush.msra.mxu0 0.0
    %2565 = vmatpush.msra.mxu0 0.0
    %2566 = vmatpush.msra.mxu0 0.0
    %2567 = vmatpush.msra.mxu0 0.0
    %2568 = vmatpush.msra.mxu0 0.0
    %2569 = vmatpush.msra.mxu0 0.0
    %2570 = vmatpush.msra.mxu0 0.0
    %2571 = vmatpush.msra.mxu0 0.0
    %2572 = vmatpush.msra.mxu0 0.0
    %2573 = vmatpush.msra.mxu0 0.0
    %2574 = vmatpush.msra.mxu0 0.0
    %2575 = vmatpush.msra.mxu0 0.0
    %2576 = vmatpush.msra.mxu0 0.0
    %2577 = vmatpush.msra.mxu0 0.0
    %2578 = vmatpush.msra.mxu0 0.0
    %2579 = vmatpush.msra.mxu0 %v2562
    %2580 = vmatmul.f32.gmra.mxu0 %v2537
    %v2581 = vpop.f32.mrf.mxu0
    %v2582 = vadd.f32 %v2533, %v2581
    %2583 = vmatmul.f32.gmra.mxu0 %v2540
    %v2584 = vpop.f32.mrf.mxu0
    %v2585 = vadd.f32 %v2533, %v2584
    %2586 = vmatmul.f32.gmra.mxu0 %v2543
    %v2587 = vpop.f32.mrf.mxu0
    %v2588 = vadd.f32 %v2533, %v2587
    %2589 = vmatmul.f32.gmra.mxu0 %v2546
    %v2590 = vpop.f32.mrf.mxu0
    %v2591 = vadd.f32 %v2533, %v2590
    %2592 = vmatmul.f32.gmra.mxu0 %v2549
    %v2593 = vpop.f32.mrf.mxu0
    %v2594 = vadd.f32 %v2533, %v2593
    %2595 = vmatmul.f32.gmra.mxu0 %v2552
    %v2596 = vpop.f32.mrf.mxu0
    %v2597 = vadd.f32 %v2533, %v2596
    %2598 = vmatmul.f32.gmra.mxu0 %v2555
    %v2599 = vpop.f32.mrf.mxu0
    %v2600 = vadd.f32 %v2533, %v2599
    %2601 = vmatmul.f32.gmra.mxu0 %v2558
    %v2602 = vpop.f32.mrf.mxu0
    %v2603 = vadd.f32 %v2533, %v2602
    %2604 = vdwg.mxu0
    %2605 = vst [vmem:[%s13] sm:$0xff] %v2582
    %2606 = vst [vmem:[%s13 + $0x8] sm:$0xff] %v2585
    %2607 = vst [vmem:[%s13 + $0x10] sm:$0xff] %v2588
    %2608 = vst [vmem:[%s13 + $0x18] sm:$0xff] %v2591
    %2609 = vst [vmem:[%s13 + $0x20] sm:$0xff] %v2594
    %2610 = vst [vmem:[%s13 + $0x28] sm:$0xff] %v2597
    %2611 = vst [vmem:[%s13 + $0x30] sm:$0xff] %v2600
    %2612 = vst [vmem:[%s13 + $0x38] sm:$0xff] %v2603
    // Predicated region
    $region62: #{ner_lstm_forward.1} parent=1 // pred_check
      _
    $region63: #{ner_lstm_forward.1} parent=1 // pred_check_branch
      %2614 = sbr.rel (0) target = $region65
    $region64: #{ner_lstm_forward.1} parent=1 // pred_region
      _
    $region65: #{ner_lstm_forward.1} parent=1 // pred_fallthru
      _
    // Predicated region
    $region66: #{ner_lstm_forward.1} parent=1 // pred_check
      _
    $region67: #{ner_lstm_forward.1} parent=1 // pred_check_branch
      %2616 = sbr.rel (0) target = $region69
    $region68: #{ner_lstm_forward.1} parent=1 // pred_region
      _
    $region69: #{ner_lstm_forward.1} parent=1 // pred_fallthru
      _
    %2617 = vsyncpa [#allocation6], 1
    %2618 = vsyncpa [#allocation8], 1

</llo_original>
